<compile_context>
chip_gen: v7x
topology: tpu7x:2x2x1
jax: 0.10.0
libtpu: 0.0.40
codegen_flags: <defaults>
</compile_context>

<pallas_src>
import numpy as np
import jax
import jax.numpy as jnp
from jax import lax
from jax.experimental import pallas as pl
from jax.experimental.pallas import tpu as pltpu


def _make_iou_loss_kernel(N, C, w_ce, w_ls):
    def kernel(logits_t_ref, labels_row_ref, labels_col_ref, weight_ref, out_ref):
        logits_t = logits_t_ref[...]        # (C, N) f32, classes on sublanes, points on lanes
        labels_row = labels_row_ref[...]    # (1, N) int32
        labels_col = labels_col_ref[...]    # (N, 1) int32 (same labels, column layout)
        w_col = weight_ref[...]             # (C, 1) f32

        # ---- one-hot built in-kernel (row layout) ----
        class_iota = lax.broadcasted_iota(jnp.int32, (C, N), 0)
        onehot_row = (class_iota == labels_row).astype(jnp.float32)      # (C, N)

        # ---- single softmax / log-softmax over classes (sublane axis) ----
        m = jnp.max(logits_t, axis=0, keepdims=True)                     # (1, N)
        z = logits_t - m
        ez = jnp.exp(z)
        sez = jnp.sum(ez, axis=0, keepdims=True)                         # (1, N)
        p_t = ez / sez                                                   # (C, N)
        logp_t = z - jnp.log(sez)                                        # (C, N)

        # ---- weighted cross-entropy, reduction='mean' (PyTorch semantics) ----
        w_per = jnp.sum(onehot_row * w_col, axis=0, keepdims=True)       # (1, N) = weight[y_n]
        nll = -jnp.sum(onehot_row * logp_t, axis=0, keepdims=True)       # (1, N)
        wce = jnp.sum(w_per * nll) / jnp.sum(w_per)

        # ---- Lovasz-softmax over 'present' classes, per-element formulation ----
        err_row = jnp.abs(onehot_row - p_t)                              # (C, N), computed once
        err_row3 = err_row[:, None, :]                                   # (C, 1, N)
        onehot_row3 = onehot_row[:, None, :]                             # (C, 1, N)

        # err moved lanes -> sublanes: one (C,N)->(N,C) XLU transpose + static
        # per-class lane slices.  Pure data movement, bit-identical values.
        err_T = err_row.T                                                # (N, C)
        err_col = jnp.stack([err_T[:, c:c + 1] for c in range(C)],
                            axis=0)                                      # (C, N, 1)

        # class-independent tie-break mask built ONCE at (N, N)
        sub_j = lax.broadcasted_iota(jnp.int32, (N, N), 0)               # j (sublanes)
        lane_i = lax.broadcasted_iota(jnp.int32, (N, N), 1)              # i (lanes)
        lt_ji = sub_j < lane_i                                           # (N, N) bool

        # cmp[c, j, i] = 1  iff  element j is ranked strictly before element i
        # (stable descending order of err, ties broken by original index).
        cmp = ((err_col > err_row3) |
               ((err_col == err_row3) & lt_ji[None, :, :]))              # (C, N, N) bool
        cmp_f = cmp.astype(jnp.float32)

        # fg along the j (sublane) axis, from the column-layout labels
        class_iota_col = lax.broadcasted_iota(jnp.int32, (C, N, 1), 0)
        onehot_col = (labels_col[None, :, :] == class_iota_col).astype(jnp.float32)  # (C, N, 1)

        # sublane-axis sums -> lane-dense (C, 1, N); exact integer counts in f32
        rank = jnp.sum(cmp_f, axis=1, keepdims=True)                     # (C, 1, N)
        cumfg_before = jnp.sum(cmp_f * onehot_col, axis=1, keepdims=True)  # (C, 1, N)
        cum_fg = cumfg_before + onehot_row3                              # inclusive of element i

        gts = jnp.sum(onehot_row3, axis=2, keepdims=True)                # (C, 1, 1)

        # jaccard at sorted position rank_i and at rank_i - 1 (elementwise, row layout)
        denom_cur = gts + rank + 1.0 - cum_fg                            # always >= 1
        jac_cur = 1.0 - (gts - cum_fg) / denom_cur
        cf_prev = cum_fg - onehot_row3
        denom_prev = jnp.maximum(gts + rank - cf_prev, 1.0)              # >=1 when rank>=1
        jac_prev = jnp.where(rank > 0.5,
                             1.0 - (gts - cf_prev) / denom_prev,
                             0.0)                                        # jac[-1] == 0
        grad = jac_cur - jac_prev                                        # lovasz grad at element i
        loss_c = jnp.sum(err_row3 * grad, axis=2, keepdims=True)         # (C, 1, 1)

        present = (gts > 0.0).astype(jnp.float32)                        # classes='present'
        lsum = jnp.sum(present * loss_c)
        cnt = jnp.sum(present)
        jacc = jnp.where(cnt > 0, lsum / jnp.maximum(cnt, 1.0), 0.0)

        total = w_ce * wce + w_ls * jacc
        out_ref[...] = jnp.full((1, 1), total, dtype=jnp.float32)

    return kernel


def iou_loss(logits, labels, weight, w_ce=1.0, w_ls=1.0):
    """Pallas equivalent of IOUloss(weight, w_ce, w_ls)(logits, labels)."""
    logits = jnp.asarray(logits, jnp.float32)
    N, C = logits.shape
    logits_t = logits.T                                        # (C, N) lane-dense
    labels_i32 = jnp.asarray(labels, jnp.int32)
    labels_row = labels_i32.reshape(1, N)
    labels_col = labels_i32.reshape(N, 1)
    weight_col = jnp.asarray(weight, jnp.float32).reshape(C, 1)

    kernel = _make_iou_loss_kernel(N, C, float(w_ce), float(w_ls))
    out = pl.pallas_call(
        kernel,
        out_shape=jax.ShapeDtypeStruct((1, 1), jnp.float32),
        grid=(1,),
        in_specs=[
            pl.BlockSpec((C, N), lambda i: (0, 0)),
            pl.BlockSpec((1, N), lambda i: (0, 0)),
            pl.BlockSpec((N, 1), lambda i: (0, 0)),
            pl.BlockSpec((C, 1), lambda i: (0, 0)),
        ],
        out_specs=pl.BlockSpec((1, 1), lambda i: (0, 0)),
        compiler_params=pltpu.CompilerParams(
            dimension_semantics=("arbitrary",),
            # Working set is ~0.5 MiB cmp + small tiles at N=128; 32 MiB is safe
            # on every generation (v7x physical VMEM is only 64 MiB).
            vmem_limit_bytes=32 * 1024 * 1024,
        ),
    )(logits_t, labels_row, labels_col, weight_col)
    return out[0, 0]


def iou_loss_ref(logits, labels, weight, w_ce=1.0, w_ls=1.0):
    """Pure-JAX reference (mirrors PyTorch IOUloss semantics)."""
    logits = jnp.asarray(logits, jnp.float32)
    N, C = logits.shape
    logp = jax.nn.log_softmax(logits, axis=-1)
    p = jnp.exp(logp)
    w_per = weight[labels]
    nll = -logp[jnp.arange(N), labels]
    wce = jnp.sum(w_per * nll) / jnp.sum(w_per)

    losses, presents = [], []
    for c in range(C):
        fg = (labels == c).astype(jnp.float32)
        err = jnp.abs(fg - p[:, c])
        order = jnp.argsort(-err)          # stable descending
        err_s = err[order]
        fg_s = fg[order]
        gts = jnp.sum(fg)
        inter = gts - jnp.cumsum(fg_s)
        union = gts + jnp.cumsum(1.0 - fg_s)
        jac = 1.0 - inter / union
        grad = jnp.concatenate([jac[:1], jac[1:] - jac[:-1]])
        losses.append(jnp.sum(err_s * grad))
        presents.append((gts > 0).astype(jnp.float32))
    losses = jnp.stack(losses)
    presents = jnp.stack(presents)
    cnt = jnp.sum(presents)
    jacc = jnp.where(cnt > 0, jnp.sum(losses * presents) / jnp.maximum(cnt, 1.0), 0.0)
    return w_ce * wce + w_ls * jacc


if __name__ == "__main__":
    key = jax.random.PRNGKey(0)
    N, C = 128, 8                     # N points, C classes
    k1, k2 = jax.random.split(key)
    logits = jax.random.normal(k1, (N, C), dtype=jnp.float32) * 2.0
    labels = jax.random.randint(k2, (N,), 0, C, dtype=jnp.int32)
    # deterministic per-class weights (stand-in for the `weight` arg of IOUloss.__init__)
    weight = 1.0 + 0.1 * jnp.arange(C, dtype=jnp.float32)

    out = iou_loss(logits, labels, weight, w_ce=1.0, w_ls=1.0)
    out = jax.block_until_ready(out)

    ref = iou_loss_ref(logits, labels, weight, w_ce=1.0, w_ls=1.0)
    np.testing.assert_allclose(np.asarray(out), np.asarray(ref), rtol=2e-3, atol=2e-3)

    print("KERNEL_OK")
</pallas_src>

<mosaic_0001>
module attributes {stable_mosaic.version = 11 : i64} {
  func.func @kernel(%arg0: i32, %arg1: memref<8x128xf32, #tpu.memory_space<vmem>>, %arg2: memref<1x128xi32, #tpu.memory_space<vmem>>, %arg3: memref<128x1xi32, #tpu.memory_space<vmem>>, %arg4: memref<8x1xf32, #tpu.memory_space<vmem>>, %arg5: memref<1x1xf32, #tpu.memory_space<vmem>>) attributes {dimension_semantics = [#tpu.dimension_semantics<arbitrary>], iteration_bounds = array<i64: 1>, scalar_prefetch = 0 : i64, scratch_operands = 0 : i64, tpu.core_type = #tpu.core_type<tc>, window_params = [{pipeline_mode = #tpu.pipeline_mode<synchronous>, transform_indices = @transform_0, window_bounds = array<i64: 8, 128>}, {pipeline_mode = #tpu.pipeline_mode<synchronous>, transform_indices = @transform_1, window_bounds = array<i64: 1, 128>}, {pipeline_mode = #tpu.pipeline_mode<synchronous>, transform_indices = @transform_2, window_bounds = array<i64: 128, 1>}, {pipeline_mode = #tpu.pipeline_mode<synchronous>, transform_indices = @transform_3, window_bounds = array<i64: 8, 1>}, {pipeline_mode = #tpu.pipeline_mode<synchronous>, transform_indices = @transform_4, window_bounds = array<i64: 1, 1>}]} {
    %c0 = arith.constant 0 : index
    %c0_0 = arith.constant 0 : index
    %0 = vector.load %arg1[%c0, %c0_0] : memref<8x128xf32, #tpu.memory_space<vmem>>, vector<8x128xf32>
    %c0_1 = arith.constant 0 : index
    %c0_2 = arith.constant 0 : index
    %1 = vector.load %arg2[%c0_1, %c0_2] : memref<1x128xi32, #tpu.memory_space<vmem>>, vector<1x128xi32>
    %c0_3 = arith.constant 0 : index
    %c0_4 = arith.constant 0 : index
    %2 = vector.load %arg3[%c0_3, %c0_4] : memref<128x1xi32, #tpu.memory_space<vmem>>, vector<128x1xi32>
    %c0_5 = arith.constant 0 : index
    %c0_6 = arith.constant 0 : index
    %3 = vector.load %arg4[%c0_5, %c0_6] : memref<8x1xf32, #tpu.memory_space<vmem>>, vector<8x1xf32>
    %4 = tpu.iota {dimensions = array<i32: 0>} : vector<8x128xi32>
    %5 = vector.broadcast %1 : vector<1x128xi32> to vector<8x128xi32>
    %6 = arith.cmpi eq, %4, %5 : vector<8x128xi32>
    %7 = arith.extui %6 : vector<8x128xi1> to vector<8x128xi32>
    %8 = arith.sitofp %7 : vector<8x128xi32> to vector<8x128xf32>
    %cst = arith.constant dense<0xFF800000> : vector<128xf32>
    %9 = vector.multi_reduction <maximumf>, %0, %cst [0] : vector<8x128xf32> to vector<128xf32>
    %10 = vector.shape_cast %9 : vector<128xf32> to vector<1x128xf32>
    %11 = vector.broadcast %10 : vector<1x128xf32> to vector<8x128xf32>
    %12 = arith.subf %0, %11 : vector<8x128xf32>
    %13 = math.exp %12 : vector<8x128xf32>
    %cst_7 = arith.constant dense<0.000000e+00> : vector<128xf32>
    %14 = vector.multi_reduction <add>, %13, %cst_7 [0] : vector<8x128xf32> to vector<128xf32>
    %15 = vector.shape_cast %14 : vector<128xf32> to vector<1x128xf32>
    %16 = vector.broadcast %15 : vector<1x128xf32> to vector<8x128xf32>
    %17 = arith.divf %13, %16 : vector<8x128xf32>
    %18 = math.log %15 : vector<1x128xf32>
    %19 = vector.broadcast %18 : vector<1x128xf32> to vector<8x128xf32>
    %20 = arith.subf %12, %19 : vector<8x128xf32>
    %21 = vector.broadcast %3 : vector<8x1xf32> to vector<8x128xf32>
    %22 = arith.mulf %8, %21 : vector<8x128xf32>
    %cst_8 = arith.constant dense<0.000000e+00> : vector<128xf32>
    %23 = vector.multi_reduction <add>, %22, %cst_8 [0] : vector<8x128xf32> to vector<128xf32>
    %24 = vector.shape_cast %23 : vector<128xf32> to vector<1x128xf32>
    %25 = arith.mulf %8, %20 : vector<8x128xf32>
    %cst_9 = arith.constant dense<0.000000e+00> : vector<128xf32>
    %26 = vector.multi_reduction <add>, %25, %cst_9 [0] : vector<8x128xf32> to vector<128xf32>
    %27 = vector.shape_cast %26 : vector<128xf32> to vector<1x128xf32>
    %cst_10 = arith.constant 0.000000e+00 : f32
    %28 = vector.broadcast %cst_10 : f32 to vector<1x128xf32>
    %29 = arith.subf %28, %27 : vector<1x128xf32>
    %30 = arith.mulf %24, %29 : vector<1x128xf32>
    %31 = vector.shape_cast %30 : vector<1x128xf32> to vector<1x1x128xf32>
    %cst_11 = arith.constant dense<0.000000e+00> : vector<1xf32>
    %32 = vector.multi_reduction <add>, %31, %cst_11 [1, 2] : vector<1x1x128xf32> to vector<1xf32>
    %33 = vector.shape_cast %32 : vector<1xf32> to vector<1x1x1xf32>
    %34 = vector.extract %33[0, 0, 0] : f32 from vector<1x1x1xf32>
    %35 = vector.shape_cast %24 : vector<1x128xf32> to vector<1x1x128xf32>
    %cst_12 = arith.constant dense<0.000000e+00> : vector<1xf32>
    %36 = vector.multi_reduction <add>, %35, %cst_12 [1, 2] : vector<1x1x128xf32> to vector<1xf32>
    %37 = vector.shape_cast %36 : vector<1xf32> to vector<1x1x1xf32>
    %38 = vector.extract %37[0, 0, 0] : f32 from vector<1x1x1xf32>
    %39 = arith.divf %34, %38 : f32
    %40 = arith.subf %8, %17 : vector<8x128xf32>
    %41 = math.absf %40 : vector<8x128xf32>
    %42 = vector.shape_cast %41 : vector<8x128xf32> to vector<8x1x128xf32>
    %43 = vector.shape_cast %8 : vector<8x128xf32> to vector<8x1x128xf32>
    %44 = tpu.transpose %41, [1, 0] : vector<8x128xf32> -> vector<128x8xf32>
    %45 = vector.extract_strided_slice %44 {offsets = [0, 0], sizes = [128, 1], strides = [1, 1]} : vector<128x8xf32> to vector<128x1xf32>
    %46 = vector.extract_strided_slice %44 {offsets = [0, 1], sizes = [128, 1], strides = [1, 1]} : vector<128x8xf32> to vector<128x1xf32>
    %47 = vector.extract_strided_slice %44 {offsets = [0, 2], sizes = [128, 1], strides = [1, 1]} : vector<128x8xf32> to vector<128x1xf32>
    %48 = vector.extract_strided_slice %44 {offsets = [0, 3], sizes = [128, 1], strides = [1, 1]} : vector<128x8xf32> to vector<128x1xf32>
    %49 = vector.extract_strided_slice %44 {offsets = [0, 4], sizes = [128, 1], strides = [1, 1]} : vector<128x8xf32> to vector<128x1xf32>
    %50 = vector.extract_strided_slice %44 {offsets = [0, 5], sizes = [128, 1], strides = [1, 1]} : vector<128x8xf32> to vector<128x1xf32>
    %51 = vector.extract_strided_slice %44 {offsets = [0, 6], sizes = [128, 1], strides = [1, 1]} : vector<128x8xf32> to vector<128x1xf32>
    %52 = vector.extract_strided_slice %44 {offsets = [0, 7], sizes = [128, 1], strides = [1, 1]} : vector<128x8xf32> to vector<128x1xf32>
    %53 = vector.shape_cast %45 : vector<128x1xf32> to vector<1x128x1xf32>
    %54 = vector.shape_cast %46 : vector<128x1xf32> to vector<1x128x1xf32>
    %55 = vector.shape_cast %47 : vector<128x1xf32> to vector<1x128x1xf32>
    %56 = vector.shape_cast %48 : vector<128x1xf32> to vector<1x128x1xf32>
    %57 = vector.shape_cast %49 : vector<128x1xf32> to vector<1x128x1xf32>
    %58 = vector.shape_cast %50 : vector<128x1xf32> to vector<1x128x1xf32>
    %59 = vector.shape_cast %51 : vector<128x1xf32> to vector<1x128x1xf32>
    %60 = vector.shape_cast %52 : vector<128x1xf32> to vector<1x128x1xf32>
    %61 = tpu.concatenate %53, %54, %55, %56, %57, %58, %59, %60 in 0 : vector<1x128x1xf32>, vector<1x128x1xf32>, vector<1x128x1xf32>, vector<1x128x1xf32>, vector<1x128x1xf32>, vector<1x128x1xf32>, vector<1x128x1xf32>, vector<1x128x1xf32> -> vector<8x128x1xf32>
    %62 = tpu.iota {dimensions = array<i32: 0>} : vector<128x128xi32>
    %63 = tpu.iota {dimensions = array<i32: 1>} : vector<128x128xi32>
    %64 = arith.cmpi slt, %62, %63 : vector<128x128xi32>
    %65 = vector.broadcast %61 : vector<8x128x1xf32> to vector<8x128x128xf32>
    %66 = vector.broadcast %42 : vector<8x1x128xf32> to vector<8x128x128xf32>
    %67 = arith.cmpf ogt, %65, %66 : vector<8x128x128xf32>
    %68 = vector.broadcast %61 : vector<8x128x1xf32> to vector<8x128x128xf32>
    %69 = vector.broadcast %42 : vector<8x1x128xf32> to vector<8x128x128xf32>
    %70 = arith.cmpf oeq, %68, %69 : vector<8x128x128xf32>
    %71 = vector.shape_cast %64 : vector<128x128xi1> to vector<1x128x128xi1>
    %72 = vector.broadcast %71 : vector<1x128x128xi1> to vector<8x128x128xi1>
    %73 = arith.andi %70, %72 : vector<8x128x128xi1>
    %74 = arith.ori %67, %73 : vector<8x128x128xi1>
    %75 = arith.extui %74 : vector<8x128x128xi1> to vector<8x128x128xi32>
    %76 = arith.sitofp %75 : vector<8x128x128xi32> to vector<8x128x128xf32>
    %77 = tpu.iota {dimensions = array<i32: 0>} : vector<8x128x1xi32>
    %78 = vector.shape_cast %2 : vector<128x1xi32> to vector<1x128x1xi32>
    %79 = vector.broadcast %78 : vector<1x128x1xi32> to vector<8x128x1xi32>
    %80 = arith.cmpi eq, %79, %77 : vector<8x128x1xi32>
    %81 = arith.extui %80 : vector<8x128x1xi1> to vector<8x128x1xi32>
    %82 = arith.sitofp %81 : vector<8x128x1xi32> to vector<8x128x1xf32>
    %cst_13 = arith.constant dense<0.000000e+00> : vector<8x128xf32>
    %83 = vector.multi_reduction <add>, %76, %cst_13 [1] : vector<8x128x128xf32> to vector<8x128xf32>
    %84 = vector.shape_cast %83 : vector<8x128xf32> to vector<8x1x128xf32>
    %85 = vector.broadcast %82 : vector<8x128x1xf32> to vector<8x128x128xf32>
    %86 = arith.mulf %76, %85 : vector<8x128x128xf32>
    %cst_14 = arith.constant dense<0.000000e+00> : vector<8x128xf32>
    %87 = vector.multi_reduction <add>, %86, %cst_14 [1] : vector<8x128x128xf32> to vector<8x128xf32>
    %88 = vector.shape_cast %87 : vector<8x128xf32> to vector<8x1x128xf32>
    %89 = arith.addf %88, %43 : vector<8x1x128xf32>
    %cst_15 = arith.constant dense<0.000000e+00> : vector<8x1xf32>
    %90 = vector.multi_reduction <add>, %43, %cst_15 [2] : vector<8x1x128xf32> to vector<8x1xf32>
    %91 = vector.shape_cast %90 : vector<8x1xf32> to vector<8x1x1xf32>
    %92 = vector.broadcast %91 : vector<8x1x1xf32> to vector<8x1x128xf32>
    %93 = arith.addf %92, %84 : vector<8x1x128xf32>
    %cst_16 = arith.constant 1.000000e+00 : f32
    %94 = vector.broadcast %cst_16 : f32 to vector<8x1x128xf32>
    %95 = arith.addf %93, %94 : vector<8x1x128xf32>
    %96 = arith.subf %95, %89 : vector<8x1x128xf32>
    %97 = vector.broadcast %91 : vector<8x1x1xf32> to vector<8x1x128xf32>
    %98 = arith.subf %97, %89 : vector<8x1x128xf32>
    %99 = arith.divf %98, %96 : vector<8x1x128xf32>
    %cst_17 = arith.constant 1.000000e+00 : f32
    %100 = vector.broadcast %cst_17 : f32 to vector<8x1x128xf32>
    %101 = arith.subf %100, %99 : vector<8x1x128xf32>
    %102 = arith.subf %89, %43 : vector<8x1x128xf32>
    %103 = vector.broadcast %91 : vector<8x1x1xf32> to vector<8x1x128xf32>
    %104 = arith.addf %103, %84 : vector<8x1x128xf32>
    %105 = arith.subf %104, %102 : vector<8x1x128xf32>
    %cst_18 = arith.constant 1.000000e+00 : f32
    %106 = vector.broadcast %cst_18 : f32 to vector<8x1x128xf32>
    %107 = arith.maximumf %105, %106 : vector<8x1x128xf32>
    %cst_19 = arith.constant 5.000000e-01 : f32
    %108 = vector.broadcast %cst_19 : f32 to vector<8x1x128xf32>
    %109 = arith.cmpf ogt, %84, %108 : vector<8x1x128xf32>
    %110 = vector.broadcast %91 : vector<8x1x1xf32> to vector<8x1x128xf32>
    %111 = arith.subf %110, %102 : vector<8x1x128xf32>
    %112 = arith.divf %111, %107 : vector<8x1x128xf32>
    %cst_20 = arith.constant 1.000000e+00 : f32
    %113 = vector.broadcast %cst_20 : f32 to vector<8x1x128xf32>
    %114 = arith.subf %113, %112 : vector<8x1x128xf32>
    %cst_21 = arith.constant 0.000000e+00 : f32
    %115 = vector.broadcast %cst_21 : f32 to vector<8x1x128xf32>
    %116 = arith.select %109, %114, %115 : vector<8x1x128xi1>, vector<8x1x128xf32>
    %117 = arith.subf %101, %116 : vector<8x1x128xf32>
    %118 = arith.mulf %42, %117 : vector<8x1x128xf32>
    %cst_22 = arith.constant dense<0.000000e+00> : vector<8x1xf32>
    %119 = vector.multi_reduction <add>, %118, %cst_22 [2] : vector<8x1x128xf32> to vector<8x1xf32>
    %120 = vector.shape_cast %119 : vector<8x1xf32> to vector<8x1x1xf32>
    %cst_23 = arith.constant 0.000000e+00 : f32
    %121 = vector.broadcast %cst_23 : f32 to vector<8x1x1xf32>
    %122 = arith.cmpf ogt, %91, %121 : vector<8x1x1xf32>
    %123 = arith.extui %122 : vector<8x1x1xi1> to vector<8x1x1xi32>
    %124 = arith.sitofp %123 : vector<8x1x1xi32> to vector<8x1x1xf32>
    %125 = arith.mulf %124, %120 : vector<8x1x1xf32>
    %126 = vector.shape_cast %125 : vector<8x1x1xf32> to vector<1x8x1x1xf32>
    %cst_24 = arith.constant dense<0.000000e+00> : vector<1xf32>
    %127 = vector.multi_reduction <add>, %126, %cst_24 [1, 2, 3] : vector<1x8x1x1xf32> to vector<1xf32>
    %128 = vector.shape_cast %127 : vector<1xf32> to vector<1x1x1x1xf32>
    %129 = vector.extract %128[0, 0, 0, 0] : f32 from vector<1x1x1x1xf32>
    %130 = vector.shape_cast %124 : vector<8x1x1xf32> to vector<1x8x1x1xf32>
    %cst_25 = arith.constant dense<0.000000e+00> : vector<1xf32>
    %131 = vector.multi_reduction <add>, %130, %cst_25 [1, 2, 3] : vector<1x8x1x1xf32> to vector<1xf32>
    %132 = vector.shape_cast %131 : vector<1xf32> to vector<1x1x1x1xf32>
    %133 = vector.extract %132[0, 0, 0, 0] : f32 from vector<1x1x1x1xf32>
    %cst_26 = arith.constant 0.000000e+00 : f32
    %134 = arith.cmpf ogt, %133, %cst_26 : f32
    %cst_27 = arith.constant 1.000000e+00 : f32
    %135 = arith.maximumf %133, %cst_27 : f32
    %136 = arith.divf %129, %135 : f32
    %cst_28 = arith.constant 0.000000e+00 : f32
    %137 = arith.select %134, %136, %cst_28 : f32
    %cst_29 = arith.constant 1.000000e+00 : f32
    %138 = arith.mulf %cst_29, %39 : f32
    %cst_30 = arith.constant 1.000000e+00 : f32
    %139 = arith.mulf %cst_30, %137 : f32
    %140 = arith.addf %138, %139 : f32
    %141 = vector.broadcast %140 : f32 to vector<1x1xf32>
    %c0_31 = arith.constant 0 : index
    %c0_32 = arith.constant 0 : index
    %142 = vector.load %arg5[%c0_31, %c0_32] : memref<1x1xf32, #tpu.memory_space<vmem>>, vector<1x1xf32>
    tpu.vector_store %arg5[%c0_31, %c0_32], %141 {strides = array<i32>} : memref<1x1xf32, #tpu.memory_space<vmem>>, vector<1x1xf32>,
    return
  }
  func.func @transform_0(%arg0: i32) -> (i32, i32) {
    %c0_i32 = arith.constant 0 : i32
    %c0_i32_0 = arith.constant 0 : i32
    %c0_i32_1 = arith.constant 0 : i32
    return %c0_i32, %c0_i32_0 : i32, i32
  }
  func.func @transform_1(%arg0: i32) -> (i32, i32) {
    %c0_i32 = arith.constant 0 : i32
    %c0_i32_0 = arith.constant 0 : i32
    %c0_i32_1 = arith.constant 0 : i32
    return %c0_i32, %c0_i32_0 : i32, i32
  }
  func.func @transform_2(%arg0: i32) -> (i32, i32) {
    %c0_i32 = arith.constant 0 : i32
    %c0_i32_0 = arith.constant 0 : i32
    %c0_i32_1 = arith.constant 0 : i32
    return %c0_i32, %c0_i32_0 : i32, i32
  }
  func.func @transform_3(%arg0: i32) -> (i32, i32) {
    %c0_i32 = arith.constant 0 : i32
    %c0_i32_0 = arith.constant 0 : i32
    %c0_i32_1 = arith.constant 0 : i32
    return %c0_i32, %c0_i32_0 : i32, i32
  }
  func.func @transform_4(%arg0: i32) -> (i32, i32) {
    %c0_i32 = arith.constant 0 : i32
    %c0_i32_0 = arith.constant 0 : i32
    %c0_i32_1 = arith.constant 0 : i32
    return %c0_i32, %c0_i32_0 : i32, i32
  }
}

</mosaic_0001>

<llo_original>
// kernel: tpu_custom_call.1
$region0: #{tpu_custom_call.1}
  #allocation0 [shape = 'u32[]', space=smem, size = 0x4, offset = 0x4, fixed_abs, tag = 'smem constant byte address 0x4 - core index']
  #allocation1 [shape = 'u32[144,128]{1,0:T(1,128)}', space=vmem, size = 0x12000, scoped, tag = 'internal scratch']
  %s0 = inlined_call_operand.vmem [shape: f32[8,128], index: 0, kind: input, shape index: {}]
  %s1 = inlined_call_operand.vmem [shape: s32[1,128], index: 1, kind: input, shape index: {}]
  %s2 = inlined_call_operand.vmem [shape: s32[128,1], index: 2, kind: input, shape index: {}]
  %s3 = inlined_call_operand.vmem [shape: f32[8,1], index: 3, kind: input, shape index: {}]
  %s4 = inlined_call_operand.hbm [shape: f32[1,1], index: 4, kind: output, shape index: {}]
  %s5 = sld [smem:[#allocation0]]
  $region26: #{tpu_custom_call.1} parent=0
    _
  %s7 = ssub.s32 1, %s5
  %s8 = scalar_select 0, %s7, %s5
  $region1: #{tpu_custom_call.1} parent=0
    #allocation2 [shape = 'u8[512]{0}', space=vmem, size = 0x400, scoped, tag = 'output window, operand 0, single buffered']
    #allocation3 [shape = 's32[1]{0}', space=sflag, size = 0x4, scoped, tag = 'scoped memory for tpu_custom_call.1']
    %9 = vsyncpa [#allocation3], 0
    // Predicated region
    $region2: #{tpu_custom_call.1} parent=1 // pred_check
      _
    $region3: #{tpu_custom_call.1} parent=1 // pred_check_branch
      %11 = sbr.rel (0) target = $region5
    $region4: #{tpu_custom_call.1} parent=1 // pred_region
      _
    $region5: #{tpu_custom_call.1} parent=1 // pred_fallthru
      _
    // Predicated region
    $region6: #{tpu_custom_call.1} parent=1 // pred_check
      _
    $region7: #{tpu_custom_call.1} parent=1 // pred_check_branch
      %13 = sbr.rel (0) target = $region9
    $region8: #{tpu_custom_call.1} parent=1 // pred_region
      _
    $region9: #{tpu_custom_call.1} parent=1 // pred_fallthru
      _
    // Predicated region
    $region10: #{tpu_custom_call.1} parent=1 // pred_check
      _
    $region11: #{tpu_custom_call.1} parent=1 // pred_check_branch
      %15 = sbr.rel (0) target = $region13
    $region12: #{tpu_custom_call.1} parent=1 // pred_region
      _
    $region13: #{tpu_custom_call.1} parent=1 // pred_fallthru
      _
    // Predicated region
    $region14: #{tpu_custom_call.1} parent=1 // pred_check
      _
    $region15: #{tpu_custom_call.1} parent=1 // pred_check_branch
      %17 = sbr.rel (0) target = $region17
    $region16: #{tpu_custom_call.1} parent=1 // pred_region
      _
    $region17: #{tpu_custom_call.1} parent=1 // pred_fallthru
      _
    %v18 = vld [vmem:[%s0] sm:$0xff]
    %v19 = vld [vmem:[%s1] sm:$0x1]
    %v20 = vld [vmem:[%s2] sm:$0xff]
    %v21 = vld [vmem:[%s2 + $0x8] sm:$0xff]
    %v22 = vld [vmem:[%s2 + $0x10] sm:$0xff]
    %v23 = vld [vmem:[%s2 + $0x18] sm:$0xff]
    %v24 = vld [vmem:[%s2 + $0x20] sm:$0xff]
    %v25 = vld [vmem:[%s2 + $0x28] sm:$0xff]
    %v26 = vld [vmem:[%s2 + $0x30] sm:$0xff]
    %v27 = vld [vmem:[%s2 + $0x38] sm:$0xff]
    %v28 = vld [vmem:[%s2 + $0x40] sm:$0xff]
    %v29 = vld [vmem:[%s2 + $0x48] sm:$0xff]
    %v30 = vld [vmem:[%s2 + $0x50] sm:$0xff]
    %v31 = vld [vmem:[%s2 + $0x58] sm:$0xff]
    %v32 = vld [vmem:[%s2 + $0x60] sm:$0xff]
    %v33 = vld [vmem:[%s2 + $0x68] sm:$0xff]
    %v34 = vld [vmem:[%s2 + $0x70] sm:$0xff]
    %v35 = vld [vmem:[%s2 + $0x78] sm:$0xff]
    %v36 = vld [vmem:[%s3] sm:$0xff]
    %v37 = vlaneseq
    %v38 = vshrl.u32 %v37, 7
    %v39 = vlaneseq
    %v40 = vshrl.u32 %v39, 7
    %v41 = vsub.s32 0, %v40
    %v42 = vrot.slane %v19, %v41
    %vm43 = vcmp.eq.s32.totalorder %v38, %v42
    %v44 = vsel %vm43, 1, 0
    %v45 = vcvt.s32.f32 %v44
    %v46 = vrot.slane %v18, 4
    %v47 = vmax.f32 %v18, %v46
    %v48 = vrot.slane %v47, 2
    %v49 = vmax.f32 %v47, %v48
    %v50 = vrot.slane %v49, 1
    %v51 = vmax.f32 %v49, %v50
    %v52 = vsub.f32 %v18, %v51
    %v53 = vmul.f32 %v52, 1.442695
    %v54 = vpow.pop %v53
    %v55 = vrot.slane %v54, 4
    %v56 = vadd.f32 %v54, %v55
    %v57 = vrot.slane %v56, 2
    %v58 = vadd.f32 %v56, %v57
    %v59 = vrot.slane %v58, 1
    %v60 = vadd.f32 %v58, %v59
    %v61 = vrcp.pop %v60
    %v62 = vmul.f32 %v54, %v61
    %v63 = vlog2.pop %v60
    %v64 = vmul.f32 %v63, 0.6931472
    %v65 = vsub.f32 %v52, %v64
    %67 = vset.pattern.permute.xlu0 0
    %68 = vperm.xlu0 %67, %v36
    %v69 = vpop.permute.xlu0 %68
    %v71 = vmul.f32 %v45, %v69
    %v72 = vrot.slane %v71, 4
    %v73 = vadd.f32 %v71, %v72
    %v74 = vrot.slane %v73, 2
    %v75 = vadd.f32 %v73, %v74
    %v76 = vrot.slane %v75, 1
    %v77 = vadd.f32 %v75, %v76
    %v78 = vmul.f32 %v45, %v65
    %v79 = vrot.slane %v78, 4
    %v80 = vadd.f32 %v78, %v79
    %v81 = vrot.slane %v80, 2
    %v82 = vadd.f32 %v80, %v81
    %v83 = vrot.slane %v82, 1
    %v84 = vadd.f32 %v82, %v83
    %v85 = vsub.f32 0.0, %v84
    %v86 = vmul.f32 %v77, %v85
    %vm87 = vcmask 1040384
    %v88 = vsel %vm87, %v86, 0.0
    %89 = vadd.xlane.f32.xlu0 %v88
    %v90 = vpop.xlane.xlu0 %89
    %v91 = vrot.slane %v90, 4
    %v92 = vadd.f32 %v90, %v91
    %v93 = vrot.slane %v92, 2
    %v94 = vadd.f32 %v92, %v93
    %v95 = vrot.slane %v94, 1
    %v96 = vadd.f32 %v94, %v95
    %s97 = vtos %v96
    %v98 = vsel %vm87, %v77, 0.0
    %99 = vadd.xlane.f32.xlu0 %v98
    %v100 = vpop.xlane.xlu0 %99
    %v101 = vrot.slane %v100, 4
    %v102 = vadd.f32 %v100, %v101
    %v103 = vrot.slane %v102, 2
    %v104 = vadd.f32 %v102, %v103
    %v105 = vrot.slane %v104, 1
    %v106 = vadd.f32 %v104, %v105
    %s107 = vtos %v106
    %v108 = vstv %s107
    %v109 = vrcp.pop %v108
    %s110 = vtos %v109
    %s111 = smul.f32 %s97, %s110
    %v112 = vsub.f32 %v45, %v62
    %v113 = vand.u32 2147483647, %v112
    %v115 = vcombine.high %v113, %v113
    %v117 = vunpack.c.l.s4 1966171168
    %v118 = vunpack.c.0.s8 %v117
    %v119 = vlaneseq
    %v120 = vshrl.u32 %v119, 7
    %v121 = vsub.s32 %v118, %v120
    %v122 = vrot.slane %v113, %v121
    %v124 = vunpack.c.l.s4 1966171168
    %v125 = vunpack.c.0.s8 %v124
    %v126 = vlaneseq
    %v127 = vshrl.u32 %v126, 7
    %v128 = vsub.s32 %v125, %v127
    %v129 = vrot.slane %v115, %v128
    %v130 = vcombine.high %v122, %v122
    %v131 = vcombine.high %v129, %v129
    %v133 = vunpack.c.l.s4 1966171168
    %v134 = vunpack.c.0.s8 %v133
    %v135 = vlaneseq
    %v136 = vshrl.u32 %v135, 7
    %v137 = vsub.s32 %v134, %v136
    %v138 = vrot.slane %v122, %v137
    %v140 = vunpack.c.l.s4 1966171168
    %v141 = vunpack.c.0.s8 %v140
    %v142 = vlaneseq
    %v143 = vshrl.u32 %v142, 7
    %v144 = vsub.s32 %v141, %v143
    %v145 = vrot.slane %v129, %v144
    %v147 = vunpack.c.l.s4 1966171168
    %v148 = vunpack.c.0.s8 %v147
    %v149 = vlaneseq
    %v150 = vshrl.u32 %v149, 7
    %v151 = vsub.s32 %v148, %v150
    %v152 = vrot.slane %v130, %v151
    %v154 = vunpack.c.l.s4 1966171168
    %v155 = vunpack.c.0.s8 %v154
    %v156 = vlaneseq
    %v157 = vshrl.u32 %v156, 7
    %v158 = vsub.s32 %v155, %v157
    %v159 = vrot.slane %v131, %v158
    %v160 = vcombine.high %v138, %v138
    %v161 = vcombine.high %v145, %v145
    %v162 = vcombine.high %v152, %v152
    %v163 = vcombine.high %v159, %v159
    %v173 = vcombine.high %v45, %v45
    %v175 = vunpack.c.l.s4 1966171168
    %v176 = vunpack.c.0.s8 %v175
    %v177 = vlaneseq
    %v178 = vshrl.u32 %v177, 7
    %v179 = vsub.s32 %v176, %v178
    %v180 = vrot.slane %v45, %v179
    %v182 = vunpack.c.l.s4 1966171168
    %v183 = vunpack.c.0.s8 %v182
    %v184 = vlaneseq
    %v185 = vshrl.u32 %v184, 7
    %v186 = vsub.s32 %v183, %v185
    %v187 = vrot.slane %v173, %v186
    %v188 = vcombine.high %v180, %v180
    %v189 = vcombine.high %v187, %v187
    %v191 = vunpack.c.l.s4 1966171168
    %v192 = vunpack.c.0.s8 %v191
    %v193 = vlaneseq
    %v194 = vshrl.u32 %v193, 7
    %v195 = vsub.s32 %v192, %v194
    %v196 = vrot.slane %v180, %v195
    %v198 = vunpack.c.l.s4 1966171168
    %v199 = vunpack.c.0.s8 %v198
    %v200 = vlaneseq
    %v201 = vshrl.u32 %v200, 7
    %v202 = vsub.s32 %v199, %v201
    %v203 = vrot.slane %v187, %v202
    %v205 = vunpack.c.l.s4 1966171168
    %v206 = vunpack.c.0.s8 %v205
    %v207 = vlaneseq
    %v208 = vshrl.u32 %v207, 7
    %v209 = vsub.s32 %v206, %v208
    %v210 = vrot.slane %v188, %v209
    %v212 = vunpack.c.l.s4 1966171168
    %v213 = vunpack.c.0.s8 %v212
    %v214 = vlaneseq
    %v215 = vshrl.u32 %v214, 7
    %v216 = vsub.s32 %v213, %v215
    %v217 = vrot.slane %v189, %v216
    %v218 = vcombine.high %v196, %v196
    %v219 = vcombine.high %v203, %v203
    %v220 = vcombine.high %v210, %v210
    %v221 = vcombine.high %v217, %v217
    %230 = vxpose.xlu0.b32.start [1/16] %v113, 128
    %231 = vxpose.xlu0.b32.cont [2/16] 0.0, 128
    %232 = vxpose.xlu0.b32.cont [3/16] 0.0, 128
    %233 = vxpose.xlu0.b32.cont [4/16] 0.0, 128
    %234 = vxpose.xlu0.b32.cont [5/16] 0.0, 128
    %235 = vxpose.xlu0.b32.cont [6/16] 0.0, 128
    %236 = vxpose.xlu0.b32.cont [7/16] 0.0, 128
    %237 = vxpose.xlu0.b32.cont [8/16] 0.0, 128
    %238 = vxpose.xlu0.b32.cont [9/16] 0.0, 128
    %239 = vxpose.xlu0.b32.cont [10/16] 0.0, 128
    %240 = vxpose.xlu0.b32.cont [11/16] 0.0, 128
    %241 = vxpose.xlu0.b32.cont [12/16] 0.0, 128
    %242 = vxpose.xlu0.b32.cont [13/16] 0.0, 128
    %243 = vxpose.xlu0.b32.cont [14/16] 0.0, 128
    %244 = vxpose.xlu0.b32.cont [15/16] 0.0, 128
    %245 = vxpose.xlu0.b32.end [16/16] 0.0, 128
    %v246 = vpop.trf.xlu0
    %v247 = vpop.trf.xlu0
    %v248 = vpop.trf.xlu0
    %v249 = vpop.trf.xlu0
    %v250 = vpop.trf.xlu0
    %v251 = vpop.trf.xlu0
    %v252 = vpop.trf.xlu0
    %v253 = vpop.trf.xlu0
    %v254 = vpop.trf.xlu0
    %v255 = vpop.trf.xlu0
    %v256 = vpop.trf.xlu0
    %v257 = vpop.trf.xlu0
    %v258 = vpop.trf.xlu0
    %v259 = vpop.trf.xlu0
    %v260 = vpop.trf.xlu0
    %v261 = vpop.trf.xlu0
    %278 = vrot.lane.b32.xlu0 %v246, 127
    %v279 = vpop.permute.xlu0 %278
    %280 = vrot.lane.b32.xlu0 %v247, 127
    %v281 = vpop.permute.xlu0 %280
    %282 = vrot.lane.b32.xlu0 %v248, 127
    %v283 = vpop.permute.xlu0 %282
    %284 = vrot.lane.b32.xlu0 %v249, 127
    %v285 = vpop.permute.xlu0 %284
    %286 = vrot.lane.b32.xlu0 %v250, 127
    %v287 = vpop.permute.xlu0 %286
    %288 = vrot.lane.b32.xlu0 %v251, 127
    %v289 = vpop.permute.xlu0 %288
    %290 = vrot.lane.b32.xlu0 %v252, 127
    %v291 = vpop.permute.xlu0 %290
    %292 = vrot.lane.b32.xlu0 %v253, 127
    %v293 = vpop.permute.xlu0 %292
    %294 = vrot.lane.b32.xlu0 %v254, 127
    %v295 = vpop.permute.xlu0 %294
    %296 = vrot.lane.b32.xlu0 %v255, 127
    %v297 = vpop.permute.xlu0 %296
    %298 = vrot.lane.b32.xlu0 %v256, 127
    %v299 = vpop.permute.xlu0 %298
    %300 = vrot.lane.b32.xlu0 %v257, 127
    %v301 = vpop.permute.xlu0 %300
    %302 = vrot.lane.b32.xlu0 %v258, 127
    %v303 = vpop.permute.xlu0 %302
    %304 = vrot.lane.b32.xlu0 %v259, 127
    %v305 = vpop.permute.xlu0 %304
    %306 = vrot.lane.b32.xlu0 %v260, 127
    %v307 = vpop.permute.xlu0 %306
    %308 = vrot.lane.b32.xlu0 %v261, 127
    %v309 = vpop.permute.xlu0 %308
    %310 = vrot.lane.b32.xlu0 %v246, 126
    %v311 = vpop.permute.xlu0 %310
    %312 = vrot.lane.b32.xlu0 %v247, 126
    %v313 = vpop.permute.xlu0 %312
    %314 = vrot.lane.b32.xlu0 %v248, 126
    %v315 = vpop.permute.xlu0 %314
    %316 = vrot.lane.b32.xlu0 %v249, 126
    %v317 = vpop.permute.xlu0 %316
    %318 = vrot.lane.b32.xlu0 %v250, 126
    %v319 = vpop.permute.xlu0 %318
    %320 = vrot.lane.b32.xlu0 %v251, 126
    %v321 = vpop.permute.xlu0 %320
    %322 = vrot.lane.b32.xlu0 %v252, 126
    %v323 = vpop.permute.xlu0 %322
    %324 = vrot.lane.b32.xlu0 %v253, 126
    %v325 = vpop.permute.xlu0 %324
    %326 = vrot.lane.b32.xlu0 %v254, 126
    %v327 = vpop.permute.xlu0 %326
    %328 = vrot.lane.b32.xlu0 %v255, 126
    %v329 = vpop.permute.xlu0 %328
    %330 = vrot.lane.b32.xlu0 %v256, 126
    %v331 = vpop.permute.xlu0 %330
    %332 = vrot.lane.b32.xlu0 %v257, 126
    %v333 = vpop.permute.xlu0 %332
    %334 = vrot.lane.b32.xlu0 %v258, 126
    %v335 = vpop.permute.xlu0 %334
    %336 = vrot.lane.b32.xlu0 %v259, 126
    %v337 = vpop.permute.xlu0 %336
    %338 = vrot.lane.b32.xlu0 %v260, 126
    %v339 = vpop.permute.xlu0 %338
    %340 = vrot.lane.b32.xlu0 %v261, 126
    %v341 = vpop.permute.xlu0 %340
    %342 = vrot.lane.b32.xlu0 %v246, 125
    %v343 = vpop.permute.xlu0 %342
    %344 = vrot.lane.b32.xlu0 %v247, 125
    %v345 = vpop.permute.xlu0 %344
    %346 = vrot.lane.b32.xlu0 %v248, 125
    %v347 = vpop.permute.xlu0 %346
    %348 = vrot.lane.b32.xlu0 %v249, 125
    %v349 = vpop.permute.xlu0 %348
    %350 = vrot.lane.b32.xlu0 %v250, 125
    %v351 = vpop.permute.xlu0 %350
    %352 = vrot.lane.b32.xlu0 %v251, 125
    %v353 = vpop.permute.xlu0 %352
    %354 = vrot.lane.b32.xlu0 %v252, 125
    %v355 = vpop.permute.xlu0 %354
    %356 = vrot.lane.b32.xlu0 %v253, 125
    %v357 = vpop.permute.xlu0 %356
    %358 = vrot.lane.b32.xlu0 %v254, 125
    %v359 = vpop.permute.xlu0 %358
    %360 = vrot.lane.b32.xlu0 %v255, 125
    %v361 = vpop.permute.xlu0 %360
    %362 = vrot.lane.b32.xlu0 %v256, 125
    %v363 = vpop.permute.xlu0 %362
    %364 = vrot.lane.b32.xlu0 %v257, 125
    %v365 = vpop.permute.xlu0 %364
    %366 = vrot.lane.b32.xlu0 %v258, 125
    %v367 = vpop.permute.xlu0 %366
    %368 = vrot.lane.b32.xlu0 %v259, 125
    %v369 = vpop.permute.xlu0 %368
    %370 = vrot.lane.b32.xlu0 %v260, 125
    %v371 = vpop.permute.xlu0 %370
    %372 = vrot.lane.b32.xlu0 %v261, 125
    %v373 = vpop.permute.xlu0 %372
    %374 = vrot.lane.b32.xlu0 %v246, 124
    %v375 = vpop.permute.xlu0 %374
    %376 = vrot.lane.b32.xlu0 %v247, 124
    %v377 = vpop.permute.xlu0 %376
    %378 = vrot.lane.b32.xlu0 %v248, 124
    %v379 = vpop.permute.xlu0 %378
    %380 = vrot.lane.b32.xlu0 %v249, 124
    %v381 = vpop.permute.xlu0 %380
    %382 = vrot.lane.b32.xlu0 %v250, 124
    %v383 = vpop.permute.xlu0 %382
    %384 = vrot.lane.b32.xlu0 %v251, 124
    %v385 = vpop.permute.xlu0 %384
    %386 = vrot.lane.b32.xlu0 %v252, 124
    %v387 = vpop.permute.xlu0 %386
    %388 = vrot.lane.b32.xlu0 %v253, 124
    %v389 = vpop.permute.xlu0 %388
    %390 = vrot.lane.b32.xlu0 %v254, 124
    %v391 = vpop.permute.xlu0 %390
    %392 = vrot.lane.b32.xlu0 %v255, 124
    %v393 = vpop.permute.xlu0 %392
    %394 = vrot.lane.b32.xlu0 %v256, 124
    %v395 = vpop.permute.xlu0 %394
    %396 = vrot.lane.b32.xlu0 %v257, 124
    %v397 = vpop.permute.xlu0 %396
    %398 = vrot.lane.b32.xlu0 %v258, 124
    %v399 = vpop.permute.xlu0 %398
    %400 = vrot.lane.b32.xlu0 %v259, 124
    %v401 = vpop.permute.xlu0 %400
    %402 = vrot.lane.b32.xlu0 %v260, 124
    %v403 = vpop.permute.xlu0 %402
    %404 = vrot.lane.b32.xlu0 %v261, 124
    %v405 = vpop.permute.xlu0 %404
    %406 = vrot.lane.b32.xlu0 %v246, 123
    %v407 = vpop.permute.xlu0 %406
    %408 = vrot.lane.b32.xlu0 %v247, 123
    %v409 = vpop.permute.xlu0 %408
    %410 = vrot.lane.b32.xlu0 %v248, 123
    %v411 = vpop.permute.xlu0 %410
    %412 = vrot.lane.b32.xlu0 %v249, 123
    %v413 = vpop.permute.xlu0 %412
    %414 = vrot.lane.b32.xlu0 %v250, 123
    %v415 = vpop.permute.xlu0 %414
    %416 = vrot.lane.b32.xlu0 %v251, 123
    %v417 = vpop.permute.xlu0 %416
    %418 = vrot.lane.b32.xlu0 %v252, 123
    %v419 = vpop.permute.xlu0 %418
    %420 = vrot.lane.b32.xlu0 %v253, 123
    %v421 = vpop.permute.xlu0 %420
    %422 = vrot.lane.b32.xlu0 %v254, 123
    %v423 = vpop.permute.xlu0 %422
    %424 = vrot.lane.b32.xlu0 %v255, 123
    %v425 = vpop.permute.xlu0 %424
    %426 = vrot.lane.b32.xlu0 %v256, 123
    %v427 = vpop.permute.xlu0 %426
    %428 = vrot.lane.b32.xlu0 %v257, 123
    %v429 = vpop.permute.xlu0 %428
    %430 = vrot.lane.b32.xlu0 %v258, 123
    %v431 = vpop.permute.xlu0 %430
    %432 = vrot.lane.b32.xlu0 %v259, 123
    %v433 = vpop.permute.xlu0 %432
    %434 = vrot.lane.b32.xlu0 %v260, 123
    %v435 = vpop.permute.xlu0 %434
    %436 = vrot.lane.b32.xlu0 %v261, 123
    %v437 = vpop.permute.xlu0 %436
    %438 = vrot.lane.b32.xlu0 %v246, 122
    %v439 = vpop.permute.xlu0 %438
    %440 = vrot.lane.b32.xlu0 %v247, 122
    %v441 = vpop.permute.xlu0 %440
    %442 = vrot.lane.b32.xlu0 %v248, 122
    %v443 = vpop.permute.xlu0 %442
    %444 = vrot.lane.b32.xlu0 %v249, 122
    %v445 = vpop.permute.xlu0 %444
    %446 = vrot.lane.b32.xlu0 %v250, 122
    %v447 = vpop.permute.xlu0 %446
    %448 = vrot.lane.b32.xlu0 %v251, 122
    %v449 = vpop.permute.xlu0 %448
    %450 = vrot.lane.b32.xlu0 %v252, 122
    %v451 = vpop.permute.xlu0 %450
    %452 = vrot.lane.b32.xlu0 %v253, 122
    %v453 = vpop.permute.xlu0 %452
    %454 = vrot.lane.b32.xlu0 %v254, 122
    %v455 = vpop.permute.xlu0 %454
    %456 = vrot.lane.b32.xlu0 %v255, 122
    %v457 = vpop.permute.xlu0 %456
    %458 = vrot.lane.b32.xlu0 %v256, 122
    %v459 = vpop.permute.xlu0 %458
    %460 = vrot.lane.b32.xlu0 %v257, 122
    %v461 = vpop.permute.xlu0 %460
    %462 = vrot.lane.b32.xlu0 %v258, 122
    %v463 = vpop.permute.xlu0 %462
    %464 = vrot.lane.b32.xlu0 %v259, 122
    %v465 = vpop.permute.xlu0 %464
    %466 = vrot.lane.b32.xlu0 %v260, 122
    %v467 = vpop.permute.xlu0 %466
    %468 = vrot.lane.b32.xlu0 %v261, 122
    %v469 = vpop.permute.xlu0 %468
    %470 = vrot.lane.b32.xlu0 %v246, 121
    %v471 = vpop.permute.xlu0 %470
    %472 = vrot.lane.b32.xlu0 %v247, 121
    %v473 = vpop.permute.xlu0 %472
    %474 = vrot.lane.b32.xlu0 %v248, 121
    %v475 = vpop.permute.xlu0 %474
    %476 = vrot.lane.b32.xlu0 %v249, 121
    %v477 = vpop.permute.xlu0 %476
    %478 = vrot.lane.b32.xlu0 %v250, 121
    %v479 = vpop.permute.xlu0 %478
    %480 = vrot.lane.b32.xlu0 %v251, 121
    %v481 = vpop.permute.xlu0 %480
    %482 = vrot.lane.b32.xlu0 %v252, 121
    %v483 = vpop.permute.xlu0 %482
    %484 = vrot.lane.b32.xlu0 %v253, 121
    %v485 = vpop.permute.xlu0 %484
    %486 = vrot.lane.b32.xlu0 %v254, 121
    %v487 = vpop.permute.xlu0 %486
    %488 = vrot.lane.b32.xlu0 %v255, 121
    %v489 = vpop.permute.xlu0 %488
    %490 = vrot.lane.b32.xlu0 %v256, 121
    %v491 = vpop.permute.xlu0 %490
    %492 = vrot.lane.b32.xlu0 %v257, 121
    %v493 = vpop.permute.xlu0 %492
    %494 = vrot.lane.b32.xlu0 %v258, 121
    %v495 = vpop.permute.xlu0 %494
    %496 = vrot.lane.b32.xlu0 %v259, 121
    %v497 = vpop.permute.xlu0 %496
    %498 = vrot.lane.b32.xlu0 %v260, 121
    %v499 = vpop.permute.xlu0 %498
    %500 = vrot.lane.b32.xlu0 %v261, 121
    %v501 = vpop.permute.xlu0 %500
    %v502 = vadd.s32 %v38, 8
    %v503 = vadd.s32 %v38, 16
    %v504 = vadd.s32 %v38, 24
    %v505 = vadd.s32 %v38, 32
    %v506 = vadd.s32 %v38, 40
    %v507 = vadd.s32 %v38, 48
    %v508 = vadd.s32 %v38, 56
    %v509 = vadd.s32 %v38, 64
    %v510 = vadd.s32 %v38, 72
    %v511 = vadd.s32 %v38, 80
    %v512 = vadd.s32 %v38, 88
    %v513 = vadd.s32 %v38, 96
    %v514 = vadd.s32 %v38, 104
    %v515 = vadd.s32 %v38, 112
    %v516 = vadd.s32 %v38, 120
    %v517 = vlaneseq
    %v518 = vand.u32 %v517, 127
    %vm519 = vcmp.lt.s32.totalorder %v38, %v518
    %vm520 = vcmp.lt.s32.totalorder %v502, %v518
    %vm521 = vcmp.lt.s32.totalorder %v503, %v518
    %vm522 = vcmp.lt.s32.totalorder %v504, %v518
    %vm523 = vcmp.lt.s32.totalorder %v505, %v518
    %vm524 = vcmp.lt.s32.totalorder %v506, %v518
    %vm525 = vcmp.lt.s32.totalorder %v507, %v518
    %vm526 = vcmp.lt.s32.totalorder %v508, %v518
    %vm527 = vcmp.lt.s32.totalorder %v509, %v518
    %vm528 = vcmp.lt.s32.totalorder %v510, %v518
    %vm529 = vcmp.lt.s32.totalorder %v511, %v518
    %vm530 = vcmp.lt.s32.totalorder %v512, %v518
    %vm531 = vcmp.lt.s32.totalorder %v513, %v518
    %vm532 = vcmp.lt.s32.totalorder %v514, %v518
    %vm533 = vcmp.lt.s32.totalorder %v515, %v518
    %vm534 = vcmp.lt.s32.totalorder %v516, %v518
    %535 = vset.pattern.permute.xlu0 0
    %536 = vperm.xlu0 %535, %v246
    %v537 = vpop.permute.xlu0 %536
    %539 = vset.pattern.permute.xlu0 0
    %540 = vperm.xlu0 %539, %v247
    %v541 = vpop.permute.xlu0 %540
    %543 = vset.pattern.permute.xlu0 0
    %544 = vperm.xlu0 %543, %v248
    %v545 = vpop.permute.xlu0 %544
    %547 = vset.pattern.permute.xlu0 0
    %548 = vperm.xlu0 %547, %v249
    %v549 = vpop.permute.xlu0 %548
    %551 = vset.pattern.permute.xlu0 0
    %552 = vperm.xlu0 %551, %v250
    %v553 = vpop.permute.xlu0 %552
    %555 = vset.pattern.permute.xlu0 0
    %556 = vperm.xlu0 %555, %v251
    %v557 = vpop.permute.xlu0 %556
    %559 = vset.pattern.permute.xlu0 0
    %560 = vperm.xlu0 %559, %v252
    %v561 = vpop.permute.xlu0 %560
    %563 = vset.pattern.permute.xlu0 0
    %564 = vperm.xlu0 %563, %v253
    %v565 = vpop.permute.xlu0 %564
    %567 = vset.pattern.permute.xlu0 0
    %568 = vperm.xlu0 %567, %v254
    %v569 = vpop.permute.xlu0 %568
    %571 = vset.pattern.permute.xlu0 0
    %572 = vperm.xlu0 %571, %v255
    %v573 = vpop.permute.xlu0 %572
    %575 = vset.pattern.permute.xlu0 0
    %576 = vperm.xlu0 %575, %v256
    %v577 = vpop.permute.xlu0 %576
    %579 = vset.pattern.permute.xlu0 0
    %580 = vperm.xlu0 %579, %v257
    %v581 = vpop.permute.xlu0 %580
    %583 = vset.pattern.permute.xlu0 0
    %584 = vperm.xlu0 %583, %v258
    %v585 = vpop.permute.xlu0 %584
    %587 = vset.pattern.permute.xlu0 0
    %588 = vperm.xlu0 %587, %v259
    %v589 = vpop.permute.xlu0 %588
    %591 = vset.pattern.permute.xlu0 0
    %592 = vperm.xlu0 %591, %v260
    %v593 = vpop.permute.xlu0 %592
    %595 = vset.pattern.permute.xlu0 0
    %596 = vperm.xlu0 %595, %v261
    %v597 = vpop.permute.xlu0 %596
    %599 = vset.pattern.permute.xlu0 0
    %600 = vperm.xlu0 %599, %v279
    %v601 = vpop.permute.xlu0 %600
    %603 = vset.pattern.permute.xlu0 0
    %604 = vperm.xlu0 %603, %v281
    %v605 = vpop.permute.xlu0 %604
    %607 = vset.pattern.permute.xlu0 0
    %608 = vperm.xlu0 %607, %v283
    %v609 = vpop.permute.xlu0 %608
    %611 = vset.pattern.permute.xlu0 0
    %612 = vperm.xlu0 %611, %v285
    %v613 = vpop.permute.xlu0 %612
    %615 = vset.pattern.permute.xlu0 0
    %616 = vperm.xlu0 %615, %v287
    %v617 = vpop.permute.xlu0 %616
    %619 = vset.pattern.permute.xlu0 0
    %620 = vperm.xlu0 %619, %v289
    %v621 = vpop.permute.xlu0 %620
    %623 = vset.pattern.permute.xlu0 0
    %624 = vperm.xlu0 %623, %v291
    %v625 = vpop.permute.xlu0 %624
    %627 = vset.pattern.permute.xlu0 0
    %628 = vperm.xlu0 %627, %v293
    %v629 = vpop.permute.xlu0 %628
    %631 = vset.pattern.permute.xlu0 0
    %632 = vperm.xlu0 %631, %v295
    %v633 = vpop.permute.xlu0 %632
    %635 = vset.pattern.permute.xlu0 0
    %636 = vperm.xlu0 %635, %v297
    %v637 = vpop.permute.xlu0 %636
    %639 = vset.pattern.permute.xlu0 0
    %640 = vperm.xlu0 %639, %v299
    %v641 = vpop.permute.xlu0 %640
    %643 = vset.pattern.permute.xlu0 0
    %644 = vperm.xlu0 %643, %v301
    %v645 = vpop.permute.xlu0 %644
    %647 = vset.pattern.permute.xlu0 0
    %648 = vperm.xlu0 %647, %v303
    %v649 = vpop.permute.xlu0 %648
    %651 = vset.pattern.permute.xlu0 0
    %652 = vperm.xlu0 %651, %v305
    %v653 = vpop.permute.xlu0 %652
    %655 = vset.pattern.permute.xlu0 0
    %656 = vperm.xlu0 %655, %v307
    %v657 = vpop.permute.xlu0 %656
    %659 = vset.pattern.permute.xlu0 0
    %660 = vperm.xlu0 %659, %v309
    %v661 = vpop.permute.xlu0 %660
    %663 = vset.pattern.permute.xlu0 0
    %664 = vperm.xlu0 %663, %v311
    %v665 = vpop.permute.xlu0 %664
    %667 = vset.pattern.permute.xlu0 0
    %668 = vperm.xlu0 %667, %v313
    %v669 = vpop.permute.xlu0 %668
    %671 = vset.pattern.permute.xlu0 0
    %672 = vperm.xlu0 %671, %v315
    %v673 = vpop.permute.xlu0 %672
    %675 = vset.pattern.permute.xlu0 0
    %676 = vperm.xlu0 %675, %v317
    %v677 = vpop.permute.xlu0 %676
    %679 = vset.pattern.permute.xlu0 0
    %680 = vperm.xlu0 %679, %v319
    %v681 = vpop.permute.xlu0 %680
    %683 = vset.pattern.permute.xlu0 0
    %684 = vperm.xlu0 %683, %v321
    %v685 = vpop.permute.xlu0 %684
    %687 = vset.pattern.permute.xlu0 0
    %688 = vperm.xlu0 %687, %v323
    %v689 = vpop.permute.xlu0 %688
    %691 = vset.pattern.permute.xlu0 0
    %692 = vperm.xlu0 %691, %v325
    %v693 = vpop.permute.xlu0 %692
    %695 = vset.pattern.permute.xlu0 0
    %696 = vperm.xlu0 %695, %v327
    %v697 = vpop.permute.xlu0 %696
    %699 = vset.pattern.permute.xlu0 0
    %700 = vperm.xlu0 %699, %v329
    %v701 = vpop.permute.xlu0 %700
    %703 = vset.pattern.permute.xlu0 0
    %704 = vperm.xlu0 %703, %v331
    %v705 = vpop.permute.xlu0 %704
    %707 = vset.pattern.permute.xlu0 0
    %708 = vperm.xlu0 %707, %v333
    %v709 = vpop.permute.xlu0 %708
    %711 = vset.pattern.permute.xlu0 0
    %712 = vperm.xlu0 %711, %v335
    %v713 = vpop.permute.xlu0 %712
    %715 = vset.pattern.permute.xlu0 0
    %716 = vperm.xlu0 %715, %v337
    %v717 = vpop.permute.xlu0 %716
    %719 = vset.pattern.permute.xlu0 0
    %720 = vperm.xlu0 %719, %v339
    %v721 = vpop.permute.xlu0 %720
    %723 = vset.pattern.permute.xlu0 0
    %724 = vperm.xlu0 %723, %v341
    %v725 = vpop.permute.xlu0 %724
    %727 = vset.pattern.permute.xlu0 0
    %728 = vperm.xlu0 %727, %v343
    %v729 = vpop.permute.xlu0 %728
    %731 = vset.pattern.permute.xlu0 0
    %732 = vperm.xlu0 %731, %v345
    %v733 = vpop.permute.xlu0 %732
    %735 = vset.pattern.permute.xlu0 0
    %736 = vperm.xlu0 %735, %v347
    %v737 = vpop.permute.xlu0 %736
    %739 = vset.pattern.permute.xlu0 0
    %740 = vperm.xlu0 %739, %v349
    %v741 = vpop.permute.xlu0 %740
    %743 = vset.pattern.permute.xlu0 0
    %744 = vperm.xlu0 %743, %v351
    %v745 = vpop.permute.xlu0 %744
    %747 = vset.pattern.permute.xlu0 0
    %748 = vperm.xlu0 %747, %v353
    %v749 = vpop.permute.xlu0 %748
    %751 = vset.pattern.permute.xlu0 0
    %752 = vperm.xlu0 %751, %v355
    %v753 = vpop.permute.xlu0 %752
    %755 = vset.pattern.permute.xlu0 0
    %756 = vperm.xlu0 %755, %v357
    %v757 = vpop.permute.xlu0 %756
    %759 = vset.pattern.permute.xlu0 0
    %760 = vperm.xlu0 %759, %v359
    %v761 = vpop.permute.xlu0 %760
    %763 = vset.pattern.permute.xlu0 0
    %764 = vperm.xlu0 %763, %v361
    %v765 = vpop.permute.xlu0 %764
    %767 = vset.pattern.permute.xlu0 0
    %768 = vperm.xlu0 %767, %v363
    %v769 = vpop.permute.xlu0 %768
    %771 = vset.pattern.permute.xlu0 0
    %772 = vperm.xlu0 %771, %v365
    %v773 = vpop.permute.xlu0 %772
    %775 = vset.pattern.permute.xlu0 0
    %776 = vperm.xlu0 %775, %v367
    %v777 = vpop.permute.xlu0 %776
    %779 = vset.pattern.permute.xlu0 0
    %780 = vperm.xlu0 %779, %v369
    %v781 = vpop.permute.xlu0 %780
    %783 = vset.pattern.permute.xlu0 0
    %784 = vperm.xlu0 %783, %v371
    %v785 = vpop.permute.xlu0 %784
    %787 = vset.pattern.permute.xlu0 0
    %788 = vperm.xlu0 %787, %v373
    %v789 = vpop.permute.xlu0 %788
    %791 = vset.pattern.permute.xlu0 0
    %792 = vperm.xlu0 %791, %v375
    %v793 = vpop.permute.xlu0 %792
    %795 = vset.pattern.permute.xlu0 0
    %796 = vperm.xlu0 %795, %v377
    %v797 = vpop.permute.xlu0 %796
    %799 = vset.pattern.permute.xlu0 0
    %800 = vperm.xlu0 %799, %v379
    %v801 = vpop.permute.xlu0 %800
    %803 = vset.pattern.permute.xlu0 0
    %804 = vperm.xlu0 %803, %v381
    %v805 = vpop.permute.xlu0 %804
    %807 = vset.pattern.permute.xlu0 0
    %808 = vperm.xlu0 %807, %v383
    %v809 = vpop.permute.xlu0 %808
    %811 = vset.pattern.permute.xlu0 0
    %812 = vperm.xlu0 %811, %v385
    %v813 = vpop.permute.xlu0 %812
    %815 = vset.pattern.permute.xlu0 0
    %816 = vperm.xlu0 %815, %v387
    %v817 = vpop.permute.xlu0 %816
    %819 = vset.pattern.permute.xlu0 0
    %820 = vperm.xlu0 %819, %v389
    %v821 = vpop.permute.xlu0 %820
    %823 = vset.pattern.permute.xlu0 0
    %824 = vperm.xlu0 %823, %v391
    %v825 = vpop.permute.xlu0 %824
    %827 = vset.pattern.permute.xlu0 0
    %828 = vperm.xlu0 %827, %v393
    %v829 = vpop.permute.xlu0 %828
    %831 = vset.pattern.permute.xlu0 0
    %832 = vperm.xlu0 %831, %v395
    %v833 = vpop.permute.xlu0 %832
    %835 = vset.pattern.permute.xlu0 0
    %836 = vperm.xlu0 %835, %v397
    %v837 = vpop.permute.xlu0 %836
    %839 = vset.pattern.permute.xlu0 0
    %840 = vperm.xlu0 %839, %v399
    %v841 = vpop.permute.xlu0 %840
    %843 = vset.pattern.permute.xlu0 0
    %844 = vperm.xlu0 %843, %v401
    %v845 = vpop.permute.xlu0 %844
    %847 = vset.pattern.permute.xlu0 0
    %848 = vperm.xlu0 %847, %v403
    %v849 = vpop.permute.xlu0 %848
    %851 = vset.pattern.permute.xlu0 0
    %852 = vperm.xlu0 %851, %v405
    %v853 = vpop.permute.xlu0 %852
    %855 = vset.pattern.permute.xlu0 0
    %856 = vperm.xlu0 %855, %v407
    %v857 = vpop.permute.xlu0 %856
    %859 = vset.pattern.permute.xlu0 0
    %860 = vperm.xlu0 %859, %v409
    %v861 = vpop.permute.xlu0 %860
    %863 = vset.pattern.permute.xlu0 0
    %864 = vperm.xlu0 %863, %v411
    %v865 = vpop.permute.xlu0 %864
    %867 = vset.pattern.permute.xlu0 0
    %868 = vperm.xlu0 %867, %v413
    %v869 = vpop.permute.xlu0 %868
    %871 = vset.pattern.permute.xlu0 0
    %872 = vperm.xlu0 %871, %v415
    %v873 = vpop.permute.xlu0 %872
    %875 = vset.pattern.permute.xlu0 0
    %876 = vperm.xlu0 %875, %v417
    %v877 = vpop.permute.xlu0 %876
    %879 = vset.pattern.permute.xlu0 0
    %880 = vperm.xlu0 %879, %v419
    %v881 = vpop.permute.xlu0 %880
    %883 = vset.pattern.permute.xlu0 0
    %884 = vperm.xlu0 %883, %v421
    %v885 = vpop.permute.xlu0 %884
    %887 = vset.pattern.permute.xlu0 0
    %888 = vperm.xlu0 %887, %v423
    %v889 = vpop.permute.xlu0 %888
    %891 = vset.pattern.permute.xlu0 0
    %892 = vperm.xlu0 %891, %v425
    %v893 = vpop.permute.xlu0 %892
    %895 = vset.pattern.permute.xlu0 0
    %896 = vperm.xlu0 %895, %v427
    %v897 = vpop.permute.xlu0 %896
    %899 = vset.pattern.permute.xlu0 0
    %900 = vperm.xlu0 %899, %v429
    %v901 = vpop.permute.xlu0 %900
    %903 = vset.pattern.permute.xlu0 0
    %904 = vperm.xlu0 %903, %v431
    %v905 = vpop.permute.xlu0 %904
    %907 = vset.pattern.permute.xlu0 0
    %908 = vperm.xlu0 %907, %v433
    %v909 = vpop.permute.xlu0 %908
    %911 = vset.pattern.permute.xlu0 0
    %912 = vperm.xlu0 %911, %v435
    %v913 = vpop.permute.xlu0 %912
    %915 = vset.pattern.permute.xlu0 0
    %916 = vperm.xlu0 %915, %v437
    %v917 = vpop.permute.xlu0 %916
    %919 = vset.pattern.permute.xlu0 0
    %920 = vperm.xlu0 %919, %v439
    %v921 = vpop.permute.xlu0 %920
    %923 = vset.pattern.permute.xlu0 0
    %924 = vperm.xlu0 %923, %v441
    %v925 = vpop.permute.xlu0 %924
    %927 = vset.pattern.permute.xlu0 0
    %928 = vperm.xlu0 %927, %v443
    %v929 = vpop.permute.xlu0 %928
    %931 = vset.pattern.permute.xlu0 0
    %932 = vperm.xlu0 %931, %v445
    %v933 = vpop.permute.xlu0 %932
    %935 = vset.pattern.permute.xlu0 0
    %936 = vperm.xlu0 %935, %v447
    %v937 = vpop.permute.xlu0 %936
    %939 = vset.pattern.permute.xlu0 0
    %940 = vperm.xlu0 %939, %v449
    %v941 = vpop.permute.xlu0 %940
    %943 = vset.pattern.permute.xlu0 0
    %944 = vperm.xlu0 %943, %v451
    %v945 = vpop.permute.xlu0 %944
    %947 = vset.pattern.permute.xlu0 0
    %948 = vperm.xlu0 %947, %v453
    %v949 = vpop.permute.xlu0 %948
    %951 = vset.pattern.permute.xlu0 0
    %952 = vperm.xlu0 %951, %v455
    %v953 = vpop.permute.xlu0 %952
    %955 = vset.pattern.permute.xlu0 0
    %956 = vperm.xlu0 %955, %v457
    %v957 = vpop.permute.xlu0 %956
    %959 = vset.pattern.permute.xlu0 0
    %960 = vperm.xlu0 %959, %v459
    %v961 = vpop.permute.xlu0 %960
    %963 = vset.pattern.permute.xlu0 0
    %964 = vperm.xlu0 %963, %v461
    %v965 = vpop.permute.xlu0 %964
    %967 = vset.pattern.permute.xlu0 0
    %968 = vperm.xlu0 %967, %v463
    %v969 = vpop.permute.xlu0 %968
    %971 = vset.pattern.permute.xlu0 0
    %972 = vperm.xlu0 %971, %v465
    %v973 = vpop.permute.xlu0 %972
    %975 = vset.pattern.permute.xlu0 0
    %976 = vperm.xlu0 %975, %v467
    %v977 = vpop.permute.xlu0 %976
    %979 = vset.pattern.permute.xlu0 0
    %980 = vperm.xlu0 %979, %v469
    %v981 = vpop.permute.xlu0 %980
    %983 = vset.pattern.permute.xlu0 0
    %984 = vperm.xlu0 %983, %v471
    %v985 = vpop.permute.xlu0 %984
    %987 = vset.pattern.permute.xlu0 0
    %988 = vperm.xlu0 %987, %v473
    %v989 = vpop.permute.xlu0 %988
    %991 = vset.pattern.permute.xlu0 0
    %992 = vperm.xlu0 %991, %v475
    %v993 = vpop.permute.xlu0 %992
    %995 = vset.pattern.permute.xlu0 0
    %996 = vperm.xlu0 %995, %v477
    %v997 = vpop.permute.xlu0 %996
    %999 = vset.pattern.permute.xlu0 0
    %1000 = vperm.xlu0 %999, %v479
    %v1001 = vpop.permute.xlu0 %1000
    %1003 = vset.pattern.permute.xlu0 0
    %1004 = vperm.xlu0 %1003, %v481
    %v1005 = vpop.permute.xlu0 %1004
    %1007 = vset.pattern.permute.xlu0 0
    %1008 = vperm.xlu0 %1007, %v483
    %v1009 = vpop.permute.xlu0 %1008
    %1011 = vset.pattern.permute.xlu0 0
    %1012 = vperm.xlu0 %1011, %v485
    %v1013 = vpop.permute.xlu0 %1012
    %1015 = vset.pattern.permute.xlu0 0
    %1016 = vperm.xlu0 %1015, %v487
    %v1017 = vpop.permute.xlu0 %1016
    %1019 = vset.pattern.permute.xlu0 0
    %1020 = vperm.xlu0 %1019, %v489
    %v1021 = vpop.permute.xlu0 %1020
    %1023 = vset.pattern.permute.xlu0 0
    %1024 = vperm.xlu0 %1023, %v491
    %v1025 = vpop.permute.xlu0 %1024
    %1027 = vset.pattern.permute.xlu0 0
    %1028 = vperm.xlu0 %1027, %v493
    %v1029 = vpop.permute.xlu0 %1028
    %1031 = vset.pattern.permute.xlu0 0
    %1032 = vperm.xlu0 %1031, %v495
    %v1033 = vpop.permute.xlu0 %1032
    %1035 = vset.pattern.permute.xlu0 0
    %1036 = vperm.xlu0 %1035, %v497
    %v1037 = vpop.permute.xlu0 %1036
    %1039 = vset.pattern.permute.xlu0 0
    %1040 = vperm.xlu0 %1039, %v499
    %v1041 = vpop.permute.xlu0 %1040
    %1043 = vset.pattern.permute.xlu0 0
    %1044 = vperm.xlu0 %1043, %v501
    %v1045 = vpop.permute.xlu0 %1044
    %v1047 = vlaneseq
    %v1048 = vshrl.u32 %v1047, 7
    %v1049 = vsub.s32 0, %v1048
    %v1050 = vrot.slane %v138, %v1049
    %v1051 = vlaneseq
    %v1052 = vshrl.u32 %v1051, 7
    %v1053 = vsub.s32 0, %v1052
    %v1054 = vrot.slane %v152, %v1053
    %v1055 = vlaneseq
    %v1056 = vshrl.u32 %v1055, 7
    %v1057 = vsub.s32 0, %v1056
    %v1058 = vrot.slane %v160, %v1057
    %v1059 = vlaneseq
    %v1060 = vshrl.u32 %v1059, 7
    %v1061 = vsub.s32 0, %v1060
    %v1062 = vrot.slane %v162, %v1061
    %v1063 = vlaneseq
    %v1064 = vshrl.u32 %v1063, 7
    %v1065 = vsub.s32 0, %v1064
    %v1066 = vrot.slane %v145, %v1065
    %v1067 = vlaneseq
    %v1068 = vshrl.u32 %v1067, 7
    %v1069 = vsub.s32 0, %v1068
    %v1070 = vrot.slane %v159, %v1069
    %v1071 = vlaneseq
    %v1072 = vshrl.u32 %v1071, 7
    %v1073 = vsub.s32 0, %v1072
    %v1074 = vrot.slane %v161, %v1073
    %v1075 = vlaneseq
    %v1076 = vshrl.u32 %v1075, 7
    %v1077 = vsub.s32 0, %v1076
    %v1078 = vrot.slane %v163, %v1077
    %vm1087 = vcmp.gt.f32.partialorder %v537, %v1050
    %vm1088 = vcmp.gt.f32.partialorder %v541, %v1050
    %vm1089 = vcmp.gt.f32.partialorder %v545, %v1050
    %vm1090 = vcmp.gt.f32.partialorder %v549, %v1050
    %vm1091 = vcmp.gt.f32.partialorder %v553, %v1050
    %vm1092 = vcmp.gt.f32.partialorder %v557, %v1050
    %vm1093 = vcmp.gt.f32.partialorder %v561, %v1050
    %vm1094 = vcmp.gt.f32.partialorder %v565, %v1050
    %vm1095 = vcmp.gt.f32.partialorder %v569, %v1050
    %vm1096 = vcmp.gt.f32.partialorder %v573, %v1050
    %vm1097 = vcmp.gt.f32.partialorder %v577, %v1050
    %vm1098 = vcmp.gt.f32.partialorder %v581, %v1050
    %vm1099 = vcmp.gt.f32.partialorder %v585, %v1050
    %vm1100 = vcmp.gt.f32.partialorder %v589, %v1050
    %vm1101 = vcmp.gt.f32.partialorder %v593, %v1050
    %vm1102 = vcmp.gt.f32.partialorder %v597, %v1050
    %vm1103 = vcmp.gt.f32.partialorder %v601, %v1054
    %vm1104 = vcmp.gt.f32.partialorder %v605, %v1054
    %vm1105 = vcmp.gt.f32.partialorder %v609, %v1054
    %vm1106 = vcmp.gt.f32.partialorder %v613, %v1054
    %vm1107 = vcmp.gt.f32.partialorder %v617, %v1054
    %vm1108 = vcmp.gt.f32.partialorder %v621, %v1054
    %vm1109 = vcmp.gt.f32.partialorder %v625, %v1054
    %vm1110 = vcmp.gt.f32.partialorder %v629, %v1054
    %vm1111 = vcmp.gt.f32.partialorder %v633, %v1054
    %vm1112 = vcmp.gt.f32.partialorder %v637, %v1054
    %vm1113 = vcmp.gt.f32.partialorder %v641, %v1054
    %vm1114 = vcmp.gt.f32.partialorder %v645, %v1054
    %vm1115 = vcmp.gt.f32.partialorder %v649, %v1054
    %vm1116 = vcmp.gt.f32.partialorder %v653, %v1054
    %vm1117 = vcmp.gt.f32.partialorder %v657, %v1054
    %vm1118 = vcmp.gt.f32.partialorder %v661, %v1054
    %vm1119 = vcmp.gt.f32.partialorder %v665, %v1058
    %vm1120 = vcmp.gt.f32.partialorder %v669, %v1058
    %vm1121 = vcmp.gt.f32.partialorder %v673, %v1058
    %vm1122 = vcmp.gt.f32.partialorder %v677, %v1058
    %vm1123 = vcmp.gt.f32.partialorder %v681, %v1058
    %vm1124 = vcmp.gt.f32.partialorder %v685, %v1058
    %vm1125 = vcmp.gt.f32.partialorder %v689, %v1058
    %vm1126 = vcmp.gt.f32.partialorder %v693, %v1058
    %vm1127 = vcmp.gt.f32.partialorder %v697, %v1058
    %vm1128 = vcmp.gt.f32.partialorder %v701, %v1058
    %vm1129 = vcmp.gt.f32.partialorder %v705, %v1058
    %vm1130 = vcmp.gt.f32.partialorder %v709, %v1058
    %vm1131 = vcmp.gt.f32.partialorder %v713, %v1058
    %vm1132 = vcmp.gt.f32.partialorder %v717, %v1058
    %vm1133 = vcmp.gt.f32.partialorder %v721, %v1058
    %vm1134 = vcmp.gt.f32.partialorder %v725, %v1058
    %vm1135 = vcmp.gt.f32.partialorder %v729, %v1062
    %vm1136 = vcmp.gt.f32.partialorder %v733, %v1062
    %vm1137 = vcmp.gt.f32.partialorder %v737, %v1062
    %vm1138 = vcmp.gt.f32.partialorder %v741, %v1062
    %vm1139 = vcmp.gt.f32.partialorder %v745, %v1062
    %vm1140 = vcmp.gt.f32.partialorder %v749, %v1062
    %vm1141 = vcmp.gt.f32.partialorder %v753, %v1062
    %vm1142 = vcmp.gt.f32.partialorder %v757, %v1062
    %vm1143 = vcmp.gt.f32.partialorder %v761, %v1062
    %vm1144 = vcmp.gt.f32.partialorder %v765, %v1062
    %vm1145 = vcmp.gt.f32.partialorder %v769, %v1062
    %vm1146 = vcmp.gt.f32.partialorder %v773, %v1062
    %vm1147 = vcmp.gt.f32.partialorder %v777, %v1062
    %vm1148 = vcmp.gt.f32.partialorder %v781, %v1062
    %vm1149 = vcmp.gt.f32.partialorder %v785, %v1062
    %vm1150 = vcmp.gt.f32.partialorder %v789, %v1062
    %vm1151 = vcmp.gt.f32.partialorder %v793, %v1066
    %vm1152 = vcmp.gt.f32.partialorder %v797, %v1066
    %vm1153 = vcmp.gt.f32.partialorder %v801, %v1066
    %vm1154 = vcmp.gt.f32.partialorder %v805, %v1066
    %vm1155 = vcmp.gt.f32.partialorder %v809, %v1066
    %vm1156 = vcmp.gt.f32.partialorder %v813, %v1066
    %vm1157 = vcmp.gt.f32.partialorder %v817, %v1066
    %vm1158 = vcmp.gt.f32.partialorder %v821, %v1066
    %vm1159 = vcmp.gt.f32.partialorder %v825, %v1066
    %vm1160 = vcmp.gt.f32.partialorder %v829, %v1066
    %vm1161 = vcmp.gt.f32.partialorder %v833, %v1066
    %vm1162 = vcmp.gt.f32.partialorder %v837, %v1066
    %vm1163 = vcmp.gt.f32.partialorder %v841, %v1066
    %vm1164 = vcmp.gt.f32.partialorder %v845, %v1066
    %vm1165 = vcmp.gt.f32.partialorder %v849, %v1066
    %vm1166 = vcmp.gt.f32.partialorder %v853, %v1066
    %vm1167 = vcmp.gt.f32.partialorder %v857, %v1070
    %vm1168 = vcmp.gt.f32.partialorder %v861, %v1070
    %vm1169 = vcmp.gt.f32.partialorder %v865, %v1070
    %vm1170 = vcmp.gt.f32.partialorder %v869, %v1070
    %vm1171 = vcmp.gt.f32.partialorder %v873, %v1070
    %vm1172 = vcmp.gt.f32.partialorder %v877, %v1070
    %vm1173 = vcmp.gt.f32.partialorder %v881, %v1070
    %vm1174 = vcmp.gt.f32.partialorder %v885, %v1070
    %vm1175 = vcmp.gt.f32.partialorder %v889, %v1070
    %vm1176 = vcmp.gt.f32.partialorder %v893, %v1070
    %vm1177 = vcmp.gt.f32.partialorder %v897, %v1070
    %vm1178 = vcmp.gt.f32.partialorder %v901, %v1070
    %vm1179 = vcmp.gt.f32.partialorder %v905, %v1070
    %vm1180 = vcmp.gt.f32.partialorder %v909, %v1070
    %vm1181 = vcmp.gt.f32.partialorder %v913, %v1070
    %vm1182 = vcmp.gt.f32.partialorder %v917, %v1070
    %vm1183 = vcmp.gt.f32.partialorder %v921, %v1074
    %vm1184 = vcmp.gt.f32.partialorder %v925, %v1074
    %vm1185 = vcmp.gt.f32.partialorder %v929, %v1074
    %vm1186 = vcmp.gt.f32.partialorder %v933, %v1074
    %vm1187 = vcmp.gt.f32.partialorder %v937, %v1074
    %vm1188 = vcmp.gt.f32.partialorder %v941, %v1074
    %vm1189 = vcmp.gt.f32.partialorder %v945, %v1074
    %vm1190 = vcmp.gt.f32.partialorder %v949, %v1074
    %vm1191 = vcmp.gt.f32.partialorder %v953, %v1074
    %vm1192 = vcmp.gt.f32.partialorder %v957, %v1074
    %vm1193 = vcmp.gt.f32.partialorder %v961, %v1074
    %vm1194 = vcmp.gt.f32.partialorder %v965, %v1074
    %vm1195 = vcmp.gt.f32.partialorder %v969, %v1074
    %vm1196 = vcmp.gt.f32.partialorder %v973, %v1074
    %vm1197 = vcmp.gt.f32.partialorder %v977, %v1074
    %vm1198 = vcmp.gt.f32.partialorder %v981, %v1074
    %vm1199 = vcmp.gt.f32.partialorder %v985, %v1078
    %vm1200 = vcmp.gt.f32.partialorder %v989, %v1078
    %vm1201 = vcmp.gt.f32.partialorder %v993, %v1078
    %vm1202 = vcmp.gt.f32.partialorder %v997, %v1078
    %vm1203 = vcmp.gt.f32.partialorder %v1001, %v1078
    %vm1204 = vcmp.gt.f32.partialorder %v1005, %v1078
    %vm1205 = vcmp.gt.f32.partialorder %v1009, %v1078
    %vm1206 = vcmp.gt.f32.partialorder %v1013, %v1078
    %vm1207 = vcmp.gt.f32.partialorder %v1017, %v1078
    %vm1208 = vcmp.gt.f32.partialorder %v1021, %v1078
    %vm1209 = vcmp.gt.f32.partialorder %v1025, %v1078
    %vm1210 = vcmp.gt.f32.partialorder %v1029, %v1078
    %vm1211 = vcmp.gt.f32.partialorder %v1033, %v1078
    %vm1212 = vcmp.gt.f32.partialorder %v1037, %v1078
    %vm1213 = vcmp.gt.f32.partialorder %v1041, %v1078
    %vm1214 = vcmp.gt.f32.partialorder %v1045, %v1078
    %vm1215 = vcmp.eq.f32.partialorder %v537, %v1050
    %vm1216 = vcmp.eq.f32.partialorder %v541, %v1050
    %vm1217 = vcmp.eq.f32.partialorder %v545, %v1050
    %vm1218 = vcmp.eq.f32.partialorder %v549, %v1050
    %vm1219 = vcmp.eq.f32.partialorder %v553, %v1050
    %vm1220 = vcmp.eq.f32.partialorder %v557, %v1050
    %vm1221 = vcmp.eq.f32.partialorder %v561, %v1050
    %vm1222 = vcmp.eq.f32.partialorder %v565, %v1050
    %vm1223 = vcmp.eq.f32.partialorder %v569, %v1050
    %vm1224 = vcmp.eq.f32.partialorder %v573, %v1050
    %vm1225 = vcmp.eq.f32.partialorder %v577, %v1050
    %vm1226 = vcmp.eq.f32.partialorder %v581, %v1050
    %vm1227 = vcmp.eq.f32.partialorder %v585, %v1050
    %vm1228 = vcmp.eq.f32.partialorder %v589, %v1050
    %vm1229 = vcmp.eq.f32.partialorder %v593, %v1050
    %vm1230 = vcmp.eq.f32.partialorder %v597, %v1050
    %vm1231 = vcmp.eq.f32.partialorder %v601, %v1054
    %vm1232 = vcmp.eq.f32.partialorder %v605, %v1054
    %vm1233 = vcmp.eq.f32.partialorder %v609, %v1054
    %vm1234 = vcmp.eq.f32.partialorder %v613, %v1054
    %vm1235 = vcmp.eq.f32.partialorder %v617, %v1054
    %vm1236 = vcmp.eq.f32.partialorder %v621, %v1054
    %vm1237 = vcmp.eq.f32.partialorder %v625, %v1054
    %vm1238 = vcmp.eq.f32.partialorder %v629, %v1054
    %vm1239 = vcmp.eq.f32.partialorder %v633, %v1054
    %vm1240 = vcmp.eq.f32.partialorder %v637, %v1054
    %vm1241 = vcmp.eq.f32.partialorder %v641, %v1054
    %vm1242 = vcmp.eq.f32.partialorder %v645, %v1054
    %vm1243 = vcmp.eq.f32.partialorder %v649, %v1054
    %vm1244 = vcmp.eq.f32.partialorder %v653, %v1054
    %vm1245 = vcmp.eq.f32.partialorder %v657, %v1054
    %vm1246 = vcmp.eq.f32.partialorder %v661, %v1054
    %vm1247 = vcmp.eq.f32.partialorder %v665, %v1058
    %vm1248 = vcmp.eq.f32.partialorder %v669, %v1058
    %vm1249 = vcmp.eq.f32.partialorder %v673, %v1058
    %vm1250 = vcmp.eq.f32.partialorder %v677, %v1058
    %vm1251 = vcmp.eq.f32.partialorder %v681, %v1058
    %vm1252 = vcmp.eq.f32.partialorder %v685, %v1058
    %vm1253 = vcmp.eq.f32.partialorder %v689, %v1058
    %vm1254 = vcmp.eq.f32.partialorder %v693, %v1058
    %vm1255 = vcmp.eq.f32.partialorder %v697, %v1058
    %vm1256 = vcmp.eq.f32.partialorder %v701, %v1058
    %vm1257 = vcmp.eq.f32.partialorder %v705, %v1058
    %vm1258 = vcmp.eq.f32.partialorder %v709, %v1058
    %vm1259 = vcmp.eq.f32.partialorder %v713, %v1058
    %vm1260 = vcmp.eq.f32.partialorder %v717, %v1058
    %vm1261 = vcmp.eq.f32.partialorder %v721, %v1058
    %vm1262 = vcmp.eq.f32.partialorder %v725, %v1058
    %vm1263 = vcmp.eq.f32.partialorder %v729, %v1062
    %vm1264 = vcmp.eq.f32.partialorder %v733, %v1062
    %vm1265 = vcmp.eq.f32.partialorder %v737, %v1062
    %vm1266 = vcmp.eq.f32.partialorder %v741, %v1062
    %vm1267 = vcmp.eq.f32.partialorder %v745, %v1062
    %vm1268 = vcmp.eq.f32.partialorder %v749, %v1062
    %vm1269 = vcmp.eq.f32.partialorder %v753, %v1062
    %vm1270 = vcmp.eq.f32.partialorder %v757, %v1062
    %vm1271 = vcmp.eq.f32.partialorder %v761, %v1062
    %vm1272 = vcmp.eq.f32.partialorder %v765, %v1062
    %vm1273 = vcmp.eq.f32.partialorder %v769, %v1062
    %vm1274 = vcmp.eq.f32.partialorder %v773, %v1062
    %vm1275 = vcmp.eq.f32.partialorder %v777, %v1062
    %vm1276 = vcmp.eq.f32.partialorder %v781, %v1062
    %vm1277 = vcmp.eq.f32.partialorder %v785, %v1062
    %vm1278 = vcmp.eq.f32.partialorder %v789, %v1062
    %vm1279 = vcmp.eq.f32.partialorder %v793, %v1066
    %vm1280 = vcmp.eq.f32.partialorder %v797, %v1066
    %vm1281 = vcmp.eq.f32.partialorder %v801, %v1066
    %vm1282 = vcmp.eq.f32.partialorder %v805, %v1066
    %vm1283 = vcmp.eq.f32.partialorder %v809, %v1066
    %vm1284 = vcmp.eq.f32.partialorder %v813, %v1066
    %vm1285 = vcmp.eq.f32.partialorder %v817, %v1066
    %vm1286 = vcmp.eq.f32.partialorder %v821, %v1066
    %vm1287 = vcmp.eq.f32.partialorder %v825, %v1066
    %vm1288 = vcmp.eq.f32.partialorder %v829, %v1066
    %vm1289 = vcmp.eq.f32.partialorder %v833, %v1066
    %vm1290 = vcmp.eq.f32.partialorder %v837, %v1066
    %vm1291 = vcmp.eq.f32.partialorder %v841, %v1066
    %vm1292 = vcmp.eq.f32.partialorder %v845, %v1066
    %vm1293 = vcmp.eq.f32.partialorder %v849, %v1066
    %vm1294 = vcmp.eq.f32.partialorder %v853, %v1066
    %vm1295 = vcmp.eq.f32.partialorder %v857, %v1070
    %vm1296 = vcmp.eq.f32.partialorder %v861, %v1070
    %vm1297 = vcmp.eq.f32.partialorder %v865, %v1070
    %vm1298 = vcmp.eq.f32.partialorder %v869, %v1070
    %vm1299 = vcmp.eq.f32.partialorder %v873, %v1070
    %vm1300 = vcmp.eq.f32.partialorder %v877, %v1070
    %vm1301 = vcmp.eq.f32.partialorder %v881, %v1070
    %vm1302 = vcmp.eq.f32.partialorder %v885, %v1070
    %vm1303 = vcmp.eq.f32.partialorder %v889, %v1070
    %vm1304 = vcmp.eq.f32.partialorder %v893, %v1070
    %vm1305 = vcmp.eq.f32.partialorder %v897, %v1070
    %vm1306 = vcmp.eq.f32.partialorder %v901, %v1070
    %vm1307 = vcmp.eq.f32.partialorder %v905, %v1070
    %vm1308 = vcmp.eq.f32.partialorder %v909, %v1070
    %vm1309 = vcmp.eq.f32.partialorder %v913, %v1070
    %vm1310 = vcmp.eq.f32.partialorder %v917, %v1070
    %vm1311 = vcmp.eq.f32.partialorder %v921, %v1074
    %vm1312 = vcmp.eq.f32.partialorder %v925, %v1074
    %vm1313 = vcmp.eq.f32.partialorder %v929, %v1074
    %vm1314 = vcmp.eq.f32.partialorder %v933, %v1074
    %vm1315 = vcmp.eq.f32.partialorder %v937, %v1074
    %vm1316 = vcmp.eq.f32.partialorder %v941, %v1074
    %vm1317 = vcmp.eq.f32.partialorder %v945, %v1074
    %vm1318 = vcmp.eq.f32.partialorder %v949, %v1074
    %vm1319 = vcmp.eq.f32.partialorder %v953, %v1074
    %vm1320 = vcmp.eq.f32.partialorder %v957, %v1074
    %vm1321 = vcmp.eq.f32.partialorder %v961, %v1074
    %vm1322 = vcmp.eq.f32.partialorder %v965, %v1074
    %vm1323 = vcmp.eq.f32.partialorder %v969, %v1074
    %vm1324 = vcmp.eq.f32.partialorder %v973, %v1074
    %vm1325 = vcmp.eq.f32.partialorder %v977, %v1074
    %vm1326 = vcmp.eq.f32.partialorder %v981, %v1074
    %vm1327 = vcmp.eq.f32.partialorder %v985, %v1078
    %vm1328 = vcmp.eq.f32.partialorder %v989, %v1078
    %vm1329 = vcmp.eq.f32.partialorder %v993, %v1078
    %vm1330 = vcmp.eq.f32.partialorder %v997, %v1078
    %vm1331 = vcmp.eq.f32.partialorder %v1001, %v1078
    %vm1332 = vcmp.eq.f32.partialorder %v1005, %v1078
    %vm1333 = vcmp.eq.f32.partialorder %v1009, %v1078
    %vm1334 = vcmp.eq.f32.partialorder %v1013, %v1078
    %vm1335 = vcmp.eq.f32.partialorder %v1017, %v1078
    %vm1336 = vcmp.eq.f32.partialorder %v1021, %v1078
    %vm1337 = vcmp.eq.f32.partialorder %v1025, %v1078
    %vm1338 = vcmp.eq.f32.partialorder %v1029, %v1078
    %vm1339 = vcmp.eq.f32.partialorder %v1033, %v1078
    %vm1340 = vcmp.eq.f32.partialorder %v1037, %v1078
    %vm1341 = vcmp.eq.f32.partialorder %v1041, %v1078
    %vm1342 = vcmp.eq.f32.partialorder %v1045, %v1078
    %v1343 = vsel %vm519, 1, 0
    %v1344 = vsel %vm520, 1, 0
    %v1345 = vsel %vm521, 1, 0
    %v1346 = vsel %vm522, 1, 0
    %v1347 = vsel %vm523, 1, 0
    %v1348 = vsel %vm524, 1, 0
    %v1349 = vsel %vm525, 1, 0
    %v1350 = vsel %vm526, 1, 0
    %v1351 = vsel %vm527, 1, 0
    %v1352 = vsel %vm528, 1, 0
    %v1353 = vsel %vm529, 1, 0
    %v1354 = vsel %vm530, 1, 0
    %v1355 = vsel %vm531, 1, 0
    %v1356 = vsel %vm532, 1, 0
    %v1357 = vsel %vm533, 1, 0
    %v1358 = vsel %vm534, 1, 0
    %vm1359 = vcmp.eq.s32.totalorder %v1343, 1
    %vm1360 = vcmp.eq.s32.totalorder %v1344, 1
    %vm1361 = vcmp.eq.s32.totalorder %v1345, 1
    %vm1362 = vcmp.eq.s32.totalorder %v1346, 1
    %vm1363 = vcmp.eq.s32.totalorder %v1347, 1
    %vm1364 = vcmp.eq.s32.totalorder %v1348, 1
    %vm1365 = vcmp.eq.s32.totalorder %v1349, 1
    %vm1366 = vcmp.eq.s32.totalorder %v1350, 1
    %vm1367 = vcmp.eq.s32.totalorder %v1351, 1
    %vm1368 = vcmp.eq.s32.totalorder %v1352, 1
    %vm1369 = vcmp.eq.s32.totalorder %v1353, 1
    %vm1370 = vcmp.eq.s32.totalorder %v1354, 1
    %vm1371 = vcmp.eq.s32.totalorder %v1355, 1
    %vm1372 = vcmp.eq.s32.totalorder %v1356, 1
    %vm1373 = vcmp.eq.s32.totalorder %v1357, 1
    %vm1374 = vcmp.eq.s32.totalorder %v1358, 1
    %vm1375 = vmand %vm1215, %vm1359
    %vm1376 = vmand %vm1216, %vm1360
    %vm1377 = vmand %vm1217, %vm1361
    %vm1378 = vmand %vm1218, %vm1362
    %vm1379 = vmand %vm1219, %vm1363
    %vm1380 = vmand %vm1220, %vm1364
    %vm1381 = vmand %vm1221, %vm1365
    %vm1382 = vmand %vm1222, %vm1366
    %vm1383 = vmand %vm1223, %vm1367
    %vm1384 = vmand %vm1224, %vm1368
    %vm1385 = vmand %vm1225, %vm1369
    %vm1386 = vmand %vm1226, %vm1370
    %vm1387 = vmand %vm1227, %vm1371
    %vm1388 = vmand %vm1228, %vm1372
    %vm1389 = vmand %vm1229, %vm1373
    %vm1390 = vmand %vm1230, %vm1374
    %vm1391 = vmand %vm1231, %vm1359
    %vm1392 = vmand %vm1232, %vm1360
    %vm1393 = vmand %vm1233, %vm1361
    %vm1394 = vmand %vm1234, %vm1362
    %vm1395 = vmand %vm1235, %vm1363
    %vm1396 = vmand %vm1236, %vm1364
    %vm1397 = vmand %vm1237, %vm1365
    %vm1398 = vmand %vm1238, %vm1366
    %vm1399 = vmand %vm1239, %vm1367
    %vm1400 = vmand %vm1240, %vm1368
    %vm1401 = vmand %vm1241, %vm1369
    %vm1402 = vmand %vm1242, %vm1370
    %vm1403 = vmand %vm1243, %vm1371
    %vm1404 = vmand %vm1244, %vm1372
    %vm1405 = vmand %vm1245, %vm1373
    %vm1406 = vmand %vm1246, %vm1374
    %vm1407 = vmand %vm1247, %vm1359
    %vm1408 = vmand %vm1248, %vm1360
    %vm1409 = vmand %vm1249, %vm1361
    %vm1410 = vmand %vm1250, %vm1362
    %vm1411 = vmand %vm1251, %vm1363
    %vm1412 = vmand %vm1252, %vm1364
    %vm1413 = vmand %vm1253, %vm1365
    %vm1414 = vmand %vm1254, %vm1366
    %vm1415 = vmand %vm1255, %vm1367
    %vm1416 = vmand %vm1256, %vm1368
    %vm1417 = vmand %vm1257, %vm1369
    %vm1418 = vmand %vm1258, %vm1370
    %vm1419 = vmand %vm1259, %vm1371
    %vm1420 = vmand %vm1260, %vm1372
    %vm1421 = vmand %vm1261, %vm1373
    %vm1422 = vmand %vm1262, %vm1374
    %vm1423 = vmand %vm1263, %vm1359
    %vm1424 = vmand %vm1264, %vm1360
    %vm1425 = vmand %vm1265, %vm1361
    %vm1426 = vmand %vm1266, %vm1362
    %vm1427 = vmand %vm1267, %vm1363
    %vm1428 = vmand %vm1268, %vm1364
    %vm1429 = vmand %vm1269, %vm1365
    %vm1430 = vmand %vm1270, %vm1366
    %vm1431 = vmand %vm1271, %vm1367
    %vm1432 = vmand %vm1272, %vm1368
    %vm1433 = vmand %vm1273, %vm1369
    %vm1434 = vmand %vm1274, %vm1370
    %vm1435 = vmand %vm1275, %vm1371
    %vm1436 = vmand %vm1276, %vm1372
    %vm1437 = vmand %vm1277, %vm1373
    %vm1438 = vmand %vm1278, %vm1374
    %vm1439 = vmand %vm1279, %vm1359
    %vm1440 = vmand %vm1280, %vm1360
    %vm1441 = vmand %vm1281, %vm1361
    %vm1442 = vmand %vm1282, %vm1362
    %vm1443 = vmand %vm1283, %vm1363
    %vm1444 = vmand %vm1284, %vm1364
    %vm1445 = vmand %vm1285, %vm1365
    %vm1446 = vmand %vm1286, %vm1366
    %vm1447 = vmand %vm1287, %vm1367
    %vm1448 = vmand %vm1288, %vm1368
    %vm1449 = vmand %vm1289, %vm1369
    %vm1450 = vmand %vm1290, %vm1370
    %vm1451 = vmand %vm1291, %vm1371
    %vm1452 = vmand %vm1292, %vm1372
    %vm1453 = vmand %vm1293, %vm1373
    %vm1454 = vmand %vm1294, %vm1374
    %vm1455 = vmand %vm1295, %vm1359
    %vm1456 = vmand %vm1296, %vm1360
    %vm1457 = vmand %vm1297, %vm1361
    %vm1458 = vmand %vm1298, %vm1362
    %vm1459 = vmand %vm1299, %vm1363
    %vm1460 = vmand %vm1300, %vm1364
    %vm1461 = vmand %vm1301, %vm1365
    %vm1462 = vmand %vm1302, %vm1366
    %vm1463 = vmand %vm1303, %vm1367
    %vm1464 = vmand %vm1304, %vm1368
    %vm1465 = vmand %vm1305, %vm1369
    %vm1466 = vmand %vm1306, %vm1370
    %vm1467 = vmand %vm1307, %vm1371
    %vm1468 = vmand %vm1308, %vm1372
    %vm1469 = vmand %vm1309, %vm1373
    %vm1470 = vmand %vm1310, %vm1374
    %vm1471 = vmand %vm1311, %vm1359
    %vm1472 = vmand %vm1312, %vm1360
    %vm1473 = vmand %vm1313, %vm1361
    %vm1474 = vmand %vm1314, %vm1362
    %vm1475 = vmand %vm1315, %vm1363
    %vm1476 = vmand %vm1316, %vm1364
    %vm1477 = vmand %vm1317, %vm1365
    %vm1478 = vmand %vm1318, %vm1366
    %vm1479 = vmand %vm1319, %vm1367
    %vm1480 = vmand %vm1320, %vm1368
    %vm1481 = vmand %vm1321, %vm1369
    %vm1482 = vmand %vm1322, %vm1370
    %vm1483 = vmand %vm1323, %vm1371
    %vm1484 = vmand %vm1324, %vm1372
    %vm1485 = vmand %vm1325, %vm1373
    %vm1486 = vmand %vm1326, %vm1374
    %vm1487 = vmand %vm1327, %vm1359
    %vm1488 = vmand %vm1328, %vm1360
    %vm1489 = vmand %vm1329, %vm1361
    %vm1490 = vmand %vm1330, %vm1362
    %vm1491 = vmand %vm1331, %vm1363
    %vm1492 = vmand %vm1332, %vm1364
    %vm1493 = vmand %vm1333, %vm1365
    %vm1494 = vmand %vm1334, %vm1366
    %vm1495 = vmand %vm1335, %vm1367
    %vm1496 = vmand %vm1336, %vm1368
    %vm1497 = vmand %vm1337, %vm1369
    %vm1498 = vmand %vm1338, %vm1370
    %vm1499 = vmand %vm1339, %vm1371
    %vm1500 = vmand %vm1340, %vm1372
    %vm1501 = vmand %vm1341, %vm1373
    %vm1502 = vmand %vm1342, %vm1374
    %vm1503 = vmor %vm1087, %vm1375
    %vm1504 = vmor %vm1088, %vm1376
    %vm1505 = vmor %vm1089, %vm1377
    %vm1506 = vmor %vm1090, %vm1378
    %vm1507 = vmor %vm1091, %vm1379
    %vm1508 = vmor %vm1092, %vm1380
    %vm1509 = vmor %vm1093, %vm1381
    %vm1510 = vmor %vm1094, %vm1382
    %vm1511 = vmor %vm1095, %vm1383
    %vm1512 = vmor %vm1096, %vm1384
    %vm1513 = vmor %vm1097, %vm1385
    %vm1514 = vmor %vm1098, %vm1386
    %vm1515 = vmor %vm1099, %vm1387
    %vm1516 = vmor %vm1100, %vm1388
    %vm1517 = vmor %vm1101, %vm1389
    %vm1518 = vmor %vm1102, %vm1390
    %vm1519 = vmor %vm1103, %vm1391
    %vm1520 = vmor %vm1104, %vm1392
    %vm1521 = vmor %vm1105, %vm1393
    %vm1522 = vmor %vm1106, %vm1394
    %vm1523 = vmor %vm1107, %vm1395
    %vm1524 = vmor %vm1108, %vm1396
    %vm1525 = vmor %vm1109, %vm1397
    %vm1526 = vmor %vm1110, %vm1398
    %vm1527 = vmor %vm1111, %vm1399
    %vm1528 = vmor %vm1112, %vm1400
    %vm1529 = vmor %vm1113, %vm1401
    %vm1530 = vmor %vm1114, %vm1402
    %vm1531 = vmor %vm1115, %vm1403
    %vm1532 = vmor %vm1116, %vm1404
    %vm1533 = vmor %vm1117, %vm1405
    %vm1534 = vmor %vm1118, %vm1406
    %vm1535 = vmor %vm1119, %vm1407
    %vm1536 = vmor %vm1120, %vm1408
    %vm1537 = vmor %vm1121, %vm1409
    %vm1538 = vmor %vm1122, %vm1410
    %vm1539 = vmor %vm1123, %vm1411
    %vm1540 = vmor %vm1124, %vm1412
    %vm1541 = vmor %vm1125, %vm1413
    %vm1542 = vmor %vm1126, %vm1414
    %vm1543 = vmor %vm1127, %vm1415
    %vm1544 = vmor %vm1128, %vm1416
    %vm1545 = vmor %vm1129, %vm1417
    %vm1546 = vmor %vm1130, %vm1418
    %vm1547 = vmor %vm1131, %vm1419
    %vm1548 = vmor %vm1132, %vm1420
    %vm1549 = vmor %vm1133, %vm1421
    %vm1550 = vmor %vm1134, %vm1422
    %vm1551 = vmor %vm1135, %vm1423
    %vm1552 = vmor %vm1136, %vm1424
    %vm1553 = vmor %vm1137, %vm1425
    %vm1554 = vmor %vm1138, %vm1426
    %vm1555 = vmor %vm1139, %vm1427
    %vm1556 = vmor %vm1140, %vm1428
    %vm1557 = vmor %vm1141, %vm1429
    %vm1558 = vmor %vm1142, %vm1430
    %vm1559 = vmor %vm1143, %vm1431
    %vm1560 = vmor %vm1144, %vm1432
    %vm1561 = vmor %vm1145, %vm1433
    %vm1562 = vmor %vm1146, %vm1434
    %vm1563 = vmor %vm1147, %vm1435
    %vm1564 = vmor %vm1148, %vm1436
    %vm1565 = vmor %vm1149, %vm1437
    %vm1566 = vmor %vm1150, %vm1438
    %vm1567 = vmor %vm1151, %vm1439
    %vm1568 = vmor %vm1152, %vm1440
    %vm1569 = vmor %vm1153, %vm1441
    %vm1570 = vmor %vm1154, %vm1442
    %vm1571 = vmor %vm1155, %vm1443
    %vm1572 = vmor %vm1156, %vm1444
    %vm1573 = vmor %vm1157, %vm1445
    %vm1574 = vmor %vm1158, %vm1446
    %vm1575 = vmor %vm1159, %vm1447
    %vm1576 = vmor %vm1160, %vm1448
    %vm1577 = vmor %vm1161, %vm1449
    %vm1578 = vmor %vm1162, %vm1450
    %vm1579 = vmor %vm1163, %vm1451
    %vm1580 = vmor %vm1164, %vm1452
    %vm1581 = vmor %vm1165, %vm1453
    %vm1582 = vmor %vm1166, %vm1454
    %vm1583 = vmor %vm1167, %vm1455
    %vm1584 = vmor %vm1168, %vm1456
    %vm1585 = vmor %vm1169, %vm1457
    %vm1586 = vmor %vm1170, %vm1458
    %vm1587 = vmor %vm1171, %vm1459
    %vm1588 = vmor %vm1172, %vm1460
    %vm1589 = vmor %vm1173, %vm1461
    %vm1590 = vmor %vm1174, %vm1462
    %vm1591 = vmor %vm1175, %vm1463
    %vm1592 = vmor %vm1176, %vm1464
    %vm1593 = vmor %vm1177, %vm1465
    %vm1594 = vmor %vm1178, %vm1466
    %vm1595 = vmor %vm1179, %vm1467
    %vm1596 = vmor %vm1180, %vm1468
    %vm1597 = vmor %vm1181, %vm1469
    %vm1598 = vmor %vm1182, %vm1470
    %vm1599 = vmor %vm1183, %vm1471
    %vm1600 = vmor %vm1184, %vm1472
    %vm1601 = vmor %vm1185, %vm1473
    %vm1602 = vmor %vm1186, %vm1474
    %vm1603 = vmor %vm1187, %vm1475
    %vm1604 = vmor %vm1188, %vm1476
    %vm1605 = vmor %vm1189, %vm1477
    %vm1606 = vmor %vm1190, %vm1478
    %vm1607 = vmor %vm1191, %vm1479
    %vm1608 = vmor %vm1192, %vm1480
    %vm1609 = vmor %vm1193, %vm1481
    %vm1610 = vmor %vm1194, %vm1482
    %vm1611 = vmor %vm1195, %vm1483
    %vm1612 = vmor %vm1196, %vm1484
    %vm1613 = vmor %vm1197, %vm1485
    %vm1614 = vmor %vm1198, %vm1486
    %vm1615 = vmor %vm1199, %vm1487
    %vm1616 = vmor %vm1200, %vm1488
    %vm1617 = vmor %vm1201, %vm1489
    %vm1618 = vmor %vm1202, %vm1490
    %vm1619 = vmor %vm1203, %vm1491
    %vm1620 = vmor %vm1204, %vm1492
    %vm1621 = vmor %vm1205, %vm1493
    %vm1622 = vmor %vm1206, %vm1494
    %vm1623 = vmor %vm1207, %vm1495
    %vm1624 = vmor %vm1208, %vm1496
    %vm1625 = vmor %vm1209, %vm1497
    %vm1626 = vmor %vm1210, %vm1498
    %vm1627 = vmor %vm1211, %vm1499
    %vm1628 = vmor %vm1212, %vm1500
    %vm1629 = vmor %vm1213, %vm1501
    %vm1630 = vmor %vm1214, %vm1502
    %v1631 = vsel %vm1503, 1, 0
    %v1632 = vsel %vm1504, 1, 0
    %v1633 = vsel %vm1505, 1, 0
    %v1634 = vsel %vm1506, 1, 0
    %v1635 = vsel %vm1507, 1, 0
    %v1636 = vsel %vm1508, 1, 0
    %v1637 = vsel %vm1509, 1, 0
    %v1638 = vsel %vm1510, 1, 0
    %v1639 = vsel %vm1511, 1, 0
    %v1640 = vsel %vm1512, 1, 0
    %v1641 = vsel %vm1513, 1, 0
    %v1642 = vsel %vm1514, 1, 0
    %v1643 = vsel %vm1515, 1, 0
    %v1644 = vsel %vm1516, 1, 0
    %v1645 = vsel %vm1517, 1, 0
    %v1646 = vsel %vm1518, 1, 0
    %v1647 = vsel %vm1519, 1, 0
    %v1648 = vsel %vm1520, 1, 0
    %v1649 = vsel %vm1521, 1, 0
    %v1650 = vsel %vm1522, 1, 0
    %v1651 = vsel %vm1523, 1, 0
    %v1652 = vsel %vm1524, 1, 0
    %v1653 = vsel %vm1525, 1, 0
    %v1654 = vsel %vm1526, 1, 0
    %v1655 = vsel %vm1527, 1, 0
    %v1656 = vsel %vm1528, 1, 0
    %v1657 = vsel %vm1529, 1, 0
    %v1658 = vsel %vm1530, 1, 0
    %v1659 = vsel %vm1531, 1, 0
    %v1660 = vsel %vm1532, 1, 0
    %v1661 = vsel %vm1533, 1, 0
    %v1662 = vsel %vm1534, 1, 0
    %v1663 = vsel %vm1535, 1, 0
    %v1664 = vsel %vm1536, 1, 0
    %v1665 = vsel %vm1537, 1, 0
    %v1666 = vsel %vm1538, 1, 0
    %v1667 = vsel %vm1539, 1, 0
    %v1668 = vsel %vm1540, 1, 0
    %v1669 = vsel %vm1541, 1, 0
    %v1670 = vsel %vm1542, 1, 0
    %v1671 = vsel %vm1543, 1, 0
    %v1672 = vsel %vm1544, 1, 0
    %v1673 = vsel %vm1545, 1, 0
    %v1674 = vsel %vm1546, 1, 0
    %v1675 = vsel %vm1547, 1, 0
    %v1676 = vsel %vm1548, 1, 0
    %v1677 = vsel %vm1549, 1, 0
    %v1678 = vsel %vm1550, 1, 0
    %v1679 = vsel %vm1551, 1, 0
    %v1680 = vsel %vm1552, 1, 0
    %v1681 = vsel %vm1553, 1, 0
    %v1682 = vsel %vm1554, 1, 0
    %v1683 = vsel %vm1555, 1, 0
    %v1684 = vsel %vm1556, 1, 0
    %v1685 = vsel %vm1557, 1, 0
    %v1686 = vsel %vm1558, 1, 0
    %v1687 = vsel %vm1559, 1, 0
    %v1688 = vsel %vm1560, 1, 0
    %v1689 = vsel %vm1561, 1, 0
    %v1690 = vsel %vm1562, 1, 0
    %v1691 = vsel %vm1563, 1, 0
    %v1692 = vsel %vm1564, 1, 0
    %v1693 = vsel %vm1565, 1, 0
    %v1694 = vsel %vm1566, 1, 0
    %v1695 = vsel %vm1567, 1, 0
    %v1696 = vsel %vm1568, 1, 0
    %v1697 = vsel %vm1569, 1, 0
    %v1698 = vsel %vm1570, 1, 0
    %v1699 = vsel %vm1571, 1, 0
    %v1700 = vsel %vm1572, 1, 0
    %v1701 = vsel %vm1573, 1, 0
    %v1702 = vsel %vm1574, 1, 0
    %v1703 = vsel %vm1575, 1, 0
    %v1704 = vsel %vm1576, 1, 0
    %v1705 = vsel %vm1577, 1, 0
    %v1706 = vsel %vm1578, 1, 0
    %v1707 = vsel %vm1579, 1, 0
    %v1708 = vsel %vm1580, 1, 0
    %v1709 = vsel %vm1581, 1, 0
    %v1710 = vsel %vm1582, 1, 0
    %v1711 = vsel %vm1583, 1, 0
    %v1712 = vsel %vm1584, 1, 0
    %v1713 = vsel %vm1585, 1, 0
    %v1714 = vsel %vm1586, 1, 0
    %v1715 = vsel %vm1587, 1, 0
    %v1716 = vsel %vm1588, 1, 0
    %v1717 = vsel %vm1589, 1, 0
    %v1718 = vsel %vm1590, 1, 0
    %v1719 = vsel %vm1591, 1, 0
    %v1720 = vsel %vm1592, 1, 0
    %v1721 = vsel %vm1593, 1, 0
    %v1722 = vsel %vm1594, 1, 0
    %v1723 = vsel %vm1595, 1, 0
    %v1724 = vsel %vm1596, 1, 0
    %v1725 = vsel %vm1597, 1, 0
    %v1726 = vsel %vm1598, 1, 0
    %v1727 = vsel %vm1599, 1, 0
    %v1728 = vsel %vm1600, 1, 0
    %v1729 = vsel %vm1601, 1, 0
    %v1730 = vsel %vm1602, 1, 0
    %v1731 = vsel %vm1603, 1, 0
    %v1732 = vsel %vm1604, 1, 0
    %v1733 = vsel %vm1605, 1, 0
    %v1734 = vsel %vm1606, 1, 0
    %v1735 = vsel %vm1607, 1, 0
    %v1736 = vsel %vm1608, 1, 0
    %v1737 = vsel %vm1609, 1, 0
    %v1738 = vsel %vm1610, 1, 0
    %v1739 = vsel %vm1611, 1, 0
    %v1740 = vsel %vm1612, 1, 0
    %v1741 = vsel %vm1613, 1, 0
    %v1742 = vsel %vm1614, 1, 0
    %v1743 = vsel %vm1615, 1, 0
    %v1744 = vsel %vm1616, 1, 0
    %v1745 = vsel %vm1617, 1, 0
    %v1746 = vsel %vm1618, 1, 0
    %v1747 = vsel %vm1619, 1, 0
    %v1748 = vsel %vm1620, 1, 0
    %v1749 = vsel %vm1621, 1, 0
    %v1750 = vsel %vm1622, 1, 0
    %v1751 = vsel %vm1623, 1, 0
    %v1752 = vsel %vm1624, 1, 0
    %v1753 = vsel %vm1625, 1, 0
    %v1754 = vsel %vm1626, 1, 0
    %v1755 = vsel %vm1627, 1, 0
    %v1756 = vsel %vm1628, 1, 0
    %v1757 = vsel %vm1629, 1, 0
    %v1758 = vsel %vm1630, 1, 0
    %v1759 = vcvt.s32.f32 %v1631
    %v1760 = vcvt.s32.f32 %v1632
    %v1761 = vcvt.s32.f32 %v1633
    %v1762 = vcvt.s32.f32 %v1634
    %v1763 = vcvt.s32.f32 %v1635
    %v1764 = vcvt.s32.f32 %v1636
    %v1765 = vcvt.s32.f32 %v1637
    %v1766 = vcvt.s32.f32 %v1638
    %v1767 = vcvt.s32.f32 %v1639
    %v1768 = vcvt.s32.f32 %v1640
    %v1769 = vcvt.s32.f32 %v1641
    %v1770 = vcvt.s32.f32 %v1642
    %v1771 = vcvt.s32.f32 %v1643
    %v1772 = vcvt.s32.f32 %v1644
    %v1773 = vcvt.s32.f32 %v1645
    %v1774 = vcvt.s32.f32 %v1646
    %v1775 = vcvt.s32.f32 %v1647
    %v1776 = vcvt.s32.f32 %v1648
    %v1777 = vcvt.s32.f32 %v1649
    %v1778 = vcvt.s32.f32 %v1650
    %v1779 = vcvt.s32.f32 %v1651
    %v1780 = vcvt.s32.f32 %v1652
    %v1781 = vcvt.s32.f32 %v1653
    %v1782 = vcvt.s32.f32 %v1654
    %v1783 = vcvt.s32.f32 %v1655
    %v1784 = vcvt.s32.f32 %v1656
    %v1785 = vcvt.s32.f32 %v1657
    %v1786 = vcvt.s32.f32 %v1658
    %v1787 = vcvt.s32.f32 %v1659
    %v1788 = vcvt.s32.f32 %v1660
    %v1789 = vcvt.s32.f32 %v1661
    %v1790 = vcvt.s32.f32 %v1662
    %v1791 = vcvt.s32.f32 %v1663
    %v1792 = vcvt.s32.f32 %v1664
    %v1793 = vcvt.s32.f32 %v1665
    %v1794 = vcvt.s32.f32 %v1666
    %v1795 = vcvt.s32.f32 %v1667
    %v1796 = vcvt.s32.f32 %v1668
    %v1797 = vcvt.s32.f32 %v1669
    %v1798 = vcvt.s32.f32 %v1670
    %v1799 = vcvt.s32.f32 %v1671
    %v1800 = vcvt.s32.f32 %v1672
    %v1801 = vcvt.s32.f32 %v1673
    %v1802 = vcvt.s32.f32 %v1674
    %v1803 = vcvt.s32.f32 %v1675
    %v1804 = vcvt.s32.f32 %v1676
    %v1805 = vcvt.s32.f32 %v1677
    %v1806 = vcvt.s32.f32 %v1678
    %v1807 = vcvt.s32.f32 %v1679
    %v1808 = vcvt.s32.f32 %v1680
    %v1809 = vcvt.s32.f32 %v1681
    %v1810 = vcvt.s32.f32 %v1682
    %v1811 = vcvt.s32.f32 %v1683
    %v1812 = vcvt.s32.f32 %v1684
    %v1813 = vcvt.s32.f32 %v1685
    %v1814 = vcvt.s32.f32 %v1686
    %v1815 = vcvt.s32.f32 %v1687
    %v1816 = vcvt.s32.f32 %v1688
    %v1817 = vcvt.s32.f32 %v1689
    %v1818 = vcvt.s32.f32 %v1690
    %v1819 = vcvt.s32.f32 %v1691
    %v1820 = vcvt.s32.f32 %v1692
    %v1821 = vcvt.s32.f32 %v1693
    %v1822 = vcvt.s32.f32 %v1694
    %v1823 = vcvt.s32.f32 %v1695
    %v1824 = vcvt.s32.f32 %v1696
    %v1825 = vcvt.s32.f32 %v1697
    %v1826 = vcvt.s32.f32 %v1698
    %v1827 = vcvt.s32.f32 %v1699
    %v1828 = vcvt.s32.f32 %v1700
    %v1829 = vcvt.s32.f32 %v1701
    %v1830 = vcvt.s32.f32 %v1702
    %v1831 = vcvt.s32.f32 %v1703
    %v1832 = vcvt.s32.f32 %v1704
    %v1833 = vcvt.s32.f32 %v1705
    %v1834 = vcvt.s32.f32 %v1706
    %v1835 = vcvt.s32.f32 %v1707
    %v1836 = vcvt.s32.f32 %v1708
    %v1837 = vcvt.s32.f32 %v1709
    %v1838 = vcvt.s32.f32 %v1710
    %v1839 = vcvt.s32.f32 %v1711
    %v1840 = vcvt.s32.f32 %v1712
    %v1841 = vcvt.s32.f32 %v1713
    %v1842 = vcvt.s32.f32 %v1714
    %v1843 = vcvt.s32.f32 %v1715
    %v1844 = vcvt.s32.f32 %v1716
    %v1845 = vcvt.s32.f32 %v1717
    %v1846 = vcvt.s32.f32 %v1718
    %v1847 = vcvt.s32.f32 %v1719
    %v1848 = vcvt.s32.f32 %v1720
    %v1849 = vcvt.s32.f32 %v1721
    %v1850 = vcvt.s32.f32 %v1722
    %v1851 = vcvt.s32.f32 %v1723
    %v1852 = vcvt.s32.f32 %v1724
    %v1853 = vcvt.s32.f32 %v1725
    %v1854 = vcvt.s32.f32 %v1726
    %v1855 = vcvt.s32.f32 %v1727
    %v1856 = vcvt.s32.f32 %v1728
    %v1857 = vcvt.s32.f32 %v1729
    %v1858 = vcvt.s32.f32 %v1730
    %v1859 = vcvt.s32.f32 %v1731
    %v1860 = vcvt.s32.f32 %v1732
    %v1861 = vcvt.s32.f32 %v1733
    %v1862 = vcvt.s32.f32 %v1734
    %v1863 = vcvt.s32.f32 %v1735
    %v1864 = vcvt.s32.f32 %v1736
    %v1865 = vcvt.s32.f32 %v1737
    %v1866 = vcvt.s32.f32 %v1738
    %v1867 = vcvt.s32.f32 %v1739
    %v1868 = vcvt.s32.f32 %v1740
    %v1869 = vcvt.s32.f32 %v1741
    %v1870 = vcvt.s32.f32 %v1742
    %v1871 = vcvt.s32.f32 %v1743
    %v1872 = vcvt.s32.f32 %v1744
    %v1873 = vcvt.s32.f32 %v1745
    %v1874 = vcvt.s32.f32 %v1746
    %v1875 = vcvt.s32.f32 %v1747
    %v1876 = vcvt.s32.f32 %v1748
    %v1877 = vcvt.s32.f32 %v1749
    %v1878 = vcvt.s32.f32 %v1750
    %v1879 = vcvt.s32.f32 %v1751
    %v1880 = vcvt.s32.f32 %v1752
    %v1881 = vcvt.s32.f32 %v1753
    %v1882 = vcvt.s32.f32 %v1754
    %v1883 = vcvt.s32.f32 %v1755
    %v1884 = vcvt.s32.f32 %v1756
    %v1885 = vcvt.s32.f32 %v1757
    %v1886 = vcvt.s32.f32 %v1758
    %vm1887 = vcmp.eq.s32.totalorder %v20, 0
    %vm1888 = vcmp.eq.s32.totalorder %v21, 0
    %vm1889 = vcmp.eq.s32.totalorder %v22, 0
    %vm1890 = vcmp.eq.s32.totalorder %v23, 0
    %vm1891 = vcmp.eq.s32.totalorder %v24, 0
    %vm1892 = vcmp.eq.s32.totalorder %v25, 0
    %vm1893 = vcmp.eq.s32.totalorder %v26, 0
    %vm1894 = vcmp.eq.s32.totalorder %v27, 0
    %vm1895 = vcmp.eq.s32.totalorder %v28, 0
    %vm1896 = vcmp.eq.s32.totalorder %v29, 0
    %vm1897 = vcmp.eq.s32.totalorder %v30, 0
    %vm1898 = vcmp.eq.s32.totalorder %v31, 0
    %vm1899 = vcmp.eq.s32.totalorder %v32, 0
    %vm1900 = vcmp.eq.s32.totalorder %v33, 0
    %vm1901 = vcmp.eq.s32.totalorder %v34, 0
    %vm1902 = vcmp.eq.s32.totalorder %v35, 0
    %vm1903 = vcmp.eq.s32.totalorder %v20, 1
    %vm1904 = vcmp.eq.s32.totalorder %v21, 1
    %vm1905 = vcmp.eq.s32.totalorder %v22, 1
    %vm1906 = vcmp.eq.s32.totalorder %v23, 1
    %vm1907 = vcmp.eq.s32.totalorder %v24, 1
    %vm1908 = vcmp.eq.s32.totalorder %v25, 1
    %vm1909 = vcmp.eq.s32.totalorder %v26, 1
    %vm1910 = vcmp.eq.s32.totalorder %v27, 1
    %vm1911 = vcmp.eq.s32.totalorder %v28, 1
    %vm1912 = vcmp.eq.s32.totalorder %v29, 1
    %vm1913 = vcmp.eq.s32.totalorder %v30, 1
    %vm1914 = vcmp.eq.s32.totalorder %v31, 1
    %vm1915 = vcmp.eq.s32.totalorder %v32, 1
    %vm1916 = vcmp.eq.s32.totalorder %v33, 1
    %vm1917 = vcmp.eq.s32.totalorder %v34, 1
    %vm1918 = vcmp.eq.s32.totalorder %v35, 1
    %vm1919 = vcmp.eq.s32.totalorder %v20, 2
    %vm1920 = vcmp.eq.s32.totalorder %v21, 2
    %vm1921 = vcmp.eq.s32.totalorder %v22, 2
    %vm1922 = vcmp.eq.s32.totalorder %v23, 2
    %vm1923 = vcmp.eq.s32.totalorder %v24, 2
    %vm1924 = vcmp.eq.s32.totalorder %v25, 2
    %vm1925 = vcmp.eq.s32.totalorder %v26, 2
    %vm1926 = vcmp.eq.s32.totalorder %v27, 2
    %vm1927 = vcmp.eq.s32.totalorder %v28, 2
    %vm1928 = vcmp.eq.s32.totalorder %v29, 2
    %vm1929 = vcmp.eq.s32.totalorder %v30, 2
    %vm1930 = vcmp.eq.s32.totalorder %v31, 2
    %vm1931 = vcmp.eq.s32.totalorder %v32, 2
    %vm1932 = vcmp.eq.s32.totalorder %v33, 2
    %vm1933 = vcmp.eq.s32.totalorder %v34, 2
    %vm1934 = vcmp.eq.s32.totalorder %v35, 2
    %vm1935 = vcmp.eq.s32.totalorder %v20, 3
    %vm1936 = vcmp.eq.s32.totalorder %v21, 3
    %vm1937 = vcmp.eq.s32.totalorder %v22, 3
    %vm1938 = vcmp.eq.s32.totalorder %v23, 3
    %vm1939 = vcmp.eq.s32.totalorder %v24, 3
    %vm1940 = vcmp.eq.s32.totalorder %v25, 3
    %vm1941 = vcmp.eq.s32.totalorder %v26, 3
    %vm1942 = vcmp.eq.s32.totalorder %v27, 3
    %vm1943 = vcmp.eq.s32.totalorder %v28, 3
    %vm1944 = vcmp.eq.s32.totalorder %v29, 3
    %vm1945 = vcmp.eq.s32.totalorder %v30, 3
    %vm1946 = vcmp.eq.s32.totalorder %v31, 3
    %vm1947 = vcmp.eq.s32.totalorder %v32, 3
    %vm1948 = vcmp.eq.s32.totalorder %v33, 3
    %vm1949 = vcmp.eq.s32.totalorder %v34, 3
    %vm1950 = vcmp.eq.s32.totalorder %v35, 3
    %vm1951 = vcmp.eq.s32.totalorder %v20, 4
    %vm1952 = vcmp.eq.s32.totalorder %v21, 4
    %vm1953 = vcmp.eq.s32.totalorder %v22, 4
    %vm1954 = vcmp.eq.s32.totalorder %v23, 4
    %vm1955 = vcmp.eq.s32.totalorder %v24, 4
    %vm1956 = vcmp.eq.s32.totalorder %v25, 4
    %vm1957 = vcmp.eq.s32.totalorder %v26, 4
    %vm1958 = vcmp.eq.s32.totalorder %v27, 4
    %vm1959 = vcmp.eq.s32.totalorder %v28, 4
    %vm1960 = vcmp.eq.s32.totalorder %v29, 4
    %vm1961 = vcmp.eq.s32.totalorder %v30, 4
    %vm1962 = vcmp.eq.s32.totalorder %v31, 4
    %vm1963 = vcmp.eq.s32.totalorder %v32, 4
    %vm1964 = vcmp.eq.s32.totalorder %v33, 4
    %vm1965 = vcmp.eq.s32.totalorder %v34, 4
    %vm1966 = vcmp.eq.s32.totalorder %v35, 4
    %vm1967 = vcmp.eq.s32.totalorder %v20, 5
    %vm1968 = vcmp.eq.s32.totalorder %v21, 5
    %vm1969 = vcmp.eq.s32.totalorder %v22, 5
    %vm1970 = vcmp.eq.s32.totalorder %v23, 5
    %vm1971 = vcmp.eq.s32.totalorder %v24, 5
    %vm1972 = vcmp.eq.s32.totalorder %v25, 5
    %vm1973 = vcmp.eq.s32.totalorder %v26, 5
    %vm1974 = vcmp.eq.s32.totalorder %v27, 5
    %vm1975 = vcmp.eq.s32.totalorder %v28, 5
    %vm1976 = vcmp.eq.s32.totalorder %v29, 5
    %vm1977 = vcmp.eq.s32.totalorder %v30, 5
    %vm1978 = vcmp.eq.s32.totalorder %v31, 5
    %vm1979 = vcmp.eq.s32.totalorder %v32, 5
    %vm1980 = vcmp.eq.s32.totalorder %v33, 5
    %vm1981 = vcmp.eq.s32.totalorder %v34, 5
    %vm1982 = vcmp.eq.s32.totalorder %v35, 5
    %vm1983 = vcmp.eq.s32.totalorder %v20, 6
    %vm1984 = vcmp.eq.s32.totalorder %v21, 6
    %vm1985 = vcmp.eq.s32.totalorder %v22, 6
    %vm1986 = vcmp.eq.s32.totalorder %v23, 6
    %vm1987 = vcmp.eq.s32.totalorder %v24, 6
    %vm1988 = vcmp.eq.s32.totalorder %v25, 6
    %vm1989 = vcmp.eq.s32.totalorder %v26, 6
    %vm1990 = vcmp.eq.s32.totalorder %v27, 6
    %vm1991 = vcmp.eq.s32.totalorder %v28, 6
    %vm1992 = vcmp.eq.s32.totalorder %v29, 6
    %vm1993 = vcmp.eq.s32.totalorder %v30, 6
    %vm1994 = vcmp.eq.s32.totalorder %v31, 6
    %vm1995 = vcmp.eq.s32.totalorder %v32, 6
    %vm1996 = vcmp.eq.s32.totalorder %v33, 6
    %vm1997 = vcmp.eq.s32.totalorder %v34, 6
    %vm1998 = vcmp.eq.s32.totalorder %v35, 6
    %vm1999 = vcmp.eq.s32.totalorder %v20, 7
    %vm2000 = vcmp.eq.s32.totalorder %v21, 7
    %vm2001 = vcmp.eq.s32.totalorder %v22, 7
    %vm2002 = vcmp.eq.s32.totalorder %v23, 7
    %vm2003 = vcmp.eq.s32.totalorder %v24, 7
    %vm2004 = vcmp.eq.s32.totalorder %v25, 7
    %vm2005 = vcmp.eq.s32.totalorder %v26, 7
    %vm2006 = vcmp.eq.s32.totalorder %v27, 7
    %vm2007 = vcmp.eq.s32.totalorder %v28, 7
    %vm2008 = vcmp.eq.s32.totalorder %v29, 7
    %vm2009 = vcmp.eq.s32.totalorder %v30, 7
    %vm2010 = vcmp.eq.s32.totalorder %v31, 7
    %vm2011 = vcmp.eq.s32.totalorder %v32, 7
    %vm2012 = vcmp.eq.s32.totalorder %v33, 7
    %vm2013 = vcmp.eq.s32.totalorder %v34, 7
    %vm2014 = vcmp.eq.s32.totalorder %v35, 7
    %v2015 = vsel %vm1887, 1, 0
    %v2016 = vsel %vm1888, 1, 0
    %v2017 = vsel %vm1889, 1, 0
    %v2018 = vsel %vm1890, 1, 0
    %v2019 = vsel %vm1891, 1, 0
    %v2020 = vsel %vm1892, 1, 0
    %v2021 = vsel %vm1893, 1, 0
    %v2022 = vsel %vm1894, 1, 0
    %v2023 = vsel %vm1895, 1, 0
    %v2024 = vsel %vm1896, 1, 0
    %v2025 = vsel %vm1897, 1, 0
    %v2026 = vsel %vm1898, 1, 0
    %v2027 = vsel %vm1899, 1, 0
    %v2028 = vsel %vm1900, 1, 0
    %v2029 = vsel %vm1901, 1, 0
    %v2030 = vsel %vm1902, 1, 0
    %v2031 = vsel %vm1903, 1, 0
    %v2032 = vsel %vm1904, 1, 0
    %v2033 = vsel %vm1905, 1, 0
    %v2034 = vsel %vm1906, 1, 0
    %v2035 = vsel %vm1907, 1, 0
    %v2036 = vsel %vm1908, 1, 0
    %v2037 = vsel %vm1909, 1, 0
    %v2038 = vsel %vm1910, 1, 0
    %v2039 = vsel %vm1911, 1, 0
    %v2040 = vsel %vm1912, 1, 0
    %v2041 = vsel %vm1913, 1, 0
    %v2042 = vsel %vm1914, 1, 0
    %v2043 = vsel %vm1915, 1, 0
    %v2044 = vsel %vm1916, 1, 0
    %v2045 = vsel %vm1917, 1, 0
    %v2046 = vsel %vm1918, 1, 0
    %v2047 = vsel %vm1919, 1, 0
    %v2048 = vsel %vm1920, 1, 0
    %v2049 = vsel %vm1921, 1, 0
    %v2050 = vsel %vm1922, 1, 0
    %v2051 = vsel %vm1923, 1, 0
    %v2052 = vsel %vm1924, 1, 0
    %v2053 = vsel %vm1925, 1, 0
    %v2054 = vsel %vm1926, 1, 0
    %v2055 = vsel %vm1927, 1, 0
    %v2056 = vsel %vm1928, 1, 0
    %v2057 = vsel %vm1929, 1, 0
    %v2058 = vsel %vm1930, 1, 0
    %v2059 = vsel %vm1931, 1, 0
    %v2060 = vsel %vm1932, 1, 0
    %v2061 = vsel %vm1933, 1, 0
    %v2062 = vsel %vm1934, 1, 0
    %v2063 = vsel %vm1935, 1, 0
    %v2064 = vsel %vm1936, 1, 0
    %v2065 = vsel %vm1937, 1, 0
    %v2066 = vsel %vm1938, 1, 0
    %v2067 = vsel %vm1939, 1, 0
    %v2068 = vsel %vm1940, 1, 0
    %v2069 = vsel %vm1941, 1, 0
    %v2070 = vsel %vm1942, 1, 0
    %v2071 = vsel %vm1943, 1, 0
    %v2072 = vsel %vm1944, 1, 0
    %v2073 = vsel %vm1945, 1, 0
    %v2074 = vsel %vm1946, 1, 0
    %v2075 = vsel %vm1947, 1, 0
    %v2076 = vsel %vm1948, 1, 0
    %v2077 = vsel %vm1949, 1, 0
    %v2078 = vsel %vm1950, 1, 0
    %v2079 = vsel %vm1951, 1, 0
    %v2080 = vsel %vm1952, 1, 0
    %v2081 = vsel %vm1953, 1, 0
    %v2082 = vsel %vm1954, 1, 0
    %v2083 = vsel %vm1955, 1, 0
    %v2084 = vsel %vm1956, 1, 0
    %v2085 = vsel %vm1957, 1, 0
    %v2086 = vsel %vm1958, 1, 0
    %v2087 = vsel %vm1959, 1, 0
    %v2088 = vsel %vm1960, 1, 0
    %v2089 = vsel %vm1961, 1, 0
    %v2090 = vsel %vm1962, 1, 0
    %v2091 = vsel %vm1963, 1, 0
    %v2092 = vsel %vm1964, 1, 0
    %v2093 = vsel %vm1965, 1, 0
    %v2094 = vsel %vm1966, 1, 0
    %v2095 = vsel %vm1967, 1, 0
    %v2096 = vsel %vm1968, 1, 0
    %v2097 = vsel %vm1969, 1, 0
    %v2098 = vsel %vm1970, 1, 0
    %v2099 = vsel %vm1971, 1, 0
    %v2100 = vsel %vm1972, 1, 0
    %v2101 = vsel %vm1973, 1, 0
    %v2102 = vsel %vm1974, 1, 0
    %v2103 = vsel %vm1975, 1, 0
    %v2104 = vsel %vm1976, 1, 0
    %v2105 = vsel %vm1977, 1, 0
    %v2106 = vsel %vm1978, 1, 0
    %v2107 = vsel %vm1979, 1, 0
    %v2108 = vsel %vm1980, 1, 0
    %v2109 = vsel %vm1981, 1, 0
    %v2110 = vsel %vm1982, 1, 0
    %v2111 = vsel %vm1983, 1, 0
    %v2112 = vsel %vm1984, 1, 0
    %v2113 = vsel %vm1985, 1, 0
    %v2114 = vsel %vm1986, 1, 0
    %v2115 = vsel %vm1987, 1, 0
    %v2116 = vsel %vm1988, 1, 0
    %v2117 = vsel %vm1989, 1, 0
    %v2118 = vsel %vm1990, 1, 0
    %v2119 = vsel %vm1991, 1, 0
    %v2120 = vsel %vm1992, 1, 0
    %v2121 = vsel %vm1993, 1, 0
    %v2122 = vsel %vm1994, 1, 0
    %v2123 = vsel %vm1995, 1, 0
    %v2124 = vsel %vm1996, 1, 0
    %v2125 = vsel %vm1997, 1, 0
    %v2126 = vsel %vm1998, 1, 0
    %v2127 = vsel %vm1999, 1, 0
    %v2128 = vsel %vm2000, 1, 0
    %v2129 = vsel %vm2001, 1, 0
    %v2130 = vsel %vm2002, 1, 0
    %v2131 = vsel %vm2003, 1, 0
    %v2132 = vsel %vm2004, 1, 0
    %v2133 = vsel %vm2005, 1, 0
    %v2134 = vsel %vm2006, 1, 0
    %v2135 = vsel %vm2007, 1, 0
    %v2136 = vsel %vm2008, 1, 0
    %v2137 = vsel %vm2009, 1, 0
    %v2138 = vsel %vm2010, 1, 0
    %v2139 = vsel %vm2011, 1, 0
    %v2140 = vsel %vm2012, 1, 0
    %v2141 = vsel %vm2013, 1, 0
    %v2142 = vsel %vm2014, 1, 0
    %v2143 = vcvt.s32.f32 %v2015
    %v2144 = vcvt.s32.f32 %v2016
    %v2145 = vcvt.s32.f32 %v2017
    %v2146 = vcvt.s32.f32 %v2018
    %v2147 = vcvt.s32.f32 %v2019
    %v2148 = vcvt.s32.f32 %v2020
    %v2149 = vcvt.s32.f32 %v2021
    %v2150 = vcvt.s32.f32 %v2022
    %v2151 = vcvt.s32.f32 %v2023
    %v2152 = vcvt.s32.f32 %v2024
    %v2153 = vcvt.s32.f32 %v2025
    %v2154 = vcvt.s32.f32 %v2026
    %v2155 = vcvt.s32.f32 %v2027
    %v2156 = vcvt.s32.f32 %v2028
    %v2157 = vcvt.s32.f32 %v2029
    %v2158 = vcvt.s32.f32 %v2030
    %v2159 = vcvt.s32.f32 %v2031
    %v2160 = vcvt.s32.f32 %v2032
    %v2161 = vcvt.s32.f32 %v2033
    %v2162 = vcvt.s32.f32 %v2034
    %v2163 = vcvt.s32.f32 %v2035
    %v2164 = vcvt.s32.f32 %v2036
    %v2165 = vcvt.s32.f32 %v2037
    %v2166 = vcvt.s32.f32 %v2038
    %v2167 = vcvt.s32.f32 %v2039
    %v2168 = vcvt.s32.f32 %v2040
    %v2169 = vcvt.s32.f32 %v2041
    %v2170 = vcvt.s32.f32 %v2042
    %v2171 = vcvt.s32.f32 %v2043
    %v2172 = vcvt.s32.f32 %v2044
    %v2173 = vcvt.s32.f32 %v2045
    %v2174 = vcvt.s32.f32 %v2046
    %v2175 = vcvt.s32.f32 %v2047
    %v2176 = vcvt.s32.f32 %v2048
    %v2177 = vcvt.s32.f32 %v2049
    %v2178 = vcvt.s32.f32 %v2050
    %v2179 = vcvt.s32.f32 %v2051
    %v2180 = vcvt.s32.f32 %v2052
    %v2181 = vcvt.s32.f32 %v2053
    %v2182 = vcvt.s32.f32 %v2054
    %v2183 = vcvt.s32.f32 %v2055
    %v2184 = vcvt.s32.f32 %v2056
    %v2185 = vcvt.s32.f32 %v2057
    %v2186 = vcvt.s32.f32 %v2058
    %v2187 = vcvt.s32.f32 %v2059
    %v2188 = vcvt.s32.f32 %v2060
    %v2189 = vcvt.s32.f32 %v2061
    %v2190 = vcvt.s32.f32 %v2062
    %v2191 = vcvt.s32.f32 %v2063
    %v2192 = vcvt.s32.f32 %v2064
    %v2193 = vcvt.s32.f32 %v2065
    %v2194 = vcvt.s32.f32 %v2066
    %v2195 = vcvt.s32.f32 %v2067
    %v2196 = vcvt.s32.f32 %v2068
    %v2197 = vcvt.s32.f32 %v2069
    %v2198 = vcvt.s32.f32 %v2070
    %v2199 = vcvt.s32.f32 %v2071
    %v2200 = vcvt.s32.f32 %v2072
    %v2201 = vcvt.s32.f32 %v2073
    %v2202 = vcvt.s32.f32 %v2074
    %v2203 = vcvt.s32.f32 %v2075
    %v2204 = vcvt.s32.f32 %v2076
    %v2205 = vcvt.s32.f32 %v2077
    %v2206 = vcvt.s32.f32 %v2078
    %v2207 = vcvt.s32.f32 %v2079
    %v2208 = vcvt.s32.f32 %v2080
    %v2209 = vcvt.s32.f32 %v2081
    %v2210 = vcvt.s32.f32 %v2082
    %v2211 = vcvt.s32.f32 %v2083
    %v2212 = vcvt.s32.f32 %v2084
    %v2213 = vcvt.s32.f32 %v2085
    %v2214 = vcvt.s32.f32 %v2086
    %v2215 = vcvt.s32.f32 %v2087
    %v2216 = vcvt.s32.f32 %v2088
    %v2217 = vcvt.s32.f32 %v2089
    %v2218 = vcvt.s32.f32 %v2090
    %v2219 = vcvt.s32.f32 %v2091
    %v2220 = vcvt.s32.f32 %v2092
    %v2221 = vcvt.s32.f32 %v2093
    %v2222 = vcvt.s32.f32 %v2094
    %v2223 = vcvt.s32.f32 %v2095
    %v2224 = vcvt.s32.f32 %v2096
    %v2225 = vcvt.s32.f32 %v2097
    %v2226 = vcvt.s32.f32 %v2098
    %v2227 = vcvt.s32.f32 %v2099
    %v2228 = vcvt.s32.f32 %v2100
    %v2229 = vcvt.s32.f32 %v2101
    %v2230 = vcvt.s32.f32 %v2102
    %v2231 = vcvt.s32.f32 %v2103
    %v2232 = vcvt.s32.f32 %v2104
    %v2233 = vcvt.s32.f32 %v2105
    %v2234 = vcvt.s32.f32 %v2106
    %v2235 = vcvt.s32.f32 %v2107
    %v2236 = vcvt.s32.f32 %v2108
    %v2237 = vcvt.s32.f32 %v2109
    %v2238 = vcvt.s32.f32 %v2110
    %v2239 = vcvt.s32.f32 %v2111
    %v2240 = vcvt.s32.f32 %v2112
    %v2241 = vcvt.s32.f32 %v2113
    %v2242 = vcvt.s32.f32 %v2114
    %v2243 = vcvt.s32.f32 %v2115
    %v2244 = vcvt.s32.f32 %v2116
    %v2245 = vcvt.s32.f32 %v2117
    %v2246 = vcvt.s32.f32 %v2118
    %v2247 = vcvt.s32.f32 %v2119
    %v2248 = vcvt.s32.f32 %v2120
    %v2249 = vcvt.s32.f32 %v2121
    %v2250 = vcvt.s32.f32 %v2122
    %v2251 = vcvt.s32.f32 %v2123
    %v2252 = vcvt.s32.f32 %v2124
    %v2253 = vcvt.s32.f32 %v2125
    %v2254 = vcvt.s32.f32 %v2126
    %v2255 = vcvt.s32.f32 %v2127
    %v2256 = vcvt.s32.f32 %v2128
    %v2257 = vcvt.s32.f32 %v2129
    %v2258 = vcvt.s32.f32 %v2130
    %v2259 = vcvt.s32.f32 %v2131
    %v2260 = vcvt.s32.f32 %v2132
    %v2261 = vcvt.s32.f32 %v2133
    %v2262 = vcvt.s32.f32 %v2134
    %v2263 = vcvt.s32.f32 %v2135
    %v2264 = vcvt.s32.f32 %v2136
    %v2265 = vcvt.s32.f32 %v2137
    %v2266 = vcvt.s32.f32 %v2138
    %v2267 = vcvt.s32.f32 %v2139
    %v2268 = vcvt.s32.f32 %v2140
    %v2269 = vcvt.s32.f32 %v2141
    %v2270 = vcvt.s32.f32 %v2142
    %v2271 = vadd.f32 %v1759, %v1760
    %v2272 = vadd.f32 %v2271, %v1761
    %v2273 = vadd.f32 %v2272, %v1762
    %v2274 = vadd.f32 %v2273, %v1763
    %v2275 = vadd.f32 %v2274, %v1764
    %v2276 = vadd.f32 %v2275, %v1765
    %v2277 = vadd.f32 %v2276, %v1766
    %v2278 = vadd.f32 %v2277, %v1767
    %v2279 = vadd.f32 %v2278, %v1768
    %v2280 = vadd.f32 %v2279, %v1769
    %v2281 = vadd.f32 %v2280, %v1770
    %v2282 = vadd.f32 %v2281, %v1771
    %v2283 = vadd.f32 %v2282, %v1772
    %v2284 = vadd.f32 %v2283, %v1773
    %v2285 = vadd.f32 %v2284, %v1774
    %v2286 = vrot.slane %v2285, 4
    %v2287 = vadd.f32 %v2285, %v2286
    %v2288 = vrot.slane %v2287, 2
    %v2289 = vadd.f32 %v2287, %v2288
    %v2290 = vrot.slane %v2289, 1
    %v2291 = vadd.f32 %v2289, %v2290
    %v2292 = vadd.f32 %v1775, %v1776
    %v2293 = vadd.f32 %v2292, %v1777
    %v2294 = vadd.f32 %v2293, %v1778
    %v2295 = vadd.f32 %v2294, %v1779
    %v2296 = vadd.f32 %v2295, %v1780
    %v2297 = vadd.f32 %v2296, %v1781
    %v2298 = vadd.f32 %v2297, %v1782
    %v2299 = vadd.f32 %v2298, %v1783
    %v2300 = vadd.f32 %v2299, %v1784
    %v2301 = vadd.f32 %v2300, %v1785
    %v2302 = vadd.f32 %v2301, %v1786
    %v2303 = vadd.f32 %v2302, %v1787
    %v2304 = vadd.f32 %v2303, %v1788
    %v2305 = vadd.f32 %v2304, %v1789
    %v2306 = vadd.f32 %v2305, %v1790
    %v2307 = vrot.slane %v2306, 4
    %v2308 = vadd.f32 %v2306, %v2307
    %v2309 = vrot.slane %v2308, 2
    %v2310 = vadd.f32 %v2308, %v2309
    %v2311 = vrot.slane %v2310, 1
    %v2312 = vadd.f32 %v2310, %v2311
    %v2313 = vadd.f32 %v1791, %v1792
    %v2314 = vadd.f32 %v2313, %v1793
    %v2315 = vadd.f32 %v2314, %v1794
    %v2316 = vadd.f32 %v2315, %v1795
    %v2317 = vadd.f32 %v2316, %v1796
    %v2318 = vadd.f32 %v2317, %v1797
    %v2319 = vadd.f32 %v2318, %v1798
    %v2320 = vadd.f32 %v2319, %v1799
    %v2321 = vadd.f32 %v2320, %v1800
    %v2322 = vadd.f32 %v2321, %v1801
    %v2323 = vadd.f32 %v2322, %v1802
    %v2324 = vadd.f32 %v2323, %v1803
    %v2325 = vadd.f32 %v2324, %v1804
    %v2326 = vadd.f32 %v2325, %v1805
    %v2327 = vadd.f32 %v2326, %v1806
    %v2328 = vrot.slane %v2327, 4
    %v2329 = vadd.f32 %v2327, %v2328
    %v2330 = vrot.slane %v2329, 2
    %v2331 = vadd.f32 %v2329, %v2330
    %v2332 = vrot.slane %v2331, 1
    %v2333 = vadd.f32 %v2331, %v2332
    %v2334 = vadd.f32 %v1807, %v1808
    %v2335 = vadd.f32 %v2334, %v1809
    %v2336 = vadd.f32 %v2335, %v1810
    %v2337 = vadd.f32 %v2336, %v1811
    %v2338 = vadd.f32 %v2337, %v1812
    %v2339 = vadd.f32 %v2338, %v1813
    %v2340 = vadd.f32 %v2339, %v1814
    %v2341 = vadd.f32 %v2340, %v1815
    %v2342 = vadd.f32 %v2341, %v1816
    %v2343 = vadd.f32 %v2342, %v1817
    %v2344 = vadd.f32 %v2343, %v1818
    %v2345 = vadd.f32 %v2344, %v1819
    %v2346 = vadd.f32 %v2345, %v1820
    %v2347 = vadd.f32 %v2346, %v1821
    %v2348 = vadd.f32 %v2347, %v1822
    %v2349 = vrot.slane %v2348, 4
    %v2350 = vadd.f32 %v2348, %v2349
    %v2351 = vrot.slane %v2350, 2
    %v2352 = vadd.f32 %v2350, %v2351
    %v2353 = vrot.slane %v2352, 1
    %v2354 = vadd.f32 %v2352, %v2353
    %v2355 = vadd.f32 %v1823, %v1824
    %v2356 = vadd.f32 %v2355, %v1825
    %v2357 = vadd.f32 %v2356, %v1826
    %v2358 = vadd.f32 %v2357, %v1827
    %v2359 = vadd.f32 %v2358, %v1828
    %v2360 = vadd.f32 %v2359, %v1829
    %v2361 = vadd.f32 %v2360, %v1830
    %v2362 = vadd.f32 %v2361, %v1831
    %v2363 = vadd.f32 %v2362, %v1832
    %v2364 = vadd.f32 %v2363, %v1833
    %v2365 = vadd.f32 %v2364, %v1834
    %v2366 = vadd.f32 %v2365, %v1835
    %v2367 = vadd.f32 %v2366, %v1836
    %v2368 = vadd.f32 %v2367, %v1837
    %v2369 = vadd.f32 %v2368, %v1838
    %v2370 = vrot.slane %v2369, 4
    %v2371 = vadd.f32 %v2369, %v2370
    %v2372 = vrot.slane %v2371, 2
    %v2373 = vadd.f32 %v2371, %v2372
    %v2374 = vrot.slane %v2373, 1
    %v2375 = vadd.f32 %v2373, %v2374
    %v2376 = vadd.f32 %v1839, %v1840
    %v2377 = vadd.f32 %v2376, %v1841
    %v2378 = vadd.f32 %v2377, %v1842
    %v2379 = vadd.f32 %v2378, %v1843
    %v2380 = vadd.f32 %v2379, %v1844
    %v2381 = vadd.f32 %v2380, %v1845
    %v2382 = vadd.f32 %v2381, %v1846
    %v2383 = vadd.f32 %v2382, %v1847
    %v2384 = vadd.f32 %v2383, %v1848
    %v2385 = vadd.f32 %v2384, %v1849
    %v2386 = vadd.f32 %v2385, %v1850
    %v2387 = vadd.f32 %v2386, %v1851
    %v2388 = vadd.f32 %v2387, %v1852
    %v2389 = vadd.f32 %v2388, %v1853
    %v2390 = vadd.f32 %v2389, %v1854
    %v2391 = vrot.slane %v2390, 4
    %v2392 = vadd.f32 %v2390, %v2391
    %v2393 = vrot.slane %v2392, 2
    %v2394 = vadd.f32 %v2392, %v2393
    %v2395 = vrot.slane %v2394, 1
    %v2396 = vadd.f32 %v2394, %v2395
    %v2397 = vadd.f32 %v1855, %v1856
    %v2398 = vadd.f32 %v2397, %v1857
    %v2399 = vadd.f32 %v2398, %v1858
    %v2400 = vadd.f32 %v2399, %v1859
    %v2401 = vadd.f32 %v2400, %v1860
    %v2402 = vadd.f32 %v2401, %v1861
    %v2403 = vadd.f32 %v2402, %v1862
    %v2404 = vadd.f32 %v2403, %v1863
    %v2405 = vadd.f32 %v2404, %v1864
    %v2406 = vadd.f32 %v2405, %v1865
    %v2407 = vadd.f32 %v2406, %v1866
    %v2408 = vadd.f32 %v2407, %v1867
    %v2409 = vadd.f32 %v2408, %v1868
    %v2410 = vadd.f32 %v2409, %v1869
    %v2411 = vadd.f32 %v2410, %v1870
    %v2412 = vrot.slane %v2411, 4
    %v2413 = vadd.f32 %v2411, %v2412
    %v2414 = vrot.slane %v2413, 2
    %v2415 = vadd.f32 %v2413, %v2414
    %v2416 = vrot.slane %v2415, 1
    %v2417 = vadd.f32 %v2415, %v2416
    %v2418 = vadd.f32 %v1871, %v1872
    %v2419 = vadd.f32 %v2418, %v1873
    %v2420 = vadd.f32 %v2419, %v1874
    %v2421 = vadd.f32 %v2420, %v1875
    %v2422 = vadd.f32 %v2421, %v1876
    %v2423 = vadd.f32 %v2422, %v1877
    %v2424 = vadd.f32 %v2423, %v1878
    %v2425 = vadd.f32 %v2424, %v1879
    %v2426 = vadd.f32 %v2425, %v1880
    %v2427 = vadd.f32 %v2426, %v1881
    %v2428 = vadd.f32 %v2427, %v1882
    %v2429 = vadd.f32 %v2428, %v1883
    %v2430 = vadd.f32 %v2429, %v1884
    %v2431 = vadd.f32 %v2430, %v1885
    %v2432 = vadd.f32 %v2431, %v1886
    %v2433 = vrot.slane %v2432, 4
    %v2434 = vadd.f32 %v2432, %v2433
    %v2435 = vrot.slane %v2434, 2
    %v2436 = vadd.f32 %v2434, %v2435
    %v2437 = vrot.slane %v2436, 1
    %v2438 = vadd.f32 %v2436, %v2437
    %2440 = vset.pattern.permute.xlu0 0
    %2441 = vperm.xlu0 %2440, %v2143
    %v2442 = vpop.permute.xlu0 %2441
    %2445 = vset.pattern.permute.xlu0 0
    %2446 = vperm.xlu0 %2445, %v2144
    %v2447 = vpop.permute.xlu0 %2446
    %2450 = vset.pattern.permute.xlu0 0
    %2451 = vperm.xlu0 %2450, %v2145
    %v2452 = vpop.permute.xlu0 %2451
    %2455 = vset.pattern.permute.xlu0 0
    %2456 = vperm.xlu0 %2455, %v2146
    %v2457 = vpop.permute.xlu0 %2456
    %2460 = vset.pattern.permute.xlu0 0
    %2461 = vperm.xlu0 %2460, %v2147
    %v2462 = vpop.permute.xlu0 %2461
    %2465 = vset.pattern.permute.xlu0 0
    %2466 = vperm.xlu0 %2465, %v2148
    %v2467 = vpop.permute.xlu0 %2466
    %2470 = vset.pattern.permute.xlu0 0
    %2471 = vperm.xlu0 %2470, %v2149
    %v2472 = vpop.permute.xlu0 %2471
    %2475 = vset.pattern.permute.xlu0 0
    %2476 = vperm.xlu0 %2475, %v2150
    %v2477 = vpop.permute.xlu0 %2476
    %2480 = vset.pattern.permute.xlu0 0
    %2481 = vperm.xlu0 %2480, %v2151
    %v2482 = vpop.permute.xlu0 %2481
    %2485 = vset.pattern.permute.xlu0 0
    %2486 = vperm.xlu0 %2485, %v2152
    %v2487 = vpop.permute.xlu0 %2486
    %2490 = vset.pattern.permute.xlu0 0
    %2491 = vperm.xlu0 %2490, %v2153
    %v2492 = vpop.permute.xlu0 %2491
    %2495 = vset.pattern.permute.xlu0 0
    %2496 = vperm.xlu0 %2495, %v2154
    %v2497 = vpop.permute.xlu0 %2496
    %2500 = vset.pattern.permute.xlu0 0
    %2501 = vperm.xlu0 %2500, %v2155
    %v2502 = vpop.permute.xlu0 %2501
    %2505 = vset.pattern.permute.xlu0 0
    %2506 = vperm.xlu0 %2505, %v2156
    %v2507 = vpop.permute.xlu0 %2506
    %2510 = vset.pattern.permute.xlu0 0
    %2511 = vperm.xlu0 %2510, %v2157
    %v2512 = vpop.permute.xlu0 %2511
    %2515 = vset.pattern.permute.xlu0 0
    %2516 = vperm.xlu0 %2515, %v2158
    %v2517 = vpop.permute.xlu0 %2516
    %2520 = vset.pattern.permute.xlu0 0
    %2521 = vperm.xlu0 %2520, %v2159
    %v2522 = vpop.permute.xlu0 %2521
    %2525 = vset.pattern.permute.xlu0 0
    %2526 = vperm.xlu0 %2525, %v2160
    %v2527 = vpop.permute.xlu0 %2526
    %2530 = vset.pattern.permute.xlu0 0
    %2531 = vperm.xlu0 %2530, %v2161
    %v2532 = vpop.permute.xlu0 %2531
    %2535 = vset.pattern.permute.xlu0 0
    %2536 = vperm.xlu0 %2535, %v2162
    %v2537 = vpop.permute.xlu0 %2536
    %2540 = vset.pattern.permute.xlu0 0
    %2541 = vperm.xlu0 %2540, %v2163
    %v2542 = vpop.permute.xlu0 %2541
    %2545 = vset.pattern.permute.xlu0 0
    %2546 = vperm.xlu0 %2545, %v2164
    %v2547 = vpop.permute.xlu0 %2546
    %2550 = vset.pattern.permute.xlu0 0
    %2551 = vperm.xlu0 %2550, %v2165
    %v2552 = vpop.permute.xlu0 %2551
    %2555 = vset.pattern.permute.xlu0 0
    %2556 = vperm.xlu0 %2555, %v2166
    %v2557 = vpop.permute.xlu0 %2556
    %2560 = vset.pattern.permute.xlu0 0
    %2561 = vperm.xlu0 %2560, %v2167
    %v2562 = vpop.permute.xlu0 %2561
    %2565 = vset.pattern.permute.xlu0 0
    %2566 = vperm.xlu0 %2565, %v2168
    %v2567 = vpop.permute.xlu0 %2566
    %2570 = vset.pattern.permute.xlu0 0
    %2571 = vperm.xlu0 %2570, %v2169
    %v2572 = vpop.permute.xlu0 %2571
    %2575 = vset.pattern.permute.xlu0 0
    %2576 = vperm.xlu0 %2575, %v2170
    %v2577 = vpop.permute.xlu0 %2576
    %2580 = vset.pattern.permute.xlu0 0
    %2581 = vperm.xlu0 %2580, %v2171
    %v2582 = vpop.permute.xlu0 %2581
    %2585 = vset.pattern.permute.xlu0 0
    %2586 = vperm.xlu0 %2585, %v2172
    %v2587 = vpop.permute.xlu0 %2586
    %2590 = vset.pattern.permute.xlu0 0
    %2591 = vperm.xlu0 %2590, %v2173
    %v2592 = vpop.permute.xlu0 %2591
    %2595 = vset.pattern.permute.xlu0 0
    %2596 = vperm.xlu0 %2595, %v2174
    %v2597 = vpop.permute.xlu0 %2596
    %2600 = vset.pattern.permute.xlu0 0
    %2601 = vperm.xlu0 %2600, %v2175
    %v2602 = vpop.permute.xlu0 %2601
    %2605 = vset.pattern.permute.xlu0 0
    %2606 = vperm.xlu0 %2605, %v2176
    %v2607 = vpop.permute.xlu0 %2606
    %2610 = vset.pattern.permute.xlu0 0
    %2611 = vperm.xlu0 %2610, %v2177
    %v2612 = vpop.permute.xlu0 %2611
    %2615 = vset.pattern.permute.xlu0 0
    %2616 = vperm.xlu0 %2615, %v2178
    %v2617 = vpop.permute.xlu0 %2616
    %2620 = vset.pattern.permute.xlu0 0
    %2621 = vperm.xlu0 %2620, %v2179
    %v2622 = vpop.permute.xlu0 %2621
    %2625 = vset.pattern.permute.xlu0 0
    %2626 = vperm.xlu0 %2625, %v2180
    %v2627 = vpop.permute.xlu0 %2626
    %2630 = vset.pattern.permute.xlu0 0
    %2631 = vperm.xlu0 %2630, %v2181
    %v2632 = vpop.permute.xlu0 %2631
    %2635 = vset.pattern.permute.xlu0 0
    %2636 = vperm.xlu0 %2635, %v2182
    %v2637 = vpop.permute.xlu0 %2636
    %2640 = vset.pattern.permute.xlu0 0
    %2641 = vperm.xlu0 %2640, %v2183
    %v2642 = vpop.permute.xlu0 %2641
    %2645 = vset.pattern.permute.xlu0 0
    %2646 = vperm.xlu0 %2645, %v2184
    %v2647 = vpop.permute.xlu0 %2646
    %2650 = vset.pattern.permute.xlu0 0
    %2651 = vperm.xlu0 %2650, %v2185
    %v2652 = vpop.permute.xlu0 %2651
    %2655 = vset.pattern.permute.xlu0 0
    %2656 = vperm.xlu0 %2655, %v2186
    %v2657 = vpop.permute.xlu0 %2656
    %2660 = vset.pattern.permute.xlu0 0
    %2661 = vperm.xlu0 %2660, %v2187
    %v2662 = vpop.permute.xlu0 %2661
    %2665 = vset.pattern.permute.xlu0 0
    %2666 = vperm.xlu0 %2665, %v2188
    %v2667 = vpop.permute.xlu0 %2666
    %2670 = vset.pattern.permute.xlu0 0
    %2671 = vperm.xlu0 %2670, %v2189
    %v2672 = vpop.permute.xlu0 %2671
    %2675 = vset.pattern.permute.xlu0 0
    %2676 = vperm.xlu0 %2675, %v2190
    %v2677 = vpop.permute.xlu0 %2676
    %2680 = vset.pattern.permute.xlu0 0
    %2681 = vperm.xlu0 %2680, %v2191
    %v2682 = vpop.permute.xlu0 %2681
    %2685 = vset.pattern.permute.xlu0 0
    %2686 = vperm.xlu0 %2685, %v2192
    %v2687 = vpop.permute.xlu0 %2686
    %2690 = vset.pattern.permute.xlu0 0
    %2691 = vperm.xlu0 %2690, %v2193
    %v2692 = vpop.permute.xlu0 %2691
    %2695 = vset.pattern.permute.xlu0 0
    %2696 = vperm.xlu0 %2695, %v2194
    %v2697 = vpop.permute.xlu0 %2696
    %2700 = vset.pattern.permute.xlu0 0
    %2701 = vperm.xlu0 %2700, %v2195
    %v2702 = vpop.permute.xlu0 %2701
    %2705 = vset.pattern.permute.xlu0 0
    %2706 = vperm.xlu0 %2705, %v2196
    %v2707 = vpop.permute.xlu0 %2706
    %2710 = vset.pattern.permute.xlu0 0
    %2711 = vperm.xlu0 %2710, %v2197
    %v2712 = vpop.permute.xlu0 %2711
    %2715 = vset.pattern.permute.xlu0 0
    %2716 = vperm.xlu0 %2715, %v2198
    %v2717 = vpop.permute.xlu0 %2716
    %2720 = vset.pattern.permute.xlu0 0
    %2721 = vperm.xlu0 %2720, %v2199
    %v2722 = vpop.permute.xlu0 %2721
    %2725 = vset.pattern.permute.xlu0 0
    %2726 = vperm.xlu0 %2725, %v2200
    %v2727 = vpop.permute.xlu0 %2726
    %2730 = vset.pattern.permute.xlu0 0
    %2731 = vperm.xlu0 %2730, %v2201
    %v2732 = vpop.permute.xlu0 %2731
    %2735 = vset.pattern.permute.xlu0 0
    %2736 = vperm.xlu0 %2735, %v2202
    %v2737 = vpop.permute.xlu0 %2736
    %2740 = vset.pattern.permute.xlu0 0
    %2741 = vperm.xlu0 %2740, %v2203
    %v2742 = vpop.permute.xlu0 %2741
    %2745 = vset.pattern.permute.xlu0 0
    %2746 = vperm.xlu0 %2745, %v2204
    %v2747 = vpop.permute.xlu0 %2746
    %2750 = vset.pattern.permute.xlu0 0
    %2751 = vperm.xlu0 %2750, %v2205
    %v2752 = vpop.permute.xlu0 %2751
    %2755 = vset.pattern.permute.xlu0 0
    %2756 = vperm.xlu0 %2755, %v2206
    %v2757 = vpop.permute.xlu0 %2756
    %2760 = vset.pattern.permute.xlu0 0
    %2761 = vperm.xlu0 %2760, %v2207
    %v2762 = vpop.permute.xlu0 %2761
    %2765 = vset.pattern.permute.xlu0 0
    %2766 = vperm.xlu0 %2765, %v2208
    %v2767 = vpop.permute.xlu0 %2766
    %2770 = vset.pattern.permute.xlu0 0
    %2771 = vperm.xlu0 %2770, %v2209
    %v2772 = vpop.permute.xlu0 %2771
    %2775 = vset.pattern.permute.xlu0 0
    %2776 = vperm.xlu0 %2775, %v2210
    %v2777 = vpop.permute.xlu0 %2776
    %2780 = vset.pattern.permute.xlu0 0
    %2781 = vperm.xlu0 %2780, %v2211
    %v2782 = vpop.permute.xlu0 %2781
    %2785 = vset.pattern.permute.xlu0 0
    %2786 = vperm.xlu0 %2785, %v2212
    %v2787 = vpop.permute.xlu0 %2786
    %2790 = vset.pattern.permute.xlu0 0
    %2791 = vperm.xlu0 %2790, %v2213
    %v2792 = vpop.permute.xlu0 %2791
    %2795 = vset.pattern.permute.xlu0 0
    %2796 = vperm.xlu0 %2795, %v2214
    %v2797 = vpop.permute.xlu0 %2796
    %2800 = vset.pattern.permute.xlu0 0
    %2801 = vperm.xlu0 %2800, %v2215
    %v2802 = vpop.permute.xlu0 %2801
    %2805 = vset.pattern.permute.xlu0 0
    %2806 = vperm.xlu0 %2805, %v2216
    %v2807 = vpop.permute.xlu0 %2806
    %2810 = vset.pattern.permute.xlu0 0
    %2811 = vperm.xlu0 %2810, %v2217
    %v2812 = vpop.permute.xlu0 %2811
    %2815 = vset.pattern.permute.xlu0 0
    %2816 = vperm.xlu0 %2815, %v2218
    %v2817 = vpop.permute.xlu0 %2816
    %2820 = vset.pattern.permute.xlu0 0
    %2821 = vperm.xlu0 %2820, %v2219
    %v2822 = vpop.permute.xlu0 %2821
    %2825 = vset.pattern.permute.xlu0 0
    %2826 = vperm.xlu0 %2825, %v2220
    %v2827 = vpop.permute.xlu0 %2826
    %2830 = vset.pattern.permute.xlu0 0
    %2831 = vperm.xlu0 %2830, %v2221
    %v2832 = vpop.permute.xlu0 %2831
    %2835 = vset.pattern.permute.xlu0 0
    %2836 = vperm.xlu0 %2835, %v2222
    %v2837 = vpop.permute.xlu0 %2836
    %2840 = vset.pattern.permute.xlu0 0
    %2841 = vperm.xlu0 %2840, %v2223
    %v2842 = vpop.permute.xlu0 %2841
    %2845 = vset.pattern.permute.xlu0 0
    %2846 = vperm.xlu0 %2845, %v2224
    %v2847 = vpop.permute.xlu0 %2846
    %2850 = vset.pattern.permute.xlu0 0
    %2851 = vperm.xlu0 %2850, %v2225
    %v2852 = vpop.permute.xlu0 %2851
    %2855 = vset.pattern.permute.xlu0 0
    %2856 = vperm.xlu0 %2855, %v2226
    %v2857 = vpop.permute.xlu0 %2856
    %2860 = vset.pattern.permute.xlu0 0
    %2861 = vperm.xlu0 %2860, %v2227
    %v2862 = vpop.permute.xlu0 %2861
    %2865 = vset.pattern.permute.xlu0 0
    %2866 = vperm.xlu0 %2865, %v2228
    %v2867 = vpop.permute.xlu0 %2866
    %2870 = vset.pattern.permute.xlu0 0
    %2871 = vperm.xlu0 %2870, %v2229
    %v2872 = vpop.permute.xlu0 %2871
    %2875 = vset.pattern.permute.xlu0 0
    %2876 = vperm.xlu0 %2875, %v2230
    %v2877 = vpop.permute.xlu0 %2876
    %2880 = vset.pattern.permute.xlu0 0
    %2881 = vperm.xlu0 %2880, %v2231
    %v2882 = vpop.permute.xlu0 %2881
    %2885 = vset.pattern.permute.xlu0 0
    %2886 = vperm.xlu0 %2885, %v2232
    %v2887 = vpop.permute.xlu0 %2886
    %2890 = vset.pattern.permute.xlu0 0
    %2891 = vperm.xlu0 %2890, %v2233
    %v2892 = vpop.permute.xlu0 %2891
    %2895 = vset.pattern.permute.xlu0 0
    %2896 = vperm.xlu0 %2895, %v2234
    %v2897 = vpop.permute.xlu0 %2896
    %2900 = vset.pattern.permute.xlu0 0
    %2901 = vperm.xlu0 %2900, %v2235
    %v2902 = vpop.permute.xlu0 %2901
    %2905 = vset.pattern.permute.xlu0 0
    %2906 = vperm.xlu0 %2905, %v2236
    %v2907 = vpop.permute.xlu0 %2906
    %2910 = vset.pattern.permute.xlu0 0
    %2911 = vperm.xlu0 %2910, %v2237
    %v2912 = vpop.permute.xlu0 %2911
    %2915 = vset.pattern.permute.xlu0 0
    %2916 = vperm.xlu0 %2915, %v2238
    %v2917 = vpop.permute.xlu0 %2916
    %2920 = vset.pattern.permute.xlu0 0
    %2921 = vperm.xlu0 %2920, %v2239
    %v2922 = vpop.permute.xlu0 %2921
    %2925 = vset.pattern.permute.xlu0 0
    %2926 = vperm.xlu0 %2925, %v2240
    %v2927 = vpop.permute.xlu0 %2926
    %2930 = vset.pattern.permute.xlu0 0
    %2931 = vperm.xlu0 %2930, %v2241
    %v2932 = vpop.permute.xlu0 %2931
    %2935 = vset.pattern.permute.xlu0 0
    %2936 = vperm.xlu0 %2935, %v2242
    %v2937 = vpop.permute.xlu0 %2936
    %2940 = vset.pattern.permute.xlu0 0
    %2941 = vperm.xlu0 %2940, %v2243
    %v2942 = vpop.permute.xlu0 %2941
    %2945 = vset.pattern.permute.xlu0 0
    %2946 = vperm.xlu0 %2945, %v2244
    %v2947 = vpop.permute.xlu0 %2946
    %2950 = vset.pattern.permute.xlu0 0
    %2951 = vperm.xlu0 %2950, %v2245
    %v2952 = vpop.permute.xlu0 %2951
    %2955 = vset.pattern.permute.xlu0 0
    %2956 = vperm.xlu0 %2955, %v2246
    %v2957 = vpop.permute.xlu0 %2956
    %2960 = vset.pattern.permute.xlu0 0
    %2961 = vperm.xlu0 %2960, %v2247
    %v2962 = vpop.permute.xlu0 %2961
    %2965 = vset.pattern.permute.xlu0 0
    %2966 = vperm.xlu0 %2965, %v2248
    %v2967 = vpop.permute.xlu0 %2966
    %2970 = vset.pattern.permute.xlu0 0
    %2971 = vperm.xlu0 %2970, %v2249
    %v2972 = vpop.permute.xlu0 %2971
    %2975 = vset.pattern.permute.xlu0 0
    %2976 = vperm.xlu0 %2975, %v2250
    %v2977 = vpop.permute.xlu0 %2976
    %2980 = vset.pattern.permute.xlu0 0
    %2981 = vperm.xlu0 %2980, %v2251
    %v2982 = vpop.permute.xlu0 %2981
    %2985 = vset.pattern.permute.xlu0 0
    %2986 = vperm.xlu0 %2985, %v2252
    %v2987 = vpop.permute.xlu0 %2986
    %2990 = vset.pattern.permute.xlu0 0
    %2991 = vperm.xlu0 %2990, %v2253
    %v2992 = vpop.permute.xlu0 %2991
    %2995 = vset.pattern.permute.xlu0 0
    %2996 = vperm.xlu0 %2995, %v2254
    %v2997 = vpop.permute.xlu0 %2996
    %3000 = vset.pattern.permute.xlu0 0
    %3001 = vperm.xlu0 %3000, %v2255
    %v3002 = vpop.permute.xlu0 %3001
    %3005 = vset.pattern.permute.xlu0 0
    %3006 = vperm.xlu0 %3005, %v2256
    %v3007 = vpop.permute.xlu0 %3006
    %3010 = vset.pattern.permute.xlu0 0
    %3011 = vperm.xlu0 %3010, %v2257
    %v3012 = vpop.permute.xlu0 %3011
    %3015 = vset.pattern.permute.xlu0 0
    %3016 = vperm.xlu0 %3015, %v2258
    %v3017 = vpop.permute.xlu0 %3016
    %3020 = vset.pattern.permute.xlu0 0
    %3021 = vperm.xlu0 %3020, %v2259
    %v3022 = vpop.permute.xlu0 %3021
    %3025 = vset.pattern.permute.xlu0 0
    %3026 = vperm.xlu0 %3025, %v2260
    %v3027 = vpop.permute.xlu0 %3026
    %3030 = vset.pattern.permute.xlu0 0
    %3031 = vperm.xlu0 %3030, %v2261
    %v3032 = vpop.permute.xlu0 %3031
    %3035 = vset.pattern.permute.xlu0 0
    %3036 = vperm.xlu0 %3035, %v2262
    %v3037 = vpop.permute.xlu0 %3036
    %3040 = vset.pattern.permute.xlu0 0
    %3041 = vperm.xlu0 %3040, %v2263
    %v3042 = vpop.permute.xlu0 %3041
    %3045 = vset.pattern.permute.xlu0 0
    %3046 = vperm.xlu0 %3045, %v2264
    %v3047 = vpop.permute.xlu0 %3046
    %3050 = vset.pattern.permute.xlu0 0
    %3051 = vperm.xlu0 %3050, %v2265
    %v3052 = vpop.permute.xlu0 %3051
    %3055 = vset.pattern.permute.xlu0 0
    %3056 = vperm.xlu0 %3055, %v2266
    %v3057 = vpop.permute.xlu0 %3056
    %3060 = vset.pattern.permute.xlu0 0
    %3061 = vperm.xlu0 %3060, %v2267
    %v3062 = vpop.permute.xlu0 %3061
    %3065 = vset.pattern.permute.xlu0 0
    %3066 = vperm.xlu0 %3065, %v2268
    %v3067 = vpop.permute.xlu0 %3066
    %3070 = vset.pattern.permute.xlu0 0
    %3071 = vperm.xlu0 %3070, %v2269
    %v3072 = vpop.permute.xlu0 %3071
    %3075 = vset.pattern.permute.xlu0 0
    %3076 = vperm.xlu0 %3075, %v2270
    %v3077 = vpop.permute.xlu0 %3076
    %v3079 = vmul.f32 %v1759, %v2442
    %v3080 = vmul.f32 %v1760, %v2447
    %v3081 = vmul.f32 %v1761, %v2452
    %v3082 = vmul.f32 %v1762, %v2457
    %v3083 = vmul.f32 %v1763, %v2462
    %v3084 = vmul.f32 %v1764, %v2467
    %v3085 = vmul.f32 %v1765, %v2472
    %v3086 = vmul.f32 %v1766, %v2477
    %v3087 = vmul.f32 %v1767, %v2482
    %v3088 = vmul.f32 %v1768, %v2487
    %v3089 = vmul.f32 %v1769, %v2492
    %v3090 = vmul.f32 %v1770, %v2497
    %v3091 = vmul.f32 %v1771, %v2502
    %v3092 = vmul.f32 %v1772, %v2507
    %v3093 = vmul.f32 %v1773, %v2512
    %v3094 = vmul.f32 %v1774, %v2517
    %v3095 = vmul.f32 %v1775, %v2522
    %v3096 = vmul.f32 %v1776, %v2527
    %v3097 = vmul.f32 %v1777, %v2532
    %v3098 = vmul.f32 %v1778, %v2537
    %v3099 = vmul.f32 %v1779, %v2542
    %v3100 = vmul.f32 %v1780, %v2547
    %v3101 = vmul.f32 %v1781, %v2552
    %v3102 = vmul.f32 %v1782, %v2557
    %v3103 = vmul.f32 %v1783, %v2562
    %v3104 = vmul.f32 %v1784, %v2567
    %v3105 = vmul.f32 %v1785, %v2572
    %v3106 = vmul.f32 %v1786, %v2577
    %v3107 = vmul.f32 %v1787, %v2582
    %v3108 = vmul.f32 %v1788, %v2587
    %v3109 = vmul.f32 %v1789, %v2592
    %v3110 = vmul.f32 %v1790, %v2597
    %v3111 = vmul.f32 %v1791, %v2602
    %v3112 = vmul.f32 %v1792, %v2607
    %v3113 = vmul.f32 %v1793, %v2612
    %v3114 = vmul.f32 %v1794, %v2617
    %v3115 = vmul.f32 %v1795, %v2622
    %v3116 = vmul.f32 %v1796, %v2627
    %v3117 = vmul.f32 %v1797, %v2632
    %v3118 = vmul.f32 %v1798, %v2637
    %v3119 = vmul.f32 %v1799, %v2642
    %v3120 = vmul.f32 %v1800, %v2647
    %v3121 = vmul.f32 %v1801, %v2652
    %v3122 = vmul.f32 %v1802, %v2657
    %v3123 = vmul.f32 %v1803, %v2662
    %v3124 = vmul.f32 %v1804, %v2667
    %v3125 = vmul.f32 %v1805, %v2672
    %v3126 = vmul.f32 %v1806, %v2677
    %v3127 = vmul.f32 %v1807, %v2682
    %v3128 = vmul.f32 %v1808, %v2687
    %v3129 = vmul.f32 %v1809, %v2692
    %v3130 = vmul.f32 %v1810, %v2697
    %v3131 = vmul.f32 %v1811, %v2702
    %v3132 = vmul.f32 %v1812, %v2707
    %v3133 = vmul.f32 %v1813, %v2712
    %v3134 = vmul.f32 %v1814, %v2717
    %v3135 = vmul.f32 %v1815, %v2722
    %v3136 = vmul.f32 %v1816, %v2727
    %v3137 = vmul.f32 %v1817, %v2732
    %v3138 = vmul.f32 %v1818, %v2737
    %v3139 = vmul.f32 %v1819, %v2742
    %v3140 = vmul.f32 %v1820, %v2747
    %v3141 = vmul.f32 %v1821, %v2752
    %v3142 = vmul.f32 %v1822, %v2757
    %v3143 = vmul.f32 %v1823, %v2762
    %v3144 = vmul.f32 %v1824, %v2767
    %v3145 = vmul.f32 %v1825, %v2772
    %v3146 = vmul.f32 %v1826, %v2777
    %v3147 = vmul.f32 %v1827, %v2782
    %v3148 = vmul.f32 %v1828, %v2787
    %v3149 = vmul.f32 %v1829, %v2792
    %v3150 = vmul.f32 %v1830, %v2797
    %v3151 = vmul.f32 %v1831, %v2802
    %v3152 = vmul.f32 %v1832, %v2807
    %v3153 = vmul.f32 %v1833, %v2812
    %v3154 = vmul.f32 %v1834, %v2817
    %v3155 = vmul.f32 %v1835, %v2822
    %v3156 = vmul.f32 %v1836, %v2827
    %v3157 = vmul.f32 %v1837, %v2832
    %v3158 = vmul.f32 %v1838, %v2837
    %v3159 = vmul.f32 %v1839, %v2842
    %v3160 = vmul.f32 %v1840, %v2847
    %v3161 = vmul.f32 %v1841, %v2852
    %v3162 = vmul.f32 %v1842, %v2857
    %v3163 = vmul.f32 %v1843, %v2862
    %v3164 = vmul.f32 %v1844, %v2867
    %v3165 = vmul.f32 %v1845, %v2872
    %v3166 = vmul.f32 %v1846, %v2877
    %v3167 = vmul.f32 %v1847, %v2882
    %v3168 = vmul.f32 %v1848, %v2887
    %v3169 = vmul.f32 %v1849, %v2892
    %v3170 = vmul.f32 %v1850, %v2897
    %v3171 = vmul.f32 %v1851, %v2902
    %v3172 = vmul.f32 %v1852, %v2907
    %v3173 = vmul.f32 %v1853, %v2912
    %v3174 = vmul.f32 %v1854, %v2917
    %v3175 = vmul.f32 %v1855, %v2922
    %v3176 = vmul.f32 %v1856, %v2927
    %v3177 = vmul.f32 %v1857, %v2932
    %v3178 = vmul.f32 %v1858, %v2937
    %v3179 = vmul.f32 %v1859, %v2942
    %v3180 = vmul.f32 %v1860, %v2947
    %v3181 = vmul.f32 %v1861, %v2952
    %v3182 = vmul.f32 %v1862, %v2957
    %v3183 = vmul.f32 %v1863, %v2962
    %v3184 = vmul.f32 %v1864, %v2967
    %v3185 = vmul.f32 %v1865, %v2972
    %v3186 = vmul.f32 %v1866, %v2977
    %v3187 = vmul.f32 %v1867, %v2982
    %v3188 = vmul.f32 %v1868, %v2987
    %v3189 = vmul.f32 %v1869, %v2992
    %v3190 = vmul.f32 %v1870, %v2997
    %v3191 = vmul.f32 %v1871, %v3002
    %v3192 = vmul.f32 %v1872, %v3007
    %v3193 = vmul.f32 %v1873, %v3012
    %v3194 = vmul.f32 %v1874, %v3017
    %v3195 = vmul.f32 %v1875, %v3022
    %v3196 = vmul.f32 %v1876, %v3027
    %v3197 = vmul.f32 %v1877, %v3032
    %v3198 = vmul.f32 %v1878, %v3037
    %v3199 = vmul.f32 %v1879, %v3042
    %v3200 = vmul.f32 %v1880, %v3047
    %v3201 = vmul.f32 %v1881, %v3052
    %v3202 = vmul.f32 %v1882, %v3057
    %v3203 = vmul.f32 %v1883, %v3062
    %v3204 = vmul.f32 %v1884, %v3067
    %v3205 = vmul.f32 %v1885, %v3072
    %v3206 = vmul.f32 %v1886, %v3077
    %v3207 = vadd.f32 %v3079, %v3080
    %v3208 = vadd.f32 %v3207, %v3081
    %v3209 = vadd.f32 %v3208, %v3082
    %v3210 = vadd.f32 %v3209, %v3083
    %v3211 = vadd.f32 %v3210, %v3084
    %v3212 = vadd.f32 %v3211, %v3085
    %v3213 = vadd.f32 %v3212, %v3086
    %v3214 = vadd.f32 %v3213, %v3087
    %v3215 = vadd.f32 %v3214, %v3088
    %v3216 = vadd.f32 %v3215, %v3089
    %v3217 = vadd.f32 %v3216, %v3090
    %v3218 = vadd.f32 %v3217, %v3091
    %v3219 = vadd.f32 %v3218, %v3092
    %v3220 = vadd.f32 %v3219, %v3093
    %v3221 = vadd.f32 %v3220, %v3094
    %v3222 = vrot.slane %v3221, 4
    %v3223 = vadd.f32 %v3221, %v3222
    %v3224 = vrot.slane %v3223, 2
    %v3225 = vadd.f32 %v3223, %v3224
    %v3226 = vrot.slane %v3225, 1
    %v3227 = vadd.f32 %v3225, %v3226
    %v3228 = vadd.f32 %v3095, %v3096
    %v3229 = vadd.f32 %v3228, %v3097
    %v3230 = vadd.f32 %v3229, %v3098
    %v3231 = vadd.f32 %v3230, %v3099
    %v3232 = vadd.f32 %v3231, %v3100
    %v3233 = vadd.f32 %v3232, %v3101
    %v3234 = vadd.f32 %v3233, %v3102
    %v3235 = vadd.f32 %v3234, %v3103
    %v3236 = vadd.f32 %v3235, %v3104
    %v3237 = vadd.f32 %v3236, %v3105
    %v3238 = vadd.f32 %v3237, %v3106
    %v3239 = vadd.f32 %v3238, %v3107
    %v3240 = vadd.f32 %v3239, %v3108
    %v3241 = vadd.f32 %v3240, %v3109
    %v3242 = vadd.f32 %v3241, %v3110
    %v3243 = vrot.slane %v3242, 4
    %v3244 = vadd.f32 %v3242, %v3243
    %v3245 = vrot.slane %v3244, 2
    %v3246 = vadd.f32 %v3244, %v3245
    %v3247 = vrot.slane %v3246, 1
    %v3248 = vadd.f32 %v3246, %v3247
    %v3249 = vadd.f32 %v3111, %v3112
    %v3250 = vadd.f32 %v3249, %v3113
    %v3251 = vadd.f32 %v3250, %v3114
    %v3252 = vadd.f32 %v3251, %v3115
    %v3253 = vadd.f32 %v3252, %v3116
    %v3254 = vadd.f32 %v3253, %v3117
    %v3255 = vadd.f32 %v3254, %v3118
    %v3256 = vadd.f32 %v3255, %v3119
    %v3257 = vadd.f32 %v3256, %v3120
    %v3258 = vadd.f32 %v3257, %v3121
    %v3259 = vadd.f32 %v3258, %v3122
    %v3260 = vadd.f32 %v3259, %v3123
    %v3261 = vadd.f32 %v3260, %v3124
    %v3262 = vadd.f32 %v3261, %v3125
    %v3263 = vadd.f32 %v3262, %v3126
    %v3264 = vrot.slane %v3263, 4
    %v3265 = vadd.f32 %v3263, %v3264
    %v3266 = vrot.slane %v3265, 2
    %v3267 = vadd.f32 %v3265, %v3266
    %v3268 = vrot.slane %v3267, 1
    %v3269 = vadd.f32 %v3267, %v3268
    %v3270 = vadd.f32 %v3127, %v3128
    %v3271 = vadd.f32 %v3270, %v3129
    %v3272 = vadd.f32 %v3271, %v3130
    %v3273 = vadd.f32 %v3272, %v3131
    %v3274 = vadd.f32 %v3273, %v3132
    %v3275 = vadd.f32 %v3274, %v3133
    %v3276 = vadd.f32 %v3275, %v3134
    %v3277 = vadd.f32 %v3276, %v3135
    %v3278 = vadd.f32 %v3277, %v3136
    %v3279 = vadd.f32 %v3278, %v3137
    %v3280 = vadd.f32 %v3279, %v3138
    %v3281 = vadd.f32 %v3280, %v3139
    %v3282 = vadd.f32 %v3281, %v3140
    %v3283 = vadd.f32 %v3282, %v3141
    %v3284 = vadd.f32 %v3283, %v3142
    %v3285 = vrot.slane %v3284, 4
    %v3286 = vadd.f32 %v3284, %v3285
    %v3287 = vrot.slane %v3286, 2
    %v3288 = vadd.f32 %v3286, %v3287
    %v3289 = vrot.slane %v3288, 1
    %v3290 = vadd.f32 %v3288, %v3289
    %v3291 = vadd.f32 %v3143, %v3144
    %v3292 = vadd.f32 %v3291, %v3145
    %v3293 = vadd.f32 %v3292, %v3146
    %v3294 = vadd.f32 %v3293, %v3147
    %v3295 = vadd.f32 %v3294, %v3148
    %v3296 = vadd.f32 %v3295, %v3149
    %v3297 = vadd.f32 %v3296, %v3150
    %v3298 = vadd.f32 %v3297, %v3151
    %v3299 = vadd.f32 %v3298, %v3152
    %v3300 = vadd.f32 %v3299, %v3153
    %v3301 = vadd.f32 %v3300, %v3154
    %v3302 = vadd.f32 %v3301, %v3155
    %v3303 = vadd.f32 %v3302, %v3156
    %v3304 = vadd.f32 %v3303, %v3157
    %v3305 = vadd.f32 %v3304, %v3158
    %v3306 = vrot.slane %v3305, 4
    %v3307 = vadd.f32 %v3305, %v3306
    %v3308 = vrot.slane %v3307, 2
    %v3309 = vadd.f32 %v3307, %v3308
    %v3310 = vrot.slane %v3309, 1
    %v3311 = vadd.f32 %v3309, %v3310
    %v3312 = vadd.f32 %v3159, %v3160
    %v3313 = vadd.f32 %v3312, %v3161
    %v3314 = vadd.f32 %v3313, %v3162
    %v3315 = vadd.f32 %v3314, %v3163
    %v3316 = vadd.f32 %v3315, %v3164
    %v3317 = vadd.f32 %v3316, %v3165
    %v3318 = vadd.f32 %v3317, %v3166
    %v3319 = vadd.f32 %v3318, %v3167
    %v3320 = vadd.f32 %v3319, %v3168
    %v3321 = vadd.f32 %v3320, %v3169
    %v3322 = vadd.f32 %v3321, %v3170
    %v3323 = vadd.f32 %v3322, %v3171
    %v3324 = vadd.f32 %v3323, %v3172
    %v3325 = vadd.f32 %v3324, %v3173
    %v3326 = vadd.f32 %v3325, %v3174
    %v3327 = vrot.slane %v3326, 4
    %v3328 = vadd.f32 %v3326, %v3327
    %v3329 = vrot.slane %v3328, 2
    %v3330 = vadd.f32 %v3328, %v3329
    %v3331 = vrot.slane %v3330, 1
    %v3332 = vadd.f32 %v3330, %v3331
    %v3333 = vadd.f32 %v3175, %v3176
    %v3334 = vadd.f32 %v3333, %v3177
    %v3335 = vadd.f32 %v3334, %v3178
    %v3336 = vadd.f32 %v3335, %v3179
    %v3337 = vadd.f32 %v3336, %v3180
    %v3338 = vadd.f32 %v3337, %v3181
    %v3339 = vadd.f32 %v3338, %v3182
    %v3340 = vadd.f32 %v3339, %v3183
    %v3341 = vadd.f32 %v3340, %v3184
    %v3342 = vadd.f32 %v3341, %v3185
    %v3343 = vadd.f32 %v3342, %v3186
    %v3344 = vadd.f32 %v3343, %v3187
    %v3345 = vadd.f32 %v3344, %v3188
    %v3346 = vadd.f32 %v3345, %v3189
    %v3347 = vadd.f32 %v3346, %v3190
    %v3348 = vrot.slane %v3347, 4
    %v3349 = vadd.f32 %v3347, %v3348
    %v3350 = vrot.slane %v3349, 2
    %v3351 = vadd.f32 %v3349, %v3350
    %v3352 = vrot.slane %v3351, 1
    %v3353 = vadd.f32 %v3351, %v3352
    %v3354 = vadd.f32 %v3191, %v3192
    %v3355 = vadd.f32 %v3354, %v3193
    %v3356 = vadd.f32 %v3355, %v3194
    %v3357 = vadd.f32 %v3356, %v3195
    %v3358 = vadd.f32 %v3357, %v3196
    %v3359 = vadd.f32 %v3358, %v3197
    %v3360 = vadd.f32 %v3359, %v3198
    %v3361 = vadd.f32 %v3360, %v3199
    %v3362 = vadd.f32 %v3361, %v3200
    %v3363 = vadd.f32 %v3362, %v3201
    %v3364 = vadd.f32 %v3363, %v3202
    %v3365 = vadd.f32 %v3364, %v3203
    %v3366 = vadd.f32 %v3365, %v3204
    %v3367 = vadd.f32 %v3366, %v3205
    %v3368 = vadd.f32 %v3367, %v3206
    %v3369 = vrot.slane %v3368, 4
    %v3370 = vadd.f32 %v3368, %v3369
    %v3371 = vrot.slane %v3370, 2
    %v3372 = vadd.f32 %v3370, %v3371
    %v3373 = vrot.slane %v3372, 1
    %v3374 = vadd.f32 %v3372, %v3373
    %v3375 = vadd.f32 %v3227, %v196
    %v3376 = vadd.f32 %v3248, %v210
    %v3377 = vadd.f32 %v3269, %v218
    %v3378 = vadd.f32 %v3290, %v220
    %v3379 = vadd.f32 %v3311, %v203
    %v3380 = vadd.f32 %v3332, %v217
    %v3381 = vadd.f32 %v3353, %v219
    %v3382 = vadd.f32 %v3374, %v221
    %v3383 = vsel %vm87, %v196, 0.0
    %3384 = vadd.xlane.f32.xlu0 %v3383
    %v3385 = vpop.xlane.xlu0 %3384
    %v3386 = vsel %vm87, %v210, 0.0
    %3387 = vadd.xlane.f32.xlu0 %v3386
    %v3388 = vpop.xlane.xlu0 %3387
    %v3389 = vsel %vm87, %v218, 0.0
    %3390 = vadd.xlane.f32.xlu0 %v3389
    %v3391 = vpop.xlane.xlu0 %3390
    %v3392 = vsel %vm87, %v220, 0.0
    %3393 = vadd.xlane.f32.xlu0 %v3392
    %v3394 = vpop.xlane.xlu0 %3393
    %v3395 = vsel %vm87, %v203, 0.0
    %3396 = vadd.xlane.f32.xlu0 %v3395
    %v3397 = vpop.xlane.xlu0 %3396
    %v3398 = vsel %vm87, %v217, 0.0
    %3399 = vadd.xlane.f32.xlu0 %v3398
    %v3400 = vpop.xlane.xlu0 %3399
    %v3401 = vsel %vm87, %v219, 0.0
    %3402 = vadd.xlane.f32.xlu0 %v3401
    %v3403 = vpop.xlane.xlu0 %3402
    %v3404 = vsel %vm87, %v221, 0.0
    %3405 = vadd.xlane.f32.xlu0 %v3404
    %v3406 = vpop.xlane.xlu0 %3405
    %v3407 = vadd.f32 %v3385, %v2291
    %v3408 = vadd.f32 %v3388, %v2312
    %v3409 = vadd.f32 %v3391, %v2333
    %v3410 = vadd.f32 %v3394, %v2354
    %v3411 = vadd.f32 %v3397, %v2375
    %v3412 = vadd.f32 %v3400, %v2396
    %v3413 = vadd.f32 %v3403, %v2417
    %v3414 = vadd.f32 %v3406, %v2438
    %v3415 = vadd.f32 %v3407, 1.0
    %v3416 = vadd.f32 %v3408, 1.0
    %v3417 = vadd.f32 %v3409, 1.0
    %v3418 = vadd.f32 %v3410, 1.0
    %v3419 = vadd.f32 %v3411, 1.0
    %v3420 = vadd.f32 %v3412, 1.0
    %v3421 = vadd.f32 %v3413, 1.0
    %v3422 = vadd.f32 %v3414, 1.0
    %v3423 = vsub.f32 %v3415, %v3375
    %v3424 = vsub.f32 %v3416, %v3376
    %v3425 = vsub.f32 %v3417, %v3377
    %v3426 = vsub.f32 %v3418, %v3378
    %v3427 = vsub.f32 %v3419, %v3379
    %v3428 = vsub.f32 %v3420, %v3380
    %v3429 = vsub.f32 %v3421, %v3381
    %v3430 = vsub.f32 %v3422, %v3382
    %v3431 = vsub.f32 %v3385, %v3375
    %v3432 = vsub.f32 %v3388, %v3376
    %v3433 = vsub.f32 %v3391, %v3377
    %v3434 = vsub.f32 %v3394, %v3378
    %v3435 = vsub.f32 %v3397, %v3379
    %v3436 = vsub.f32 %v3400, %v3380
    %v3437 = vsub.f32 %v3403, %v3381
    %v3438 = vsub.f32 %v3406, %v3382
    %v3439 = vrcp.pop %v3423
    %v3440 = vmul.f32 %v3431, %v3439
    %v3441 = vrcp.pop %v3424
    %v3442 = vmul.f32 %v3432, %v3441
    %v3443 = vrcp.pop %v3425
    %v3444 = vmul.f32 %v3433, %v3443
    %v3445 = vrcp.pop %v3426
    %v3446 = vmul.f32 %v3434, %v3445
    %v3447 = vrcp.pop %v3427
    %v3448 = vmul.f32 %v3435, %v3447
    %v3449 = vrcp.pop %v3428
    %v3450 = vmul.f32 %v3436, %v3449
    %v3451 = vrcp.pop %v3429
    %v3452 = vmul.f32 %v3437, %v3451
    %v3453 = vrcp.pop %v3430
    %v3454 = vmul.f32 %v3438, %v3453
    %v3455 = vsub.f32 1.0, %v3440
    %v3456 = vsub.f32 1.0, %v3442
    %v3457 = vsub.f32 1.0, %v3444
    %v3458 = vsub.f32 1.0, %v3446
    %v3459 = vsub.f32 1.0, %v3448
    %v3460 = vsub.f32 1.0, %v3450
    %v3461 = vsub.f32 1.0, %v3452
    %v3462 = vsub.f32 1.0, %v3454
    %v3463 = vsub.f32 %v3375, %v196
    %v3464 = vsub.f32 %v3376, %v210
    %v3465 = vsub.f32 %v3377, %v218
    %v3466 = vsub.f32 %v3378, %v220
    %v3467 = vsub.f32 %v3379, %v203
    %v3468 = vsub.f32 %v3380, %v217
    %v3469 = vsub.f32 %v3381, %v219
    %v3470 = vsub.f32 %v3382, %v221
    %v3471 = vsub.f32 %v3407, %v3463
    %v3472 = vsub.f32 %v3408, %v3464
    %v3473 = vsub.f32 %v3409, %v3465
    %v3474 = vsub.f32 %v3410, %v3466
    %v3475 = vsub.f32 %v3411, %v3467
    %v3476 = vsub.f32 %v3412, %v3468
    %v3477 = vsub.f32 %v3413, %v3469
    %v3478 = vsub.f32 %v3414, %v3470
    %v3479 = vmax.f32 %v3471, 1.0
    %v3480 = vmax.f32 %v3472, 1.0
    %v3481 = vmax.f32 %v3473, 1.0
    %v3482 = vmax.f32 %v3474, 1.0
    %v3483 = vmax.f32 %v3475, 1.0
    %v3484 = vmax.f32 %v3476, 1.0
    %v3485 = vmax.f32 %v3477, 1.0
    %v3486 = vmax.f32 %v3478, 1.0
    %vm3487 = vcmp.gt.f32.partialorder %v2291, 0.5
    %vm3488 = vcmp.gt.f32.partialorder %v2312, 0.5
    %vm3489 = vcmp.gt.f32.partialorder %v2333, 0.5
    %vm3490 = vcmp.gt.f32.partialorder %v2354, 0.5
    %vm3491 = vcmp.gt.f32.partialorder %v2375, 0.5
    %vm3492 = vcmp.gt.f32.partialorder %v2396, 0.5
    %vm3493 = vcmp.gt.f32.partialorder %v2417, 0.5
    %vm3494 = vcmp.gt.f32.partialorder %v2438, 0.5
    %v3495 = vsub.f32 %v3385, %v3463
    %v3496 = vsub.f32 %v3388, %v3464
    %v3497 = vsub.f32 %v3391, %v3465
    %v3498 = vsub.f32 %v3394, %v3466
    %v3499 = vsub.f32 %v3397, %v3467
    %v3500 = vsub.f32 %v3400, %v3468
    %v3501 = vsub.f32 %v3403, %v3469
    %v3502 = vsub.f32 %v3406, %v3470
    %v3503 = vrcp.pop %v3479
    %v3504 = vmul.f32 %v3495, %v3503
    %v3505 = vrcp.pop %v3480
    %v3506 = vmul.f32 %v3496, %v3505
    %v3507 = vrcp.pop %v3481
    %v3508 = vmul.f32 %v3497, %v3507
    %v3509 = vrcp.pop %v3482
    %v3510 = vmul.f32 %v3498, %v3509
    %v3511 = vrcp.pop %v3483
    %v3512 = vmul.f32 %v3499, %v3511
    %v3513 = vrcp.pop %v3484
    %v3514 = vmul.f32 %v3500, %v3513
    %v3515 = vrcp.pop %v3485
    %v3516 = vmul.f32 %v3501, %v3515
    %v3517 = vrcp.pop %v3486
    %v3518 = vmul.f32 %v3502, %v3517
    %v3519 = vsub.f32 1.0, %v3504
    %v3520 = vsub.f32 1.0, %v3506
    %v3521 = vsub.f32 1.0, %v3508
    %v3522 = vsub.f32 1.0, %v3510
    %v3523 = vsub.f32 1.0, %v3512
    %v3524 = vsub.f32 1.0, %v3514
    %v3525 = vsub.f32 1.0, %v3516
    %v3526 = vsub.f32 1.0, %v3518
    %v3527 = vsel %vm3487, %v3519, 0.0
    %v3528 = vsel %vm3488, %v3520, 0.0
    %v3529 = vsel %vm3489, %v3521, 0.0
    %v3530 = vsel %vm3490, %v3522, 0.0
    %v3531 = vsel %vm3491, %v3523, 0.0
    %v3532 = vsel %vm3492, %v3524, 0.0
    %v3533 = vsel %vm3493, %v3525, 0.0
    %v3534 = vsel %vm3494, %v3526, 0.0
    %v3535 = vsub.f32 %v3455, %v3527
    %v3536 = vsub.f32 %v3456, %v3528
    %v3537 = vsub.f32 %v3457, %v3529
    %v3538 = vsub.f32 %v3458, %v3530
    %v3539 = vsub.f32 %v3459, %v3531
    %v3540 = vsub.f32 %v3460, %v3532
    %v3541 = vsub.f32 %v3461, %v3533
    %v3542 = vsub.f32 %v3462, %v3534
    %v3543 = vmul.f32 %v138, %v3535
    %v3544 = vmul.f32 %v152, %v3536
    %v3545 = vmul.f32 %v160, %v3537
    %v3546 = vmul.f32 %v162, %v3538
    %v3547 = vmul.f32 %v145, %v3539
    %v3548 = vmul.f32 %v159, %v3540
    %v3549 = vmul.f32 %v161, %v3541
    %v3550 = vmul.f32 %v163, %v3542
    %v3551 = vsel %vm87, %v3543, 0.0
    %3552 = vadd.xlane.f32.xlu0 %v3551
    %v3553 = vpop.xlane.xlu0 %3552
    %v3554 = vsel %vm87, %v3544, 0.0
    %3555 = vadd.xlane.f32.xlu0 %v3554
    %v3556 = vpop.xlane.xlu0 %3555
    %v3557 = vsel %vm87, %v3545, 0.0
    %3558 = vadd.xlane.f32.xlu0 %v3557
    %v3559 = vpop.xlane.xlu0 %3558
    %v3560 = vsel %vm87, %v3546, 0.0
    %3561 = vadd.xlane.f32.xlu0 %v3560
    %v3562 = vpop.xlane.xlu0 %3561
    %v3563 = vsel %vm87, %v3547, 0.0
    %3564 = vadd.xlane.f32.xlu0 %v3563
    %v3565 = vpop.xlane.xlu0 %3564
    %v3566 = vsel %vm87, %v3548, 0.0
    %3567 = vadd.xlane.f32.xlu0 %v3566
    %v3568 = vpop.xlane.xlu0 %3567
    %v3569 = vsel %vm87, %v3549, 0.0
    %3570 = vadd.xlane.f32.xlu0 %v3569
    %v3571 = vpop.xlane.xlu0 %3570
    %v3572 = vsel %vm87, %v3550, 0.0
    %3573 = vadd.xlane.f32.xlu0 %v3572
    %v3574 = vpop.xlane.xlu0 %3573
    %vm3575 = vcmp.gt.f32.partialorder %v3385, 0.0
    %vm3576 = vcmp.gt.f32.partialorder %v3388, 0.0
    %vm3577 = vcmp.gt.f32.partialorder %v3391, 0.0
    %vm3578 = vcmp.gt.f32.partialorder %v3394, 0.0
    %vm3579 = vcmp.gt.f32.partialorder %v3397, 0.0
    %vm3580 = vcmp.gt.f32.partialorder %v3400, 0.0
    %vm3581 = vcmp.gt.f32.partialorder %v3403, 0.0
    %vm3582 = vcmp.gt.f32.partialorder %v3406, 0.0
    %v3583 = vsel %vm3575, 1, 0
    %v3584 = vsel %vm3576, 1, 0
    %v3585 = vsel %vm3577, 1, 0
    %v3586 = vsel %vm3578, 1, 0
    %v3587 = vsel %vm3579, 1, 0
    %v3588 = vsel %vm3580, 1, 0
    %v3589 = vsel %vm3581, 1, 0
    %v3590 = vsel %vm3582, 1, 0
    %v3591 = vcvt.s32.f32 %v3583
    %v3592 = vcvt.s32.f32 %v3584
    %v3593 = vcvt.s32.f32 %v3585
    %v3594 = vcvt.s32.f32 %v3586
    %v3595 = vcvt.s32.f32 %v3587
    %v3596 = vcvt.s32.f32 %v3588
    %v3597 = vcvt.s32.f32 %v3589
    %v3598 = vcvt.s32.f32 %v3590
    %v3599 = vmul.f32 %v3591, %v3553
    %v3600 = vmul.f32 %v3592, %v3556
    %v3601 = vmul.f32 %v3593, %v3559
    %v3602 = vmul.f32 %v3594, %v3562
    %v3603 = vmul.f32 %v3595, %v3565
    %v3604 = vmul.f32 %v3596, %v3568
    %v3605 = vmul.f32 %v3597, %v3571
    %v3606 = vmul.f32 %v3598, %v3574
    %vm3607 = vcmask 0
    %v3608 = vsel %vm3607, %v3599, 0.0
    %v3609 = vsel %vm3607, %v3600, 0.0
    %v3610 = vadd.f32 %v3608, %v3609
    %v3611 = vsel %vm3607, %v3601, 0.0
    %v3612 = vadd.f32 %v3610, %v3611
    %v3613 = vsel %vm3607, %v3602, 0.0
    %v3614 = vadd.f32 %v3612, %v3613
    %v3615 = vsel %vm3607, %v3603, 0.0
    %v3616 = vadd.f32 %v3614, %v3615
    %v3617 = vsel %vm3607, %v3604, 0.0
    %v3618 = vadd.f32 %v3616, %v3617
    %v3619 = vsel %vm3607, %v3605, 0.0
    %v3620 = vadd.f32 %v3618, %v3619
    %v3621 = vsel %vm3607, %v3606, 0.0
    %v3622 = vadd.f32 %v3620, %v3621
    %3623 = vadd.xlane.f32.xlu0 %v3622
    %v3624 = vpop.xlane.xlu0 %3623
    %v3625 = vrot.slane %v3624, 4
    %v3626 = vadd.f32 %v3624, %v3625
    %v3627 = vrot.slane %v3626, 2
    %v3628 = vadd.f32 %v3626, %v3627
    %v3629 = vrot.slane %v3628, 1
    %v3630 = vadd.f32 %v3628, %v3629
    %s3631 = vtos %v3630
    %v3632 = vsel %vm3607, %v3591, 0.0
    %v3633 = vsel %vm3607, %v3592, 0.0
    %v3634 = vadd.f32 %v3632, %v3633
    %v3635 = vsel %vm3607, %v3593, 0.0
    %v3636 = vadd.f32 %v3634, %v3635
    %v3637 = vsel %vm3607, %v3594, 0.0
    %v3638 = vadd.f32 %v3636, %v3637
    %v3639 = vsel %vm3607, %v3595, 0.0
    %v3640 = vadd.f32 %v3638, %v3639
    %v3641 = vsel %vm3607, %v3596, 0.0
    %v3642 = vadd.f32 %v3640, %v3641
    %v3643 = vsel %vm3607, %v3597, 0.0
    %v3644 = vadd.f32 %v3642, %v3643
    %v3645 = vsel %vm3607, %v3598, 0.0
    %v3646 = vadd.f32 %v3644, %v3645
    %3647 = vadd.xlane.f32.xlu0 %v3646
    %v3648 = vpop.xlane.xlu0 %3647
    %v3649 = vrot.slane %v3648, 4
    %v3650 = vadd.f32 %v3648, %v3649
    %v3651 = vrot.slane %v3650, 2
    %v3652 = vadd.f32 %v3650, %v3651
    %v3653 = vrot.slane %v3652, 1
    %v3654 = vadd.f32 %v3652, %v3653
    %s3655 = vtos %v3654
    %p3656 = scmp.gt.f32.partialorder %s3655, 0.0
    %s3657 = smax.f32 %s3655, 1.0
    %v3658 = vstv %s3657
    %v3659 = vrcp.pop %v3658
    %s3660 = vtos %v3659
    %s3661 = smul.f32 %s3631, %s3660
    %s3662 = scalar_select %p3656, %s3661, 0.0
    %s3663 = sadd.f32 %s111, %s3662
    %v3664 = vstv %s3663
    %3665 = vst.msk [vmem:[#allocation2] sm:$0x1] %vm3607, %v3664
    // Predicated region
    $region18: #{tpu_custom_call.1} parent=1 // pred_check
      _
    $region19: #{tpu_custom_call.1} parent=1 // pred_check_branch
      %3667 = sbr.rel (0) target = $region21
    $region20: #{tpu_custom_call.1} parent=1 // pred_region
      %s3669 = ssub.s32 16, 16
      %3670 = vsyncadd [#allocation3], %s3669
      %s3672 = sshll.u32 [#allocation2], 4
      %s3673 = int_to_ptr.vmem [resolvable:$true] %s3672
      %3675 = dma.vmem_to_hbm [thread:$0]  %s3673, 16, %s4, [#allocation3]
    $region21: #{tpu_custom_call.1} parent=1 // pred_fallthru
      _
    // Predicated region
    $region22: #{tpu_custom_call.1} parent=1 // pred_check
      _
    $region23: #{tpu_custom_call.1} parent=1 // pred_check_branch
      %3677 = sbr.rel (0) target = $region25
    $region24: #{tpu_custom_call.1} parent=1 // pred_region
      %3678 = dma.done [#allocation3], 16
    $region25: #{tpu_custom_call.1} parent=1 // pred_fallthru
      _
    %3679 = vsyncpa [#allocation3], 1

</llo_original>
